<compile_context>
chip_gen: v5e
topology: v5e:2x2
jax: 0.10.0
libtpu: 0.0.40
codegen_flags: <defaults>
</compile_context>

<pallas_src>
import jax
import jax.numpy as jnp
import numpy as np
from jax.experimental import pallas as pl
from jax.experimental.pallas import tpu as pltpu

NEG_SLOPE = 0.1     # nn.LeakyReLU(negative_slope=0.1)
BN_EPS = 1e-5       # nn.BatchNorm2d default eps
LANE = 128          # conv output channels padded to the TPU lane width


def _round_up(v, m):
    return ((v + m - 1) // m) * m


# ---------------------------------------------------------------------------
# One-time parameter packing (hoisted off the per-call path)
# ---------------------------------------------------------------------------
def _pack_conv3x3(w_oihw, stride, kin8, cout_p):
    """3x3 stride-s conv as shifted-window matmuls on a space-to-depth input
    (s2d channel index = (py*s+px)*cin + c).  Returns (n_taps, kin8, cout_p)."""
    s = stride
    cout, cin, kh, kw = w_oihw.shape
    assert kh == 3 and kw == 3
    dvals = sorted({(k - 1) // s for k in range(3)})
    nd = len(dvals)
    deltas = tuple((dy, dx) for dy in dvals for dx in dvals)
    w = np.asarray(w_oihw, np.float32)
    wp = np.zeros((nd * nd, kin8, cout_p), np.float32)
    for ky in range(3):
        dy, py = (ky - 1) // s, (ky - 1) % s
        for kx in range(3):
            dx, px = (kx - 1) // s, (kx - 1) % s
            t = dvals.index(dy) * nd + dvals.index(dx)
            r0 = (py * s + px) * cin
            wp[t, r0:r0 + cin, :cout] += w[:, :, ky, kx].T
    return jnp.asarray(wp, jnp.bfloat16), deltas


def _pack_conv3x3_kxfold(w_oihw, cin_p, cout_p):
    """3x3 stride-1 conv with kx folded into K.  Staging lane layout per
    output column x is [col x-1 | col x | col x+1], each block cin_p wide."""
    cout, cin, kh, kw = w_oihw.shape
    assert kh == 3 and kw == 3
    w = np.asarray(w_oihw, np.float32)
    wp = np.zeros((3, 3 * cin_p, cout_p), np.float32)
    for ky in range(3):
        for kx in range(3):
            wp[ky, kx * cin_p:kx * cin_p + cin, :cout] = w[:, :, ky, kx].T
    return jnp.asarray(wp, jnp.bfloat16)


def _pack_shortcut(w_oihw, cin, kin8, cout_p):
    cout = w_oihw.shape[0]
    w = np.asarray(w_oihw, np.float32)[:, :, 0, 0]          # (cout, cin)
    wp = np.zeros((kin8, cout_p), np.float32)
    wp[:cin, :cout] = w.T                                    # s2d sub-pos (0,0)
    return jnp.asarray(wp, jnp.bfloat16)


def pack_block_params(params, *, in_planes, out_planes, stride, equal_in_out):
    s = stride
    cin, cout = in_planes, out_planes
    kin = s * s * cin                       # channels after space-to-depth
    kin8 = _round_up(kin, 8)                # sublane multiple only -> dense DMA
    cout_p = _round_up(cout, LANE)          # lane-dense conv outputs

    g1, v1 = np.asarray(params["bn1_gamma"]), np.asarray(params["bn1_var"])
    s1 = g1 / np.sqrt(v1 + BN_EPS)
    b1 = np.asarray(params["bn1_beta"]) - np.asarray(params["bn1_mean"]) * s1
    g2, v2 = np.asarray(params["bn2_gamma"]), np.asarray(params["bn2_var"])
    s2 = g2 / np.sqrt(v2 + BN_EPS)
    b2 = np.asarray(params["bn2_beta"]) - np.asarray(params["bn2_mean"]) * s2

    s1p = np.zeros((1, kin8), np.float32); s1p[0, :kin] = np.tile(s1, s * s)
    b1p = np.zeros((1, kin8), np.float32); b1p[0, :kin] = np.tile(b1, s * s)
    s2p = np.zeros((1, cout_p), np.float32); s2p[0, :cout] = s2
    b2p = np.zeros((1, cout_p), np.float32); b2p[0, :cout] = b2

    w1, deltas1 = _pack_conv3x3(params["conv1_w"], s, kin8, cout_p)
    w2 = _pack_conv3x3_kxfold(params["conv2_w"], cout_p, cout_p)

    packed = dict(
        s1=jnp.asarray(s1p), b1=jnp.asarray(b1p),
        s2=jnp.asarray(s2p), b2=jnp.asarray(b2p),
        w1=w1, w2=w2, deltas1=deltas1,
        kin8=kin8, cout_p=cout_p, cout=cout)
    if not equal_in_out:
        packed["wsc"] = _pack_shortcut(params["shortcut_w"], cin, kin8, cout_p)
    return packed


# ---------------------------------------------------------------------------
# The fused BasicBlock kernel (B_TILE images per grid step, batch folded in M)
# ---------------------------------------------------------------------------
def _make_block_kernel(*, B, hb, wb, kin8, cout_p, deltas1,
                       equal_in_out, apply_bn1):
    R = hb + 2                    # staging rows per image (top/bottom halo)
    M_rows = B * R - 2            # rows per stacked dy-shifted slice
    M = M_rows * wb               # matmul M (batch folded, halo rows discarded)
    K2 = 3 * cout_p               # conv2 K with kx folded in

    def kernel(*refs):
        if equal_in_out:
            (x_ref, s1_ref, b1_ref, s2_ref, b2_ref,
             w1_ref, w2_ref, o_ref, a1_ref, a2_ref, acc_ref) = refs
            wsc_ref = None
        else:
            (x_ref, s1_ref, b1_ref, s2_ref, b2_ref,
             w1_ref, w2_ref, wsc_ref, o_ref, a1_ref, a2_ref, acc_ref) = refs

        bf16, f32 = jnp.bfloat16, jnp.float32

        # ---- bn1 + LeakyReLU on the dense (unpadded-to-128) channels --------
        if apply_bn1:
            xf = x_ref[...].astype(f32)                     # (B, hb, wb, kin8)
            t = xf * s1_ref[0] + b1_ref[0]
            xa_bf = jnp.where(t > 0, t, NEG_SLOPE * t).astype(bf16)
        else:
            xa_bf = x_ref[...]                              # conv1/shortcut see raw x

        # ---- zero ONLY the halo (rows / boundary columns); every step so the
        #      kernel is correct when the parallel grid splits across cores ---
        a1_ref[:, 0:1, :] = jnp.zeros((B * R, 1, kin8), bf16)
        a1_ref[:, wb + 1:wb + 2, :] = jnp.zeros((B * R, 1, kin8), bf16)
        a2_ref[:, 0:1, 0:cout_p] = jnp.zeros((B * R, 1, cout_p), bf16)
        a2_ref[:, wb - 1:wb, 2 * cout_p:K2] = jnp.zeros((B * R, 1, cout_p), bf16)
        for b in range(B):
            a1_ref[b * R] = jnp.zeros((wb + 2, kin8), bf16)
            a1_ref[b * R + R - 1] = jnp.zeros((wb + 2, kin8), bf16)
            a2_ref[b * R] = jnp.zeros((wb, K2), bf16)
            a2_ref[b * R + R - 1] = jnp.zeros((wb, K2), bf16)

        # ---- stage conv1 input (bf16, one cast, per-image private halos) ----
        for b in range(B):
            a1_ref[b * R + 1:b * R + 1 + hb, 1:wb + 1, :] = xa_bf[b]

        # ---- conv1: one stacked (batch-in-M) matmul per kernel tap ----------
        for t, (dy, dx) in enumerate(deltas1):
            lhs = a1_ref[1 + dy:1 + dy + M_rows, 1 + dx:1 + dx + wb, :]
            lhs = lhs.reshape(M, kin8)
            contrib = jnp.dot(lhs, w1_ref[t], preferred_element_type=f32)
            if t == 0:
                acc_ref[...] = contrib                       # no zeros+add init
            else:
                acc_ref[...] += contrib

        # ---- bn2 + LeakyReLU (f32), cast once, stage conv2 input (kx in K) --
        y = acc_ref[...] * s2_ref[0] + b2_ref[0]
        act2 = jnp.where(y > 0, y, NEG_SLOPE * y).astype(bf16)
        act3 = act2.reshape(M_rows, wb, cout_p)
        for b in range(B):
            src = act3[b * R:b * R + hb]                     # valid rows, image b
            r0 = b * R + 1
            a2_ref[r0:r0 + hb, 1:wb, 0:cout_p] = src[:, 0:wb - 1, :]       # kx=-1
            a2_ref[r0:r0 + hb, :, cout_p:2 * cout_p] = src                 # kx= 0
            a2_ref[r0:r0 + hb, 0:wb - 1, 2 * cout_p:K2] = src[:, 1:wb, :]  # kx=+1

        # ---- shortcut (1x1 conv) initialises the output accumulator ---------
        if not equal_in_out:
            lhs_sc = a1_ref[1:1 + M_rows, 1:1 + wb, :].reshape(M, kin8)
            acc_ref[...] = jnp.dot(lhs_sc, wsc_ref[...], preferred_element_type=f32)
            first = False
        else:
            first = True

        # ---- conv2: 3 stacked matmuls with K = 3*cout_p ----------------------
        for ty in range(3):
            dy = ty - 1
            lhs = a2_ref[1 + dy:1 + dy + M_rows].reshape(M, K2)
            contrib = jnp.dot(lhs, w2_ref[ty], preferred_element_type=f32)
            if first:
                acc_ref[...] = contrib
                first = False
            else:
                acc_ref[...] += contrib

        # ---- epilogue: valid rows per image (+ identity shortcut), bf16 store
        for b in range(B):
            res = acc_ref[b * R * wb:(b * R + hb) * wb, :]   # (hb*wb, cout_p)
            out3 = res.reshape(hb, wb, cout_p)
            o_ref[b] = out3.astype(bf16)
            if equal_in_out:
                x_b = x_ref[b].astype(f32)                   # raw input shortcut
                o_ref[b, :, :, 0:kin8] = (out3[:, :, 0:kin8] + x_b).astype(bf16)

    return kernel


# ---------------------------------------------------------------------------
# NHWC entry point: keep padded-NHWC bf16 activations between chained blocks
# ---------------------------------------------------------------------------
def basic_block_forward_nhwc(x_nhwc, packed, *, stride, equal_in_out,
                             activate_before_residual, b_tile=8):
    n, h, w, cin = x_nhwc.shape
    s = stride
    assert h % s == 0 and w % s == 0
    hb, wb = h // s, w // s
    assert wb % 8 == 0, "width (after stride) must be a multiple of 8"
    if equal_in_out:
        assert s == 1, "identity shortcut requires stride 1"
    kin = s * s * cin
    kin8, cout_p = packed["kin8"], packed["cout_p"]
    apply_bn1 = equal_in_out or activate_before_residual

    # space-to-depth by the stride (all in-kernel convs become stride-1),
    # bf16, channels padded only to the 8-sublane multiple (dense DMA).
    x = x_nhwc.astype(jnp.bfloat16)
    if s > 1:
        x = x.reshape(n, hb, s, wb, s, cin).transpose(0, 1, 3, 2, 4, 5)
        x = x.reshape(n, hb, wb, kin)
    if kin8 > kin:
        x = jnp.pad(x, ((0, 0), (0, 0), (0, 0), (0, kin8 - kin)))

    bt = max(1, min(b_tile, n))
    n_pad = _round_up(n, bt)
    if n_pad > n:
        x = jnp.pad(x, ((0, n_pad - n), (0, 0), (0, 0), (0, 0)))

    kernel = _make_block_kernel(
        B=bt, hb=hb, wb=wb, kin8=kin8, cout_p=cout_p,
        deltas1=packed["deltas1"], equal_in_out=equal_in_out,
        apply_bn1=apply_bn1)

    R = hb + 2
    M = (bt * R - 2) * wb
    K2 = 3 * cout_p

    in_specs = [
        pl.BlockSpec((bt, hb, wb, kin8), lambda i: (i, 0, 0, 0)),
        pl.BlockSpec((1, kin8), lambda i: (0, 0)),
        pl.BlockSpec((1, kin8), lambda i: (0, 0)),
        pl.BlockSpec((1, cout_p), lambda i: (0, 0)),
        pl.BlockSpec((1, cout_p), lambda i: (0, 0)),
        pl.BlockSpec(packed["w1"].shape, lambda i: (0, 0, 0)),
        pl.BlockSpec(packed["w2"].shape, lambda i: (0, 0, 0)),
    ]
    args = [x, packed["s1"], packed["b1"], packed["s2"], packed["b2"],
            packed["w1"], packed["w2"]]
    if not equal_in_out:
        in_specs.append(pl.BlockSpec(packed["wsc"].shape, lambda i: (0, 0)))
        args.append(packed["wsc"])

    out = pl.pallas_call(
        kernel,
        out_shape=jax.ShapeDtypeStruct((n_pad, hb, wb, cout_p), jnp.bfloat16),
        grid=(n_pad // bt,),
        in_specs=in_specs,
        out_specs=pl.BlockSpec((bt, hb, wb, cout_p), lambda i: (i, 0, 0, 0)),
        scratch_shapes=[
            pltpu.VMEM((bt * R, wb + 2, kin8), jnp.bfloat16),   # conv1 staging
            pltpu.VMEM((bt * R, wb, K2), jnp.bfloat16),         # conv2 staging (kx folded)
            pltpu.VMEM((M, cout_p), jnp.float32),               # shared f32 accumulator
        ],
        compiler_params=pltpu.CompilerParams(
            dimension_semantics=("parallel",),
            vmem_limit_bytes=48 * 1024 * 1024),
    )(*args)
    return out[:n] if n_pad > n else out     # (n, hb, wb, cout_p) bf16, channel-padded


def basic_block_forward(x_nchw, packed, *, stride, equal_in_out,
                        activate_before_residual, drop_rate=0.0, b_tile=8):
    # TODO(synk): training-mode dropout (drop_rate > 0) not implemented; eval mode.
    del drop_rate
    x_nhwc = jnp.transpose(x_nchw, (0, 2, 3, 1))
    out = basic_block_forward_nhwc(
        x_nhwc, packed, stride=stride, equal_in_out=equal_in_out,
        activate_before_residual=activate_before_residual, b_tile=b_tile)
    out = out[:, :, :, :packed["cout"]].astype(jnp.float32)
    return jnp.transpose(out, (0, 3, 1, 2))        # NHWC -> NCHW (test convenience)


# ---------------------------------------------------------------------------
# Pure-JAX reference (eval-mode PyTorch semantics) for verification
# ---------------------------------------------------------------------------
def _conv_ref(x_nchw, w_oihw, stride, pad):
    return jax.lax.conv_general_dilated(
        x_nchw, w_oihw, (stride, stride), [(pad, pad), (pad, pad)],
        dimension_numbers=("NCHW", "OIHW", "NCHW"))


def reference_forward(x, params, *, stride, equal_in_out, activate_before_residual):
    def bn(x, g, b, m, v):
        s = g * jax.lax.rsqrt(v + BN_EPS)
        return x * s[None, :, None, None] + (b - m * s)[None, :, None, None]

    def lrelu(x):
        return jnp.where(x > 0, x, NEG_SLOPE * x)

    if (not equal_in_out) and activate_before_residual:
        x = lrelu(bn(x, params["bn1_gamma"], params["bn1_beta"],
                     params["bn1_mean"], params["bn1_var"]))
        out_in = x
    else:
        out = lrelu(bn(x, params["bn1_gamma"], params["bn1_beta"],
                       params["bn1_mean"], params["bn1_var"]))
        out_in = out if equal_in_out else x
    out = _conv_ref(out_in, params["conv1_w"], stride, 1)
    out = lrelu(bn(out, params["bn2_gamma"], params["bn2_beta"],
                   params["bn2_mean"], params["bn2_var"]))
    out = _conv_ref(out, params["conv2_w"], 1, 1)
    short = x if equal_in_out else _conv_ref(x, params["shortcut_w"], stride, 0)
    return short + out


# ---------------------------------------------------------------------------
# Deterministic parameter init
# ---------------------------------------------------------------------------
def init_params(key, in_planes, out_planes, equal_in_out):
    ks = jax.random.split(key, 11)
    p = {
        "bn1_gamma": 1.0 + 0.1 * jax.random.normal(ks[0], (in_planes,), jnp.float32),
        "bn1_beta": 0.1 * jax.random.normal(ks[1], (in_planes,), jnp.float32),
        "bn1_mean": 0.1 * jax.random.normal(ks[2], (in_planes,), jnp.float32),
        "bn1_var": jax.random.uniform(ks[3], (in_planes,), jnp.float32, 0.5, 1.5),
        "conv1_w": 0.1 * jax.random.normal(ks[4], (out_planes, in_planes, 3, 3), jnp.float32),
        "bn2_gamma": 1.0 + 0.1 * jax.random.normal(ks[5], (out_planes,), jnp.float32),
        "bn2_beta": 0.1 * jax.random.normal(ks[6], (out_planes,), jnp.float32),
        "bn2_mean": 0.1 * jax.random.normal(ks[7], (out_planes,), jnp.float32),
        "bn2_var": jax.random.uniform(ks[8], (out_planes,), jnp.float32, 0.5, 1.5),
        "conv2_w": 0.1 * jax.random.normal(ks[9], (out_planes, out_planes, 3, 3), jnp.float32),
    }
    if not equal_in_out:
        p["shortcut_w"] = 0.1 * jax.random.normal(
            ks[10], (out_planes, in_planes, 1, 1), jnp.float32)
    return p


if __name__ == "__main__":
    key = jax.random.PRNGKey(0)

    # (in_planes, out_planes, stride, activate_before_residual)
    configs = [
        (4, 8, 2, True),    # transition block: 1x1-conv shortcut, stride 2
        (8, 8, 1, False),   # identity-shortcut block (equal_in_out)
        (4, 8, 1, False),   # channel change, stride 1, conv1 sees raw x
    ]
    for cin, cout, stride, abr in configs:
        equal = cin == cout
        k_x, k_p, key = jax.random.split(key, 3)
        x = jax.random.normal(k_x, (2, cin, 16, 16), jnp.float32)   # NCHW
        params = init_params(k_p, cin, cout, equal)
        packed = pack_block_params(params, in_planes=cin, out_planes=cout,
                                   stride=stride, equal_in_out=equal)

        out = basic_block_forward(x, packed, stride=stride, equal_in_out=equal,
                                  activate_before_residual=abr)
        out = jax.block_until_ready(out)

        ref = reference_forward(x, params, stride=stride, equal_in_out=equal,
                                activate_before_residual=abr)
        ref = jax.block_until_ready(ref)

        assert out.shape == ref.shape, (out.shape, ref.shape)
        # bf16 activations/weights on the MXU (f32 accumulation) -> loose tol.
        np.testing.assert_allclose(np.asarray(out), np.asarray(ref),
                                   rtol=5e-2, atol=5e-2)

    print("KERNEL_OK")
</pallas_src>

<mosaic_0001>
module attributes {stable_mosaic.version = 11 : i64} {
  func.func @kernel(%arg0: i32, %arg1: memref<2x8x8x16xbf16, #tpu.memory_space<vmem>>, %arg2: memref<1x16xf32, #tpu.memory_space<vmem>>, %arg3: memref<1x16xf32, #tpu.memory_space<vmem>>, %arg4: memref<1x128xf32, #tpu.memory_space<vmem>>, %arg5: memref<1x128xf32, #tpu.memory_space<vmem>>, %arg6: memref<4x16x128xbf16, #tpu.memory_space<vmem>>, %arg7: memref<3x384x128xbf16, #tpu.memory_space<vmem>>, %arg8: memref<16x128xbf16, #tpu.memory_space<vmem>>, %arg9: memref<2x8x8x128xbf16, #tpu.memory_space<vmem>>, %arg10: memref<20x10x16xbf16, #tpu.memory_space<vmem>>, %arg11: memref<20x8x384xbf16, #tpu.memory_space<vmem>>, %arg12: memref<144x128xf32, #tpu.memory_space<vmem>>) attributes {dimension_semantics = [#tpu.dimension_semantics<parallel>], iteration_bounds = array<i64: 1>, scalar_prefetch = 0 : i64, scratch_operands = 3 : i64, tpu.core_type = #tpu.core_type<tc>, window_params = [{transform_indices = @transform_0, window_bounds = array<i64: 2, 8, 8, 16>}, {pipeline_mode = #tpu.pipeline_mode<synchronous>, transform_indices = @transform_1, window_bounds = array<i64: 1, 16>}, {pipeline_mode = #tpu.pipeline_mode<synchronous>, transform_indices = @transform_2, window_bounds = array<i64: 1, 16>}, {pipeline_mode = #tpu.pipeline_mode<synchronous>, transform_indices = @transform_3, window_bounds = array<i64: 1, 128>}, {pipeline_mode = #tpu.pipeline_mode<synchronous>, transform_indices = @transform_4, window_bounds = array<i64: 1, 128>}, {pipeline_mode = #tpu.pipeline_mode<synchronous>, transform_indices = @transform_5, window_bounds = array<i64: 4, 16, 128>}, {pipeline_mode = #tpu.pipeline_mode<synchronous>, transform_indices = @transform_6, window_bounds = array<i64: 3, 384, 128>}, {pipeline_mode = #tpu.pipeline_mode<synchronous>, transform_indices = @transform_7, window_bounds = array<i64: 16, 128>}, {transform_indices = @transform_8, window_bounds = array<i64: 2, 8, 8, 128>}]} {
    %c0 = arith.constant 0 : index
    %c0_0 = arith.constant 0 : index
    %c0_1 = arith.constant 0 : index
    %c0_2 = arith.constant 0 : index
    %0 = vector.load %arg1[%c0, %c0_0, %c0_1, %c0_2] : memref<2x8x8x16xbf16, #tpu.memory_space<vmem>>, vector<2x8x8x16xbf16>
    %1 = arith.extf %0 : vector<2x8x8x16xbf16> to vector<2x8x8x16xf32>
    %c0_3 = arith.constant 0 : index
    %c0_4 = arith.constant 0 : index
    %2 = vector.load %arg2[%c0_3, %c0_4] : memref<1x16xf32, #tpu.memory_space<vmem>>, vector<1x16xf32>
    %3 = vector.shape_cast %2 : vector<1x16xf32> to vector<16xf32>
    %4 = vector.shape_cast %3 : vector<16xf32> to vector<1x1x1x16xf32>
    %5 = vector.broadcast %4 : vector<1x1x1x16xf32> to vector<2x8x8x16xf32>
    %6 = arith.mulf %1, %5 : vector<2x8x8x16xf32>
    %c0_5 = arith.constant 0 : index
    %c0_6 = arith.constant 0 : index
    %7 = vector.load %arg3[%c0_5, %c0_6] : memref<1x16xf32, #tpu.memory_space<vmem>>, vector<1x16xf32>
    %8 = vector.shape_cast %7 : vector<1x16xf32> to vector<16xf32>
    %9 = vector.shape_cast %8 : vector<16xf32> to vector<1x1x1x16xf32>
    %10 = vector.broadcast %9 : vector<1x1x1x16xf32> to vector<2x8x8x16xf32>
    %11 = arith.addf %6, %10 : vector<2x8x8x16xf32>
    %cst = arith.constant 0.000000e+00 : f32
    %12 = vector.broadcast %cst : f32 to vector<2x8x8x16xf32>
    %13 = arith.cmpf ogt, %11, %12 : vector<2x8x8x16xf32>
    %cst_7 = arith.constant 1.000000e-01 : f32
    %14 = vector.broadcast %cst_7 : f32 to vector<2x8x8x16xf32>
    %15 = arith.mulf %14, %11 : vector<2x8x8x16xf32>
    %16 = arith.select %13, %11, %15 : vector<2x8x8x16xi1>, vector<2x8x8x16xf32>
    %17 = arith.truncf %16 : vector<2x8x8x16xf32> to vector<2x8x8x16xbf16>
    %cst_8 = arith.constant 0.000000e+00 : bf16
    %18 = vector.broadcast %cst_8 : bf16 to vector<20x1x16xbf16>
    %c0_9 = arith.constant 0 : index
    %c0_10 = arith.constant 0 : index
    %c0_11 = arith.constant 0 : index
    %19 = vector.load %arg10[%c0_9, %c0_10, %c0_11] : memref<20x10x16xbf16, #tpu.memory_space<vmem>>, vector<20x1x16xbf16>
    tpu.vector_store %arg10[%c0_9, %c0_10, %c0_11], %18 {strides = array<i32>} : memref<20x10x16xbf16, #tpu.memory_space<vmem>>, vector<20x1x16xbf16>,
    %cst_12 = arith.constant 0.000000e+00 : bf16
    %20 = vector.broadcast %cst_12 : bf16 to vector<20x1x16xbf16>
    %c0_13 = arith.constant 0 : index
    %c9 = arith.constant 9 : index
    %c0_14 = arith.constant 0 : index
    %21 = vector.load %arg10[%c0_13, %c9, %c0_14] : memref<20x10x16xbf16, #tpu.memory_space<vmem>>, vector<20x1x16xbf16>
    tpu.vector_store %arg10[%c0_13, %c9, %c0_14], %20 {strides = array<i32>} : memref<20x10x16xbf16, #tpu.memory_space<vmem>>, vector<20x1x16xbf16>,
    %cst_15 = arith.constant 0.000000e+00 : bf16
    %22 = vector.broadcast %cst_15 : bf16 to vector<20x1x128xbf16>
    %c0_16 = arith.constant 0 : index
    %c0_17 = arith.constant 0 : index
    %c0_18 = arith.constant 0 : index
    %23 = vector.load %arg11[%c0_16, %c0_17, %c0_18] : memref<20x8x384xbf16, #tpu.memory_space<vmem>>, vector<20x1x128xbf16>
    tpu.vector_store %arg11[%c0_16, %c0_17, %c0_18], %22 {strides = array<i32>} : memref<20x8x384xbf16, #tpu.memory_space<vmem>>, vector<20x1x128xbf16>,
    %cst_19 = arith.constant 0.000000e+00 : bf16
    %24 = vector.broadcast %cst_19 : bf16 to vector<20x1x128xbf16>
    %c0_20 = arith.constant 0 : index
    %c7 = arith.constant 7 : index
    %c256 = arith.constant 256 : index
    %25 = vector.load %arg11[%c0_20, %c7, %c256] : memref<20x8x384xbf16, #tpu.memory_space<vmem>>, vector<20x1x128xbf16>
    tpu.vector_store %arg11[%c0_20, %c7, %c256], %24 {strides = array<i32>} : memref<20x8x384xbf16, #tpu.memory_space<vmem>>, vector<20x1x128xbf16>,
    %cst_21 = arith.constant 0.000000e+00 : bf16
    %26 = vector.broadcast %cst_21 : bf16 to vector<10x16xbf16>
    %c0_22 = arith.constant 0 : index
    %c0_23 = arith.constant 0 : index
    %c0_24 = arith.constant 0 : index
    %27 = vector.load %arg10[%c0_22, %c0_23, %c0_24] : memref<20x10x16xbf16, #tpu.memory_space<vmem>>, vector<1x10x16xbf16>
    %28 = vector.shape_cast %27 : vector<1x10x16xbf16> to vector<10x16xbf16>
    %29 = vector.shape_cast %26 : vector<10x16xbf16> to vector<1x10x16xbf16>
    tpu.vector_store %arg10[%c0_22, %c0_23, %c0_24], %29 {strides = array<i32>} : memref<20x10x16xbf16, #tpu.memory_space<vmem>>, vector<1x10x16xbf16>,
    %cst_25 = arith.constant 0.000000e+00 : bf16
    %30 = vector.broadcast %cst_25 : bf16 to vector<10x16xbf16>
    %c9_26 = arith.constant 9 : index
    %c0_27 = arith.constant 0 : index
    %c0_28 = arith.constant 0 : index
    %31 = vector.load %arg10[%c9_26, %c0_27, %c0_28] : memref<20x10x16xbf16, #tpu.memory_space<vmem>>, vector<1x10x16xbf16>
    %32 = vector.shape_cast %31 : vector<1x10x16xbf16> to vector<10x16xbf16>
    %33 = vector.shape_cast %30 : vector<10x16xbf16> to vector<1x10x16xbf16>
    tpu.vector_store %arg10[%c9_26, %c0_27, %c0_28], %33 {strides = array<i32>} : memref<20x10x16xbf16, #tpu.memory_space<vmem>>, vector<1x10x16xbf16>,
    %cst_29 = arith.constant 0.000000e+00 : bf16
    %34 = vector.broadcast %cst_29 : bf16 to vector<8x384xbf16>
    %c0_30 = arith.constant 0 : index
    %c0_31 = arith.constant 0 : index
    %c0_32 = arith.constant 0 : index
    %35 = vector.load %arg11[%c0_30, %c0_31, %c0_32] : memref<20x8x384xbf16, #tpu.memory_space<vmem>>, vector<1x8x384xbf16>
    %36 = vector.shape_cast %35 : vector<1x8x384xbf16> to vector<8x384xbf16>
    %37 = vector.shape_cast %34 : vector<8x384xbf16> to vector<1x8x384xbf16>
    tpu.vector_store %arg11[%c0_30, %c0_31, %c0_32], %37 {strides = array<i32>} : memref<20x8x384xbf16, #tpu.memory_space<vmem>>, vector<1x8x384xbf16>,
    %cst_33 = arith.constant 0.000000e+00 : bf16
    %38 = vector.broadcast %cst_33 : bf16 to vector<8x384xbf16>
    %c9_34 = arith.constant 9 : index
    %c0_35 = arith.constant 0 : index
    %c0_36 = arith.constant 0 : index
    %39 = vector.load %arg11[%c9_34, %c0_35, %c0_36] : memref<20x8x384xbf16, #tpu.memory_space<vmem>>, vector<1x8x384xbf16>
    %40 = vector.shape_cast %39 : vector<1x8x384xbf16> to vector<8x384xbf16>
    %41 = vector.shape_cast %38 : vector<8x384xbf16> to vector<1x8x384xbf16>
    tpu.vector_store %arg11[%c9_34, %c0_35, %c0_36], %41 {strides = array<i32>} : memref<20x8x384xbf16, #tpu.memory_space<vmem>>, vector<1x8x384xbf16>,
    %cst_37 = arith.constant 0.000000e+00 : bf16
    %42 = vector.broadcast %cst_37 : bf16 to vector<10x16xbf16>
    %c10 = arith.constant 10 : index
    %c0_38 = arith.constant 0 : index
    %c0_39 = arith.constant 0 : index
    %43 = vector.load %arg10[%c10, %c0_38, %c0_39] : memref<20x10x16xbf16, #tpu.memory_space<vmem>>, vector<1x10x16xbf16>
    %44 = vector.shape_cast %43 : vector<1x10x16xbf16> to vector<10x16xbf16>
    %45 = vector.shape_cast %42 : vector<10x16xbf16> to vector<1x10x16xbf16>
    tpu.vector_store %arg10[%c10, %c0_38, %c0_39], %45 {strides = array<i32>} : memref<20x10x16xbf16, #tpu.memory_space<vmem>>, vector<1x10x16xbf16>,
    %cst_40 = arith.constant 0.000000e+00 : bf16
    %46 = vector.broadcast %cst_40 : bf16 to vector<10x16xbf16>
    %c19 = arith.constant 19 : index
    %c0_41 = arith.constant 0 : index
    %c0_42 = arith.constant 0 : index
    %47 = vector.load %arg10[%c19, %c0_41, %c0_42] : memref<20x10x16xbf16, #tpu.memory_space<vmem>>, vector<1x10x16xbf16>
    %48 = vector.shape_cast %47 : vector<1x10x16xbf16> to vector<10x16xbf16>
    %49 = vector.shape_cast %46 : vector<10x16xbf16> to vector<1x10x16xbf16>
    tpu.vector_store %arg10[%c19, %c0_41, %c0_42], %49 {strides = array<i32>} : memref<20x10x16xbf16, #tpu.memory_space<vmem>>, vector<1x10x16xbf16>,
    %cst_43 = arith.constant 0.000000e+00 : bf16
    %50 = vector.broadcast %cst_43 : bf16 to vector<8x384xbf16>
    %c10_44 = arith.constant 10 : index
    %c0_45 = arith.constant 0 : index
    %c0_46 = arith.constant 0 : index
    %51 = vector.load %arg11[%c10_44, %c0_45, %c0_46] : memref<20x8x384xbf16, #tpu.memory_space<vmem>>, vector<1x8x384xbf16>
    %52 = vector.shape_cast %51 : vector<1x8x384xbf16> to vector<8x384xbf16>
    %53 = vector.shape_cast %50 : vector<8x384xbf16> to vector<1x8x384xbf16>
    tpu.vector_store %arg11[%c10_44, %c0_45, %c0_46], %53 {strides = array<i32>} : memref<20x8x384xbf16, #tpu.memory_space<vmem>>, vector<1x8x384xbf16>,
    %cst_47 = arith.constant 0.000000e+00 : bf16
    %54 = vector.broadcast %cst_47 : bf16 to vector<8x384xbf16>
    %c19_48 = arith.constant 19 : index
    %c0_49 = arith.constant 0 : index
    %c0_50 = arith.constant 0 : index
    %55 = vector.load %arg11[%c19_48, %c0_49, %c0_50] : memref<20x8x384xbf16, #tpu.memory_space<vmem>>, vector<1x8x384xbf16>
    %56 = vector.shape_cast %55 : vector<1x8x384xbf16> to vector<8x384xbf16>
    %57 = vector.shape_cast %54 : vector<8x384xbf16> to vector<1x8x384xbf16>
    tpu.vector_store %arg11[%c19_48, %c0_49, %c0_50], %57 {strides = array<i32>} : memref<20x8x384xbf16, #tpu.memory_space<vmem>>, vector<1x8x384xbf16>,
    %58 = vector.extract_strided_slice %17 {offsets = [0, 0, 0, 0], sizes = [1, 8, 8, 16], strides = [1, 1, 1, 1]} : vector<2x8x8x16xbf16> to vector<1x8x8x16xbf16>
    %59 = vector.shape_cast %58 : vector<1x8x8x16xbf16> to vector<8x8x16xbf16>
    %c1 = arith.constant 1 : index
    %c1_51 = arith.constant 1 : index
    %c0_52 = arith.constant 0 : index
    %60 = vector.load %arg10[%c1, %c1_51, %c0_52] : memref<20x10x16xbf16, #tpu.memory_space<vmem>>, vector<8x8x16xbf16>
    tpu.vector_store %arg10[%c1, %c1_51, %c0_52], %59 {strides = array<i32>} : memref<20x10x16xbf16, #tpu.memory_space<vmem>>, vector<8x8x16xbf16>,
    %61 = vector.extract_strided_slice %17 {offsets = [1, 0, 0, 0], sizes = [1, 8, 8, 16], strides = [1, 1, 1, 1]} : vector<2x8x8x16xbf16> to vector<1x8x8x16xbf16>
    %62 = vector.shape_cast %61 : vector<1x8x8x16xbf16> to vector<8x8x16xbf16>
    %c11 = arith.constant 11 : index
    %c1_53 = arith.constant 1 : index
    %c0_54 = arith.constant 0 : index
    %63 = vector.load %arg10[%c11, %c1_53, %c0_54] : memref<20x10x16xbf16, #tpu.memory_space<vmem>>, vector<8x8x16xbf16>
    tpu.vector_store %arg10[%c11, %c1_53, %c0_54], %62 {strides = array<i32>} : memref<20x10x16xbf16, #tpu.memory_space<vmem>>, vector<8x8x16xbf16>,
    %c0_55 = arith.constant 0 : index
    %c0_56 = arith.constant 0 : index
    %c0_57 = arith.constant 0 : index
    %64 = vector.load %arg10[%c0_55, %c0_56, %c0_57] : memref<20x10x16xbf16, #tpu.memory_space<vmem>>, vector<18x8x16xbf16>
    %65 = vector.shape_cast %64 : vector<18x8x16xbf16> to vector<144x16xbf16>
    %c0_58 = arith.constant 0 : index
    %c0_59 = arith.constant 0 : index
    %c0_60 = arith.constant 0 : index
    %66 = vector.load %arg6[%c0_58, %c0_59, %c0_60] : memref<4x16x128xbf16, #tpu.memory_space<vmem>>, vector<1x16x128xbf16>
    %67 = vector.shape_cast %66 : vector<1x16x128xbf16> to vector<16x128xbf16>
    %cst_61 = arith.constant dense<0.000000e+00> : vector<144x128xf32>
    %68 = tpu.matmul %65, %67, %cst_61 {dimension_numbers = #tpu.dot_dimension_numbers<[1], [0], [0], [1], [0, 0, 1, 1], [], []>} : vector<144x16xbf16>, vector<16x128xbf16>, vector<144x128xf32> -> vector<144x128xf32>
    %c0_62 = arith.constant 0 : index
    %c0_63 = arith.constant 0 : index
    %69 = vector.load %arg12[%c0_62, %c0_63] : memref<144x128xf32, #tpu.memory_space<vmem>>, vector<144x128xf32>
    tpu.vector_store %arg12[%c0_62, %c0_63], %68 {strides = array<i32>} : memref<144x128xf32, #tpu.memory_space<vmem>>, vector<144x128xf32>,
    %c0_64 = arith.constant 0 : index
    %c1_65 = arith.constant 1 : index
    %c0_66 = arith.constant 0 : index
    %70 = vector.load %arg10[%c0_64, %c1_65, %c0_66] : memref<20x10x16xbf16, #tpu.memory_space<vmem>>, vector<18x8x16xbf16>
    %71 = vector.shape_cast %70 : vector<18x8x16xbf16> to vector<144x16xbf16>
    %c1_67 = arith.constant 1 : index
    %c0_68 = arith.constant 0 : index
    %c0_69 = arith.constant 0 : index
    %72 = vector.load %arg6[%c1_67, %c0_68, %c0_69] : memref<4x16x128xbf16, #tpu.memory_space<vmem>>, vector<1x16x128xbf16>
    %73 = vector.shape_cast %72 : vector<1x16x128xbf16> to vector<16x128xbf16>
    %cst_70 = arith.constant dense<0.000000e+00> : vector<144x128xf32>
    %74 = tpu.matmul %71, %73, %cst_70 {dimension_numbers = #tpu.dot_dimension_numbers<[1], [0], [0], [1], [0, 0, 1, 1], [], []>} : vector<144x16xbf16>, vector<16x128xbf16>, vector<144x128xf32> -> vector<144x128xf32>
    %c0_71 = arith.constant 0 : index
    %c0_72 = arith.constant 0 : index
    %75 = vector.load %arg12[%c0_71, %c0_72] : memref<144x128xf32, #tpu.memory_space<vmem>>, vector<144x128xf32>
    %76 = arith.addf %75, %74 : vector<144x128xf32>
    %c0_73 = arith.constant 0 : index
    %c0_74 = arith.constant 0 : index
    %77 = vector.load %arg12[%c0_73, %c0_74] : memref<144x128xf32, #tpu.memory_space<vmem>>, vector<144x128xf32>
    tpu.vector_store %arg12[%c0_73, %c0_74], %76 {strides = array<i32>} : memref<144x128xf32, #tpu.memory_space<vmem>>, vector<144x128xf32>,
    %c1_75 = arith.constant 1 : index
    %c0_76 = arith.constant 0 : index
    %c0_77 = arith.constant 0 : index
    %78 = vector.load %arg10[%c1_75, %c0_76, %c0_77] : memref<20x10x16xbf16, #tpu.memory_space<vmem>>, vector<18x8x16xbf16>
    %79 = vector.shape_cast %78 : vector<18x8x16xbf16> to vector<144x16xbf16>
    %c2 = arith.constant 2 : index
    %c0_78 = arith.constant 0 : index
    %c0_79 = arith.constant 0 : index
    %80 = vector.load %arg6[%c2, %c0_78, %c0_79] : memref<4x16x128xbf16, #tpu.memory_space<vmem>>, vector<1x16x128xbf16>
    %81 = vector.shape_cast %80 : vector<1x16x128xbf16> to vector<16x128xbf16>
    %cst_80 = arith.constant dense<0.000000e+00> : vector<144x128xf32>
    %82 = tpu.matmul %79, %81, %cst_80 {dimension_numbers = #tpu.dot_dimension_numbers<[1], [0], [0], [1], [0, 0, 1, 1], [], []>} : vector<144x16xbf16>, vector<16x128xbf16>, vector<144x128xf32> -> vector<144x128xf32>
    %c0_81 = arith.constant 0 : index
    %c0_82 = arith.constant 0 : index
    %83 = vector.load %arg12[%c0_81, %c0_82] : memref<144x128xf32, #tpu.memory_space<vmem>>, vector<144x128xf32>
    %84 = arith.addf %83, %82 : vector<144x128xf32>
    %c0_83 = arith.constant 0 : index
    %c0_84 = arith.constant 0 : index
    %85 = vector.load %arg12[%c0_83, %c0_84] : memref<144x128xf32, #tpu.memory_space<vmem>>, vector<144x128xf32>
    tpu.vector_store %arg12[%c0_83, %c0_84], %84 {strides = array<i32>} : memref<144x128xf32, #tpu.memory_space<vmem>>, vector<144x128xf32>,
    %c1_85 = arith.constant 1 : index
    %c1_86 = arith.constant 1 : index
    %c0_87 = arith.constant 0 : index
    %86 = vector.load %arg10[%c1_85, %c1_86, %c0_87] : memref<20x10x16xbf16, #tpu.memory_space<vmem>>, vector<18x8x16xbf16>
    %87 = vector.shape_cast %86 : vector<18x8x16xbf16> to vector<144x16xbf16>
    %c3 = arith.constant 3 : index
    %c0_88 = arith.constant 0 : index
    %c0_89 = arith.constant 0 : index
    %88 = vector.load %arg6[%c3, %c0_88, %c0_89] : memref<4x16x128xbf16, #tpu.memory_space<vmem>>, vector<1x16x128xbf16>
    %89 = vector.shape_cast %88 : vector<1x16x128xbf16> to vector<16x128xbf16>
    %cst_90 = arith.constant dense<0.000000e+00> : vector<144x128xf32>
    %90 = tpu.matmul %87, %89, %cst_90 {dimension_numbers = #tpu.dot_dimension_numbers<[1], [0], [0], [1], [0, 0, 1, 1], [], []>} : vector<144x16xbf16>, vector<16x128xbf16>, vector<144x128xf32> -> vector<144x128xf32>
    %c0_91 = arith.constant 0 : index
    %c0_92 = arith.constant 0 : index
    %91 = vector.load %arg12[%c0_91, %c0_92] : memref<144x128xf32, #tpu.memory_space<vmem>>, vector<144x128xf32>
    %92 = arith.addf %91, %90 : vector<144x128xf32>
    %c0_93 = arith.constant 0 : index
    %c0_94 = arith.constant 0 : index
    %93 = vector.load %arg12[%c0_93, %c0_94] : memref<144x128xf32, #tpu.memory_space<vmem>>, vector<144x128xf32>
    tpu.vector_store %arg12[%c0_93, %c0_94], %92 {strides = array<i32>} : memref<144x128xf32, #tpu.memory_space<vmem>>, vector<144x128xf32>,
    %c0_95 = arith.constant 0 : index
    %c0_96 = arith.constant 0 : index
    %94 = vector.load %arg12[%c0_95, %c0_96] : memref<144x128xf32, #tpu.memory_space<vmem>>, vector<144x128xf32>
    %c0_97 = arith.constant 0 : index
    %c0_98 = arith.constant 0 : index
    %95 = vector.load %arg4[%c0_97, %c0_98] : memref<1x128xf32, #tpu.memory_space<vmem>>, vector<1x128xf32>
    %96 = vector.shape_cast %95 : vector<1x128xf32> to vector<128xf32>
    %97 = vector.shape_cast %96 : vector<128xf32> to vector<1x128xf32>
    %98 = vector.broadcast %97 : vector<1x128xf32> to vector<144x128xf32>
    %99 = arith.mulf %94, %98 : vector<144x128xf32>
    %c0_99 = arith.constant 0 : index
    %c0_100 = arith.constant 0 : index
    %100 = vector.load %arg5[%c0_99, %c0_100] : memref<1x128xf32, #tpu.memory_space<vmem>>, vector<1x128xf32>
    %101 = vector.shape_cast %100 : vector<1x128xf32> to vector<128xf32>
    %102 = vector.shape_cast %101 : vector<128xf32> to vector<1x128xf32>
    %103 = vector.broadcast %102 : vector<1x128xf32> to vector<144x128xf32>
    %104 = arith.addf %99, %103 : vector<144x128xf32>
    %cst_101 = arith.constant 0.000000e+00 : f32
    %105 = vector.broadcast %cst_101 : f32 to vector<144x128xf32>
    %106 = arith.cmpf ogt, %104, %105 : vector<144x128xf32>
    %cst_102 = arith.constant 1.000000e-01 : f32
    %107 = vector.broadcast %cst_102 : f32 to vector<144x128xf32>
    %108 = arith.mulf %107, %104 : vector<144x128xf32>
    %109 = arith.select %106, %104, %108 : vector<144x128xi1>, vector<144x128xf32>
    %110 = arith.truncf %109 : vector<144x128xf32> to vector<144x128xbf16>
    %111 = vector.shape_cast %110 : vector<144x128xbf16> to vector<18x8x128xbf16>
    %112 = vector.extract_strided_slice %111 {offsets = [0, 0, 0], sizes = [8, 8, 128], strides = [1, 1, 1]} : vector<18x8x128xbf16> to vector<8x8x128xbf16>
    %113 = vector.extract_strided_slice %112 {offsets = [0, 0, 0], sizes = [8, 7, 128], strides = [1, 1, 1]} : vector<8x8x128xbf16> to vector<8x7x128xbf16>
    %c1_103 = arith.constant 1 : index
    %c1_104 = arith.constant 1 : index
    %c0_105 = arith.constant 0 : index
    %114 = vector.load %arg11[%c1_103, %c1_104, %c0_105] : memref<20x8x384xbf16, #tpu.memory_space<vmem>>, vector<8x7x128xbf16>
    tpu.vector_store %arg11[%c1_103, %c1_104, %c0_105], %113 {strides = array<i32>} : memref<20x8x384xbf16, #tpu.memory_space<vmem>>, vector<8x7x128xbf16>,
    %c1_106 = arith.constant 1 : index
    %c0_107 = arith.constant 0 : index
    %c128 = arith.constant 128 : index
    %115 = vector.load %arg11[%c1_106, %c0_107, %c128] : memref<20x8x384xbf16, #tpu.memory_space<vmem>>, vector<8x8x128xbf16>
    tpu.vector_store %arg11[%c1_106, %c0_107, %c128], %112 {strides = array<i32>} : memref<20x8x384xbf16, #tpu.memory_space<vmem>>, vector<8x8x128xbf16>,
    %116 = vector.extract_strided_slice %112 {offsets = [0, 1, 0], sizes = [8, 7, 128], strides = [1, 1, 1]} : vector<8x8x128xbf16> to vector<8x7x128xbf16>
    %c1_108 = arith.constant 1 : index
    %c0_109 = arith.constant 0 : index
    %c256_110 = arith.constant 256 : index
    %117 = vector.load %arg11[%c1_108, %c0_109, %c256_110] : memref<20x8x384xbf16, #tpu.memory_space<vmem>>, vector<8x7x128xbf16>
    tpu.vector_store %arg11[%c1_108, %c0_109, %c256_110], %116 {strides = array<i32>} : memref<20x8x384xbf16, #tpu.memory_space<vmem>>, vector<8x7x128xbf16>,
    %118 = vector.extract_strided_slice %111 {offsets = [10, 0, 0], sizes = [8, 8, 128], strides = [1, 1, 1]} : vector<18x8x128xbf16> to vector<8x8x128xbf16>
    %119 = vector.extract_strided_slice %118 {offsets = [0, 0, 0], sizes = [8, 7, 128], strides = [1, 1, 1]} : vector<8x8x128xbf16> to vector<8x7x128xbf16>
    %c11_111 = arith.constant 11 : index
    %c1_112 = arith.constant 1 : index
    %c0_113 = arith.constant 0 : index
    %120 = vector.load %arg11[%c11_111, %c1_112, %c0_113] : memref<20x8x384xbf16, #tpu.memory_space<vmem>>, vector<8x7x128xbf16>
    tpu.vector_store %arg11[%c11_111, %c1_112, %c0_113], %119 {strides = array<i32>} : memref<20x8x384xbf16, #tpu.memory_space<vmem>>, vector<8x7x128xbf16>,
    %c11_114 = arith.constant 11 : index
    %c0_115 = arith.constant 0 : index
    %c128_116 = arith.constant 128 : index
    %121 = vector.load %arg11[%c11_114, %c0_115, %c128_116] : memref<20x8x384xbf16, #tpu.memory_space<vmem>>, vector<8x8x128xbf16>
    tpu.vector_store %arg11[%c11_114, %c0_115, %c128_116], %118 {strides = array<i32>} : memref<20x8x384xbf16, #tpu.memory_space<vmem>>, vector<8x8x128xbf16>,
    %122 = vector.extract_strided_slice %118 {offsets = [0, 1, 0], sizes = [8, 7, 128], strides = [1, 1, 1]} : vector<8x8x128xbf16> to vector<8x7x128xbf16>
    %c11_117 = arith.constant 11 : index
    %c0_118 = arith.constant 0 : index
    %c256_119 = arith.constant 256 : index
    %123 = vector.load %arg11[%c11_117, %c0_118, %c256_119] : memref<20x8x384xbf16, #tpu.memory_space<vmem>>, vector<8x7x128xbf16>
    tpu.vector_store %arg11[%c11_117, %c0_118, %c256_119], %122 {strides = array<i32>} : memref<20x8x384xbf16, #tpu.memory_space<vmem>>, vector<8x7x128xbf16>,
    %c1_120 = arith.constant 1 : index
    %c1_121 = arith.constant 1 : index
    %c0_122 = arith.constant 0 : index
    %124 = vector.load %arg10[%c1_120, %c1_121, %c0_122] : memref<20x10x16xbf16, #tpu.memory_space<vmem>>, vector<18x8x16xbf16>
    %125 = vector.shape_cast %124 : vector<18x8x16xbf16> to vector<144x16xbf16>
    %c0_123 = arith.constant 0 : index
    %c0_124 = arith.constant 0 : index
    %126 = vector.load %arg8[%c0_123, %c0_124] : memref<16x128xbf16, #tpu.memory_space<vmem>>, vector<16x128xbf16>
    %cst_125 = arith.constant dense<0.000000e+00> : vector<144x128xf32>
    %127 = tpu.matmul %125, %126, %cst_125 {dimension_numbers = #tpu.dot_dimension_numbers<[1], [0], [0], [1], [0, 0, 1, 1], [], []>} : vector<144x16xbf16>, vector<16x128xbf16>, vector<144x128xf32> -> vector<144x128xf32>
    %c0_126 = arith.constant 0 : index
    %c0_127 = arith.constant 0 : index
    %128 = vector.load %arg12[%c0_126, %c0_127] : memref<144x128xf32, #tpu.memory_space<vmem>>, vector<144x128xf32>
    tpu.vector_store %arg12[%c0_126, %c0_127], %127 {strides = array<i32>} : memref<144x128xf32, #tpu.memory_space<vmem>>, vector<144x128xf32>,
    %c0_128 = arith.constant 0 : index
    %c0_129 = arith.constant 0 : index
    %c0_130 = arith.constant 0 : index
    %129 = vector.load %arg11[%c0_128, %c0_129, %c0_130] : memref<20x8x384xbf16, #tpu.memory_space<vmem>>, vector<18x8x384xbf16>
    %130 = vector.shape_cast %129 : vector<18x8x384xbf16> to vector<144x384xbf16>
    %c0_131 = arith.constant 0 : index
    %c0_132 = arith.constant 0 : index
    %c0_133 = arith.constant 0 : index
    %131 = vector.load %arg7[%c0_131, %c0_132, %c0_133] : memref<3x384x128xbf16, #tpu.memory_space<vmem>>, vector<1x384x128xbf16>
    %132 = vector.shape_cast %131 : vector<1x384x128xbf16> to vector<384x128xbf16>
    %cst_134 = arith.constant dense<0.000000e+00> : vector<144x128xf32>
    %133 = tpu.matmul %130, %132, %cst_134 {dimension_numbers = #tpu.dot_dimension_numbers<[1], [0], [0], [1], [0, 0, 1, 1], [], []>} : vector<144x384xbf16>, vector<384x128xbf16>, vector<144x128xf32> -> vector<144x128xf32>
    %c0_135 = arith.constant 0 : index
    %c0_136 = arith.constant 0 : index
    %134 = vector.load %arg12[%c0_135, %c0_136] : memref<144x128xf32, #tpu.memory_space<vmem>>, vector<144x128xf32>
    %135 = arith.addf %134, %133 : vector<144x128xf32>
    %c0_137 = arith.constant 0 : index
    %c0_138 = arith.constant 0 : index
    %136 = vector.load %arg12[%c0_137, %c0_138] : memref<144x128xf32, #tpu.memory_space<vmem>>, vector<144x128xf32>
    tpu.vector_store %arg12[%c0_137, %c0_138], %135 {strides = array<i32>} : memref<144x128xf32, #tpu.memory_space<vmem>>, vector<144x128xf32>,
    %c1_139 = arith.constant 1 : index
    %c0_140 = arith.constant 0 : index
    %c0_141 = arith.constant 0 : index
    %137 = vector.load %arg11[%c1_139, %c0_140, %c0_141] : memref<20x8x384xbf16, #tpu.memory_space<vmem>>, vector<18x8x384xbf16>
    %138 = vector.shape_cast %137 : vector<18x8x384xbf16> to vector<144x384xbf16>
    %c1_142 = arith.constant 1 : index
    %c0_143 = arith.constant 0 : index
    %c0_144 = arith.constant 0 : index
    %139 = vector.load %arg7[%c1_142, %c0_143, %c0_144] : memref<3x384x128xbf16, #tpu.memory_space<vmem>>, vector<1x384x128xbf16>
    %140 = vector.shape_cast %139 : vector<1x384x128xbf16> to vector<384x128xbf16>
    %cst_145 = arith.constant dense<0.000000e+00> : vector<144x128xf32>
    %141 = tpu.matmul %138, %140, %cst_145 {dimension_numbers = #tpu.dot_dimension_numbers<[1], [0], [0], [1], [0, 0, 1, 1], [], []>} : vector<144x384xbf16>, vector<384x128xbf16>, vector<144x128xf32> -> vector<144x128xf32>
    %c0_146 = arith.constant 0 : index
    %c0_147 = arith.constant 0 : index
    %142 = vector.load %arg12[%c0_146, %c0_147] : memref<144x128xf32, #tpu.memory_space<vmem>>, vector<144x128xf32>
    %143 = arith.addf %142, %141 : vector<144x128xf32>
    %c0_148 = arith.constant 0 : index
    %c0_149 = arith.constant 0 : index
    %144 = vector.load %arg12[%c0_148, %c0_149] : memref<144x128xf32, #tpu.memory_space<vmem>>, vector<144x128xf32>
    tpu.vector_store %arg12[%c0_148, %c0_149], %143 {strides = array<i32>} : memref<144x128xf32, #tpu.memory_space<vmem>>, vector<144x128xf32>,
    %c2_150 = arith.constant 2 : index
    %c0_151 = arith.constant 0 : index
    %c0_152 = arith.constant 0 : index
    %145 = vector.load %arg11[%c2_150, %c0_151, %c0_152] : memref<20x8x384xbf16, #tpu.memory_space<vmem>>, vector<18x8x384xbf16>
    %146 = vector.shape_cast %145 : vector<18x8x384xbf16> to vector<144x384xbf16>
    %c2_153 = arith.constant 2 : index
    %c0_154 = arith.constant 0 : index
    %c0_155 = arith.constant 0 : index
    %147 = vector.load %arg7[%c2_153, %c0_154, %c0_155] : memref<3x384x128xbf16, #tpu.memory_space<vmem>>, vector<1x384x128xbf16>
    %148 = vector.shape_cast %147 : vector<1x384x128xbf16> to vector<384x128xbf16>
    %cst_156 = arith.constant dense<0.000000e+00> : vector<144x128xf32>
    %149 = tpu.matmul %146, %148, %cst_156 {dimension_numbers = #tpu.dot_dimension_numbers<[1], [0], [0], [1], [0, 0, 1, 1], [], []>} : vector<144x384xbf16>, vector<384x128xbf16>, vector<144x128xf32> -> vector<144x128xf32>
    %c0_157 = arith.constant 0 : index
    %c0_158 = arith.constant 0 : index
    %150 = vector.load %arg12[%c0_157, %c0_158] : memref<144x128xf32, #tpu.memory_space<vmem>>, vector<144x128xf32>
    %151 = arith.addf %150, %149 : vector<144x128xf32>
    %c0_159 = arith.constant 0 : index
    %c0_160 = arith.constant 0 : index
    %152 = vector.load %arg12[%c0_159, %c0_160] : memref<144x128xf32, #tpu.memory_space<vmem>>, vector<144x128xf32>
    tpu.vector_store %arg12[%c0_159, %c0_160], %151 {strides = array<i32>} : memref<144x128xf32, #tpu.memory_space<vmem>>, vector<144x128xf32>,
    %c0_161 = arith.constant 0 : index
    %c0_162 = arith.constant 0 : index
    %153 = vector.load %arg12[%c0_161, %c0_162] : memref<144x128xf32, #tpu.memory_space<vmem>>, vector<64x128xf32>
    %154 = vector.shape_cast %153 : vector<64x128xf32> to vector<8x8x128xf32>
    %155 = arith.truncf %154 : vector<8x8x128xf32> to vector<8x8x128xbf16>
    %c0_163 = arith.constant 0 : index
    %c0_164 = arith.constant 0 : index
    %c0_165 = arith.constant 0 : index
    %c0_166 = arith.constant 0 : index
    %156 = vector.load %arg9[%c0_163, %c0_164, %c0_165, %c0_166] : memref<2x8x8x128xbf16, #tpu.memory_space<vmem>>, vector<1x8x8x128xbf16>
    %157 = vector.shape_cast %156 : vector<1x8x8x128xbf16> to vector<8x8x128xbf16>
    %158 = vector.shape_cast %155 : vector<8x8x128xbf16> to vector<1x8x8x128xbf16>
    tpu.vector_store %arg9[%c0_163, %c0_164, %c0_165, %c0_166], %158 {strides = array<i32>} : memref<2x8x8x128xbf16, #tpu.memory_space<vmem>>, vector<1x8x8x128xbf16>,
    %c80 = arith.constant 80 : index
    %c0_167 = arith.constant 0 : index
    %159 = vector.load %arg12[%c80, %c0_167] : memref<144x128xf32, #tpu.memory_space<vmem>>, vector<64x128xf32>
    %160 = vector.shape_cast %159 : vector<64x128xf32> to vector<8x8x128xf32>
    %161 = arith.truncf %160 : vector<8x8x128xf32> to vector<8x8x128xbf16>
    %c1_168 = arith.constant 1 : index
    %c0_169 = arith.constant 0 : index
    %c0_170 = arith.constant 0 : index
    %c0_171 = arith.constant 0 : index
    %162 = vector.load %arg9[%c1_168, %c0_169, %c0_170, %c0_171] : memref<2x8x8x128xbf16, #tpu.memory_space<vmem>>, vector<1x8x8x128xbf16>
    %163 = vector.shape_cast %162 : vector<1x8x8x128xbf16> to vector<8x8x128xbf16>
    %164 = vector.shape_cast %161 : vector<8x8x128xbf16> to vector<1x8x8x128xbf16>
    tpu.vector_store %arg9[%c1_168, %c0_169, %c0_170, %c0_171], %164 {strides = array<i32>} : memref<2x8x8x128xbf16, #tpu.memory_space<vmem>>, vector<1x8x8x128xbf16>,
    return
  }
  func.func @transform_0(%arg0: i32) -> (i32, i32, i32, i32) {
    %c0_i32 = arith.constant 0 : i32
    %c0_i32_0 = arith.constant 0 : i32
    %c0_i32_1 = arith.constant 0 : i32
    %c0_i32_2 = arith.constant 0 : i32
    return %arg0, %c0_i32, %c0_i32_0, %c0_i32_1 : i32, i32, i32, i32
  }
  func.func @transform_1(%arg0: i32) -> (i32, i32) {
    %c0_i32 = arith.constant 0 : i32
    %c0_i32_0 = arith.constant 0 : i32
    %c0_i32_1 = arith.constant 0 : i32
    return %c0_i32, %c0_i32_0 : i32, i32
  }
  func.func @transform_2(%arg0: i32) -> (i32, i32) {
    %c0_i32 = arith.constant 0 : i32
    %c0_i32_0 = arith.constant 0 : i32
    %c0_i32_1 = arith.constant 0 : i32
    return %c0_i32, %c0_i32_0 : i32, i32
  }
  func.func @transform_3(%arg0: i32) -> (i32, i32) {
    %c0_i32 = arith.constant 0 : i32
    %c0_i32_0 = arith.constant 0 : i32
    %c0_i32_1 = arith.constant 0 : i32
    return %c0_i32, %c0_i32_0 : i32, i32
  }
  func.func @transform_4(%arg0: i32) -> (i32, i32) {
    %c0_i32 = arith.constant 0 : i32
    %c0_i32_0 = arith.constant 0 : i32
    %c0_i32_1 = arith.constant 0 : i32
    return %c0_i32, %c0_i32_0 : i32, i32
  }
  func.func @transform_5(%arg0: i32) -> (i32, i32, i32) {
    %c0_i32 = arith.constant 0 : i32
    %c0_i32_0 = arith.constant 0 : i32
    %c0_i32_1 = arith.constant 0 : i32
    %c0_i32_2 = arith.constant 0 : i32
    return %c0_i32, %c0_i32_0, %c0_i32_1 : i32, i32, i32
  }
  func.func @transform_6(%arg0: i32) -> (i32, i32, i32) {
    %c0_i32 = arith.constant 0 : i32
    %c0_i32_0 = arith.constant 0 : i32
    %c0_i32_1 = arith.constant 0 : i32
    %c0_i32_2 = arith.constant 0 : i32
    return %c0_i32, %c0_i32_0, %c0_i32_1 : i32, i32, i32
  }
  func.func @transform_7(%arg0: i32) -> (i32, i32) {
    %c0_i32 = arith.constant 0 : i32
    %c0_i32_0 = arith.constant 0 : i32
    %c0_i32_1 = arith.constant 0 : i32
    return %c0_i32, %c0_i32_0 : i32, i32
  }
  func.func @transform_8(%arg0: i32) -> (i32, i32, i32, i32) {
    %c0_i32 = arith.constant 0 : i32
    %c0_i32_0 = arith.constant 0 : i32
    %c0_i32_1 = arith.constant 0 : i32
    %c0_i32_2 = arith.constant 0 : i32
    return %arg0, %c0_i32, %c0_i32_0, %c0_i32_1 : i32, i32, i32, i32
  }
}

</mosaic_0001>

<llo_original>
// kernel: tpu_custom_call.1
$region0: #{tpu_custom_call.1}
  #allocation0 [shape = 'u32[]', space=smem, size = 0x4, offset = 0x4, fixed_abs, tag = 'smem constant byte address 0x4 - core index']
  #allocation1 [shape = 'u32[72,128]{1,0:T(1,128)}', space=vmem, size = 0x9000, scoped, tag = 'internal scratch']
  #allocation2 [shape = 'bf16[20,10,16]{2,1,0:T(8,128)(2,1)}', space=vmem, size = 0x14000, scoped, tag = 'scratch operand']
  #allocation3 [shape = 'bf16[20,8,384]{2,1,0:T(8,128)(2,1)}', space=vmem, size = 0x1e000, scoped, tag = 'scratch operand']
  #allocation4 [shape = 'f32[144,128]{1,0:T(8,128)}', space=vmem, size = 0x12000, scoped, tag = 'scratch operand']
  %s0 = inlined_call_operand.hbm [shape: bf16[2,8,8,16], index: 0, kind: input, shape index: {}]
  %s1 = inlined_call_operand.hbm [shape: f32[1,16], index: 1, kind: input, shape index: {}]
  %s2 = inlined_call_operand.vmem [shape: f32[1,16], index: 2, kind: input, shape index: {}]
  %s3 = inlined_call_operand.vmem [shape: f32[1,128], index: 3, kind: input, shape index: {}]
  %s4 = inlined_call_operand.vmem [shape: f32[1,128], index: 4, kind: input, shape index: {}]
  %s5 = inlined_call_operand.hbm [shape: bf16[4,16,128], index: 5, kind: input, shape index: {}]
  %s6 = inlined_call_operand.hbm [shape: bf16[3,384,128], index: 6, kind: input, shape index: {}]
  %s7 = inlined_call_operand.hbm [shape: bf16[16,128], index: 7, kind: input, shape index: {}]
  %s8 = inlined_call_operand.hbm [shape: bf16[2,8,8,128], index: 8, kind: output, shape index: {}]
  %s9 = sld [smem:[#allocation0]]
  $region62: #{tpu_custom_call.1} parent=0
    _
  %s11 = ssub.s32 1, %s9
  %s12 = scalar_select 0, %s11, %s9
  $region1: #{tpu_custom_call.1} parent=0
    #allocation5 [shape = 'u8[32768]{0}', space=vmem, size = 0x8000, scoped, tag = 'input window, operand 0, single buffered']
    #allocation6 [shape = 's32[1]{0}', space=sflag, size = 0x4, scoped, tag = 'scoped memory for tpu_custom_call.1']
    #allocation7 [shape = 's32[1]{0}', space=sflag, size = 0x4, scoped, tag = 'scoped memory for tpu_custom_call.1']
    #allocation8 [shape = 'u8[512]{0}', space=vmem, size = 0x400, scoped, tag = 'input window, operand 1, single buffered']
    #allocation9 [shape = 's32[1]{0}', space=sflag, size = 0x4, scoped, tag = 'scoped memory for tpu_custom_call.1']
    #allocation10 [shape = 'u8[16384]{0}', space=vmem, size = 0x4000, scoped, tag = 'input window, operand 5, single buffered']
    #allocation11 [shape = 'u8[294912]{0}', space=vmem, size = 0x48000, scoped, tag = 'input window, operand 6, single buffered']
    #allocation12 [shape = 's32[1]{0}', space=sflag, size = 0x4, scoped, tag = 'scoped memory for tpu_custom_call.1']
    #allocation13 [shape = 'u8[4096]{0}', space=vmem, size = 0x1000, scoped, tag = 'input window, operand 7, single buffered']
    #allocation14 [shape = 'u8[32768]{0}', space=vmem, size = 0x8000, scoped, tag = 'output window, operand 0, single buffered']
    %13 = vsyncpa [#allocation6], 0
    %14 = vsyncpa [#allocation9], 0
    %15 = vsyncpa [#allocation12], 0
    %16 = vsyncpa [#allocation7], 0
    // Predicated region
    $region2: #{tpu_custom_call.1} parent=1 // pred_check
      _
    $region3: #{tpu_custom_call.1} parent=1 // pred_check_branch
      %18 = sbr.rel (0) target = $region5
    $region4: #{tpu_custom_call.1} parent=1 // pred_region
      %20 = vsyncadd [#allocation6], 0
      %s21 = sshll.u32 %s0, 4
      %s22 = int_to_ptr.hbm [resolvable:$true] %s21
      %s23 = sshll.u32 [#allocation5], 4
      %s24 = int_to_ptr.vmem [resolvable:$true] %s23
      %29 = dma.hbm_to_vmem [thread:$0]  %s22, 1024, %s24, [#allocation6], 64, 64, 4
    $region5: #{tpu_custom_call.1} parent=1 // pred_fallthru
      _
    // Predicated region
    $region6: #{tpu_custom_call.1} parent=1 // pred_check
      _
    $region7: #{tpu_custom_call.1} parent=1 // pred_check_branch
      %31 = sbr.rel (0) target = $region9
    $region8: #{tpu_custom_call.1} parent=1 // pred_region
      %33 = vsyncadd [#allocation9], 0
      %s35 = sshll.u32 %s1, 4
      %s36 = int_to_ptr.hbm [resolvable:$true] %s35
      %s37 = sshll.u32 [#allocation8], 4
      %s38 = int_to_ptr.vmem [resolvable:$true] %s37
      %40 = dma.hbm_to_vmem [thread:$0]  %s36, 16, %s38, [#allocation9]
    $region9: #{tpu_custom_call.1} parent=1 // pred_fallthru
      _
    // Predicated region
    $region10: #{tpu_custom_call.1} parent=1 // pred_check
      _
    $region11: #{tpu_custom_call.1} parent=1 // pred_check_branch
      %42 = sbr.rel (0) target = $region13
    $region12: #{tpu_custom_call.1} parent=1 // pred_region
      _
    $region13: #{tpu_custom_call.1} parent=1 // pred_fallthru
      _
    // Predicated region
    $region14: #{tpu_custom_call.1} parent=1 // pred_check
      _
    $region15: #{tpu_custom_call.1} parent=1 // pred_check_branch
      %44 = sbr.rel (0) target = $region17
    $region16: #{tpu_custom_call.1} parent=1 // pred_region
      _
    $region17: #{tpu_custom_call.1} parent=1 // pred_fallthru
      _
    // Predicated region
    $region18: #{tpu_custom_call.1} parent=1 // pred_check
      _
    $region19: #{tpu_custom_call.1} parent=1 // pred_check_branch
      %46 = sbr.rel (0) target = $region21
    $region20: #{tpu_custom_call.1} parent=1 // pred_region
      _
    $region21: #{tpu_custom_call.1} parent=1 // pred_fallthru
      _
    // Predicated region
    $region22: #{tpu_custom_call.1} parent=1 // pred_check
      _
    $region23: #{tpu_custom_call.1} parent=1 // pred_check_branch
      %48 = sbr.rel (0) target = $region25
    $region24: #{tpu_custom_call.1} parent=1 // pred_region
      %50 = vsyncadd [#allocation9], 0
      %s51 = sshll.u32 %s5, 4
      %s52 = int_to_ptr.hbm [resolvable:$true] %s51
      %s53 = sshll.u32 [#allocation10], 4
      %s54 = int_to_ptr.vmem [resolvable:$true] %s53
      %59 = dma.hbm_to_vmem [thread:$0]  %s52, 512, %s54, [#allocation9], 64, 64, 4
    $region25: #{tpu_custom_call.1} parent=1 // pred_fallthru
      _
    // Predicated region
    $region26: #{tpu_custom_call.1} parent=1 // pred_check
      _
    $region27: #{tpu_custom_call.1} parent=1 // pred_check_branch
      %61 = sbr.rel (0) target = $region29
    $region28: #{tpu_custom_call.1} parent=1 // pred_region
      %63 = vsyncadd [#allocation12], 0
      %s64 = sshll.u32 %s6, 4
      %s65 = int_to_ptr.hbm [resolvable:$true] %s64
      %s66 = sshll.u32 [#allocation11], 4
      %s67 = int_to_ptr.vmem [resolvable:$true] %s66
      %72 = dma.hbm_to_vmem [thread:$0]  %s65, 9216, %s67, [#allocation12], 64, 64, 4
    $region29: #{tpu_custom_call.1} parent=1 // pred_fallthru
      _
    // Predicated region
    $region30: #{tpu_custom_call.1} parent=1 // pred_check
      _
    $region31: #{tpu_custom_call.1} parent=1 // pred_check_branch
      %74 = sbr.rel (0) target = $region33
    $region32: #{tpu_custom_call.1} parent=1 // pred_region
      %76 = vsyncadd [#allocation12], 0
      %s77 = sshll.u32 %s7, 4
      %s78 = int_to_ptr.hbm [resolvable:$true] %s77
      %s79 = sshll.u32 [#allocation13], 4
      %s80 = int_to_ptr.vmem [resolvable:$true] %s79
      %85 = dma.hbm_to_vmem [thread:$0]  %s78, 128, %s80, [#allocation12], 64, 64, 4
    $region33: #{tpu_custom_call.1} parent=1 // pred_fallthru
      _
    // Predicated region
    $region34: #{tpu_custom_call.1} parent=1 // pred_check
      _
    $region35: #{tpu_custom_call.1} parent=1 // pred_check_branch
      %87 = sbr.rel (0) target = $region37
    $region36: #{tpu_custom_call.1} parent=1 // pred_region
      %89 = dma.done [#allocation6], 1024
    $region37: #{tpu_custom_call.1} parent=1 // pred_fallthru
      _
    // Predicated region
    $region38: #{tpu_custom_call.1} parent=1 // pred_check
      _
    $region39: #{tpu_custom_call.1} parent=1 // pred_check_branch
      %91 = sbr.rel (0) target = $region41
    $region40: #{tpu_custom_call.1} parent=1 // pred_region
      %93 = dma.done [#allocation9], 16
    $region41: #{tpu_custom_call.1} parent=1 // pred_fallthru
      _
    // Predicated region
    $region42: #{tpu_custom_call.1} parent=1 // pred_check
      _
    $region43: #{tpu_custom_call.1} parent=1 // pred_check_branch
      %95 = sbr.rel (0) target = $region45
    $region44: #{tpu_custom_call.1} parent=1 // pred_region
      %97 = dma.done [#allocation9], 512
    $region45: #{tpu_custom_call.1} parent=1 // pred_fallthru
      _
    // Predicated region
    $region46: #{tpu_custom_call.1} parent=1 // pred_check
      _
    $region47: #{tpu_custom_call.1} parent=1 // pred_check_branch
      %99 = sbr.rel (0) target = $region49
    $region48: #{tpu_custom_call.1} parent=1 // pred_region
      %101 = dma.done [#allocation12], 9216
    $region49: #{tpu_custom_call.1} parent=1 // pred_fallthru
      _
    // Predicated region
    $region50: #{tpu_custom_call.1} parent=1 // pred_check
      _
    $region51: #{tpu_custom_call.1} parent=1 // pred_check_branch
      %103 = sbr.rel (0) target = $region53
    $region52: #{tpu_custom_call.1} parent=1 // pred_region
      %105 = dma.done [#allocation12], 128
    $region53: #{tpu_custom_call.1} parent=1 // pred_fallthru
      _
    %v107 = vld [vmem:[#allocation5] sm:$0xf]
    %v108 = vld [vmem:[#allocation5 + $0x4] sm:$0xf]
    %v109 = vld [vmem:[#allocation5 + $0x8] sm:$0xf]
    %v110 = vld [vmem:[#allocation5 + $0xc] sm:$0xf]
    %v111 = vld [vmem:[#allocation5 + $0x10] sm:$0xf]
    %v112 = vld [vmem:[#allocation5 + $0x14] sm:$0xf]
    %v113 = vld [vmem:[#allocation5 + $0x18] sm:$0xf]
    %v114 = vld [vmem:[#allocation5 + $0x1c] sm:$0xf]
    %v115 = vld [vmem:[#allocation5 + $0x20] sm:$0xf]
    %v116 = vld [vmem:[#allocation5 + $0x24] sm:$0xf]
    %v117 = vld [vmem:[#allocation5 + $0x28] sm:$0xf]
    %v118 = vld [vmem:[#allocation5 + $0x2c] sm:$0xf]
    %v119 = vld [vmem:[#allocation5 + $0x30] sm:$0xf]
    %v120 = vld [vmem:[#allocation5 + $0x34] sm:$0xf]
    %v121 = vld [vmem:[#allocation5 + $0x38] sm:$0xf]
    %v122 = vld [vmem:[#allocation5 + $0x3c] sm:$0xf]
    %v123 = vunpack.c.l.bf16 %v107
    %v124 = vunpack.c.l.bf16 %v108
    %v125 = vunpack.c.l.bf16 %v109
    %v126 = vunpack.c.l.bf16 %v110
    %v127 = vunpack.c.l.bf16 %v111
    %v128 = vunpack.c.l.bf16 %v112
    %v129 = vunpack.c.l.bf16 %v113
    %v130 = vunpack.c.l.bf16 %v114
    %v131 = vunpack.c.l.bf16 %v115
    %v132 = vunpack.c.l.bf16 %v116
    %v133 = vunpack.c.l.bf16 %v117
    %v134 = vunpack.c.l.bf16 %v118
    %v135 = vunpack.c.l.bf16 %v119
    %v136 = vunpack.c.l.bf16 %v120
    %v137 = vunpack.c.l.bf16 %v121
    %v138 = vunpack.c.l.bf16 %v122
    %v139 = vld [vmem:[#allocation8] sm:$0x1]
    %v141 = vperm.slane %v139, 0
    %v143 = vmul.f32 %v123, %v141
    %v144 = vmul.f32 %v124, %v141
    %v145 = vmul.f32 %v125, %v141
    %v146 = vmul.f32 %v126, %v141
    %v147 = vmul.f32 %v127, %v141
    %v148 = vmul.f32 %v128, %v141
    %v149 = vmul.f32 %v129, %v141
    %v150 = vmul.f32 %v130, %v141
    %v151 = vmul.f32 %v131, %v141
    %v152 = vmul.f32 %v132, %v141
    %v153 = vmul.f32 %v133, %v141
    %v154 = vmul.f32 %v134, %v141
    %v155 = vmul.f32 %v135, %v141
    %v156 = vmul.f32 %v136, %v141
    %v157 = vmul.f32 %v137, %v141
    %v158 = vmul.f32 %v138, %v141
    %v159 = vld [vmem:[%s2] sm:$0x1]
    %v161 = vperm.slane %v159, 0
    %v163 = vadd.f32 %v143, %v161
    %v164 = vadd.f32 %v144, %v161
    %v165 = vadd.f32 %v145, %v161
    %v166 = vadd.f32 %v146, %v161
    %v167 = vadd.f32 %v147, %v161
    %v168 = vadd.f32 %v148, %v161
    %v169 = vadd.f32 %v149, %v161
    %v170 = vadd.f32 %v150, %v161
    %v171 = vadd.f32 %v151, %v161
    %v172 = vadd.f32 %v152, %v161
    %v173 = vadd.f32 %v153, %v161
    %v174 = vadd.f32 %v154, %v161
    %v175 = vadd.f32 %v155, %v161
    %v176 = vadd.f32 %v156, %v161
    %v177 = vadd.f32 %v157, %v161
    %v178 = vadd.f32 %v158, %v161
    %vm179 = vcmp.gt.f32.partialorder %v163, 0.0
    %vm180 = vcmp.gt.f32.partialorder %v164, 0.0
    %vm181 = vcmp.gt.f32.partialorder %v165, 0.0
    %vm182 = vcmp.gt.f32.partialorder %v166, 0.0
    %vm183 = vcmp.gt.f32.partialorder %v167, 0.0
    %vm184 = vcmp.gt.f32.partialorder %v168, 0.0
    %vm185 = vcmp.gt.f32.partialorder %v169, 0.0
    %vm186 = vcmp.gt.f32.partialorder %v170, 0.0
    %vm187 = vcmp.gt.f32.partialorder %v171, 0.0
    %vm188 = vcmp.gt.f32.partialorder %v172, 0.0
    %vm189 = vcmp.gt.f32.partialorder %v173, 0.0
    %vm190 = vcmp.gt.f32.partialorder %v174, 0.0
    %vm191 = vcmp.gt.f32.partialorder %v175, 0.0
    %vm192 = vcmp.gt.f32.partialorder %v176, 0.0
    %vm193 = vcmp.gt.f32.partialorder %v177, 0.0
    %vm194 = vcmp.gt.f32.partialorder %v178, 0.0
    %v195 = vmul.f32 %v163, 0.1
    %v196 = vmul.f32 %v164, 0.1
    %v197 = vmul.f32 %v165, 0.1
    %v198 = vmul.f32 %v166, 0.1
    %v199 = vmul.f32 %v167, 0.1
    %v200 = vmul.f32 %v168, 0.1
    %v201 = vmul.f32 %v169, 0.1
    %v202 = vmul.f32 %v170, 0.1
    %v203 = vmul.f32 %v171, 0.1
    %v204 = vmul.f32 %v172, 0.1
    %v205 = vmul.f32 %v173, 0.1
    %v206 = vmul.f32 %v174, 0.1
    %v207 = vmul.f32 %v175, 0.1
    %v208 = vmul.f32 %v176, 0.1
    %v209 = vmul.f32 %v177, 0.1
    %v210 = vmul.f32 %v178, 0.1
    %v211 = vsel %vm179, %v163, %v195
    %v212 = vsel %vm180, %v164, %v196
    %v213 = vsel %vm181, %v165, %v197
    %v214 = vsel %vm182, %v166, %v198
    %v215 = vsel %vm183, %v167, %v199
    %v216 = vsel %vm184, %v168, %v200
    %v217 = vsel %vm185, %v169, %v201
    %v218 = vsel %vm186, %v170, %v202
    %v219 = vsel %vm187, %v171, %v203
    %v220 = vsel %vm188, %v172, %v204
    %v221 = vsel %vm189, %v173, %v205
    %v222 = vsel %vm190, %v174, %v206
    %v223 = vsel %vm191, %v175, %v207
    %v224 = vsel %vm192, %v176, %v208
    %v225 = vsel %vm193, %v177, %v209
    %v226 = vsel %vm194, %v178, %v210
    %v227 = vpack.c.bf16 %v211, %v211
    %v228 = vpack.c.bf16 %v212, %v212
    %v229 = vpack.c.bf16 %v213, %v213
    %v230 = vpack.c.bf16 %v214, %v214
    %v231 = vpack.c.bf16 %v215, %v215
    %v232 = vpack.c.bf16 %v216, %v216
    %v233 = vpack.c.bf16 %v217, %v217
    %v234 = vpack.c.bf16 %v218, %v218
    %v235 = vpack.c.bf16 %v219, %v219
    %v236 = vpack.c.bf16 %v220, %v220
    %v237 = vpack.c.bf16 %v221, %v221
    %v238 = vpack.c.bf16 %v222, %v222
    %v239 = vpack.c.bf16 %v223, %v223
    %v240 = vpack.c.bf16 %v224, %v224
    %v241 = vpack.c.bf16 %v225, %v225
    %v242 = vpack.c.bf16 %v226, %v226
    %vm243 = vcmask 122880
    %vm244 = vsmask.f32 256
    %vm245 = vmand %vm243, %vm244
    %v246 = vld [vmem:[#allocation2] sm:$0x1]
    %v247 = vsel %vm245, 0, %v246
    %248 = vst [vmem:[#allocation2] sm:$0x1] %v247
    %v249 = vld [vmem:[#allocation2 + $0x8] sm:$0x1]
    %v250 = vsel %vm245, 0, %v249
    %251 = vst [vmem:[#allocation2 + $0x8] sm:$0x1] %v250
    %v252 = vld [vmem:[#allocation2 + $0x10] sm:$0x1]
    %v253 = vsel %vm245, 0, %v252
    %254 = vst [vmem:[#allocation2 + $0x10] sm:$0x1] %v253
    %v255 = vld [vmem:[#allocation2 + $0x18] sm:$0x1]
    %v256 = vsel %vm245, 0, %v255
    %257 = vst [vmem:[#allocation2 + $0x18] sm:$0x1] %v256
    %v258 = vld [vmem:[#allocation2 + $0x20] sm:$0x1]
    %v259 = vsel %vm245, 0, %v258
    %260 = vst [vmem:[#allocation2 + $0x20] sm:$0x1] %v259
    %v261 = vld [vmem:[#allocation2 + $0x28] sm:$0x1]
    %v262 = vsel %vm245, 0, %v261
    %263 = vst [vmem:[#allocation2 + $0x28] sm:$0x1] %v262
    %v264 = vld [vmem:[#allocation2 + $0x30] sm:$0x1]
    %v265 = vsel %vm245, 0, %v264
    %266 = vst [vmem:[#allocation2 + $0x30] sm:$0x1] %v265
    %v267 = vld [vmem:[#allocation2 + $0x38] sm:$0x1]
    %v268 = vsel %vm245, 0, %v267
    %269 = vst [vmem:[#allocation2 + $0x38] sm:$0x1] %v268
    %v270 = vld [vmem:[#allocation2 + $0x40] sm:$0x1]
    %v271 = vsel %vm245, 0, %v270
    %272 = vst [vmem:[#allocation2 + $0x40] sm:$0x1] %v271
    %v273 = vld [vmem:[#allocation2 + $0x48] sm:$0x1]
    %v274 = vsel %vm245, 0, %v273
    %275 = vst [vmem:[#allocation2 + $0x48] sm:$0x1] %v274
    %v276 = vld [vmem:[#allocation2 + $0x50] sm:$0x1]
    %v277 = vsel %vm245, 0, %v276
    %278 = vst [vmem:[#allocation2 + $0x50] sm:$0x1] %v277
    %v279 = vld [vmem:[#allocation2 + $0x58] sm:$0x1]
    %v280 = vsel %vm245, 0, %v279
    %281 = vst [vmem:[#allocation2 + $0x58] sm:$0x1] %v280
    %v282 = vld [vmem:[#allocation2 + $0x60] sm:$0x1]
    %v283 = vsel %vm245, 0, %v282
    %284 = vst [vmem:[#allocation2 + $0x60] sm:$0x1] %v283
    %v285 = vld [vmem:[#allocation2 + $0x68] sm:$0x1]
    %v286 = vsel %vm245, 0, %v285
    %287 = vst [vmem:[#allocation2 + $0x68] sm:$0x1] %v286
    %v288 = vld [vmem:[#allocation2 + $0x70] sm:$0x1]
    %v289 = vsel %vm245, 0, %v288
    %290 = vst [vmem:[#allocation2 + $0x70] sm:$0x1] %v289
    %v291 = vld [vmem:[#allocation2 + $0x78] sm:$0x1]
    %v292 = vsel %vm245, 0, %v291
    %293 = vst [vmem:[#allocation2 + $0x78] sm:$0x1] %v292
    %v294 = vld [vmem:[#allocation2 + $0x80] sm:$0x1]
    %v295 = vsel %vm245, 0, %v294
    %296 = vst [vmem:[#allocation2 + $0x80] sm:$0x1] %v295
    %v297 = vld [vmem:[#allocation2 + $0x88] sm:$0x1]
    %v298 = vsel %vm245, 0, %v297
    %299 = vst [vmem:[#allocation2 + $0x88] sm:$0x1] %v298
    %v300 = vld [vmem:[#allocation2 + $0x90] sm:$0x1]
    %v301 = vsel %vm245, 0, %v300
    %302 = vst [vmem:[#allocation2 + $0x90] sm:$0x1] %v301
    %v303 = vld [vmem:[#allocation2 + $0x98] sm:$0x1]
    %v304 = vsel %vm245, 0, %v303
    %305 = vst [vmem:[#allocation2 + $0x98] sm:$0x1] %v304
    %vm306 = vsmask.f32 7938
    %vm307 = vmand %vm243, %vm306
    %v308 = vld [vmem:[#allocation2 + $0x4] sm:$0x1]
    %v309 = vsel %vm307, 0, %v308
    %310 = vst [vmem:[#allocation2 + $0x4] sm:$0x1] %v309
    %v311 = vld [vmem:[#allocation2 + $0xc] sm:$0x1]
    %v312 = vsel %vm307, 0, %v311
    %313 = vst [vmem:[#allocation2 + $0xc] sm:$0x1] %v312
    %v314 = vld [vmem:[#allocation2 + $0x14] sm:$0x1]
    %v315 = vsel %vm307, 0, %v314
    %316 = vst [vmem:[#allocation2 + $0x14] sm:$0x1] %v315
    %v317 = vld [vmem:[#allocation2 + $0x1c] sm:$0x1]
    %v318 = vsel %vm307, 0, %v317
    %319 = vst [vmem:[#allocation2 + $0x1c] sm:$0x1] %v318
    %v320 = vld [vmem:[#allocation2 + $0x24] sm:$0x1]
    %v321 = vsel %vm307, 0, %v320
    %322 = vst [vmem:[#allocation2 + $0x24] sm:$0x1] %v321
    %v323 = vld [vmem:[#allocation2 + $0x2c] sm:$0x1]
    %v324 = vsel %vm307, 0, %v323
    %325 = vst [vmem:[#allocation2 + $0x2c] sm:$0x1] %v324
    %v326 = vld [vmem:[#allocation2 + $0x34] sm:$0x1]
    %v327 = vsel %vm307, 0, %v326
    %328 = vst [vmem:[#allocation2 + $0x34] sm:$0x1] %v327
    %v329 = vld [vmem:[#allocation2 + $0x3c] sm:$0x1]
    %v330 = vsel %vm307, 0, %v329
    %331 = vst [vmem:[#allocation2 + $0x3c] sm:$0x1] %v330
    %v332 = vld [vmem:[#allocation2 + $0x44] sm:$0x1]
    %v333 = vsel %vm307, 0, %v332
    %334 = vst [vmem:[#allocation2 + $0x44] sm:$0x1] %v333
    %v335 = vld [vmem:[#allocation2 + $0x4c] sm:$0x1]
    %v336 = vsel %vm307, 0, %v335
    %337 = vst [vmem:[#allocation2 + $0x4c] sm:$0x1] %v336
    %v338 = vld [vmem:[#allocation2 + $0x54] sm:$0x1]
    %v339 = vsel %vm307, 0, %v338
    %340 = vst [vmem:[#allocation2 + $0x54] sm:$0x1] %v339
    %v341 = vld [vmem:[#allocation2 + $0x5c] sm:$0x1]
    %v342 = vsel %vm307, 0, %v341
    %343 = vst [vmem:[#allocation2 + $0x5c] sm:$0x1] %v342
    %v344 = vld [vmem:[#allocation2 + $0x64] sm:$0x1]
    %v345 = vsel %vm307, 0, %v344
    %346 = vst [vmem:[#allocation2 + $0x64] sm:$0x1] %v345
    %v347 = vld [vmem:[#allocation2 + $0x6c] sm:$0x1]
    %v348 = vsel %vm307, 0, %v347
    %349 = vst [vmem:[#allocation2 + $0x6c] sm:$0x1] %v348
    %v350 = vld [vmem:[#allocation2 + $0x74] sm:$0x1]
    %v351 = vsel %vm307, 0, %v350
    %352 = vst [vmem:[#allocation2 + $0x74] sm:$0x1] %v351
    %v353 = vld [vmem:[#allocation2 + $0x7c] sm:$0x1]
    %v354 = vsel %vm307, 0, %v353
    %355 = vst [vmem:[#allocation2 + $0x7c] sm:$0x1] %v354
    %v356 = vld [vmem:[#allocation2 + $0x84] sm:$0x1]
    %v357 = vsel %vm307, 0, %v356
    %358 = vst [vmem:[#allocation2 + $0x84] sm:$0x1] %v357
    %v359 = vld [vmem:[#allocation2 + $0x8c] sm:$0x1]
    %v360 = vsel %vm307, 0, %v359
    %361 = vst [vmem:[#allocation2 + $0x8c] sm:$0x1] %v360
    %v362 = vld [vmem:[#allocation2 + $0x94] sm:$0x1]
    %v363 = vsel %vm307, 0, %v362
    %364 = vst [vmem:[#allocation2 + $0x94] sm:$0x1] %v363
    %v365 = vld [vmem:[#allocation2 + $0x9c] sm:$0x1]
    %v366 = vsel %vm307, 0, %v365
    %367 = vst [vmem:[#allocation2 + $0x9c] sm:$0x1] %v366
    %vm368 = vcmask 1040384
    %vm369 = vmand %vm368, %vm244
    %v370 = vld [vmem:[#allocation3] sm:$0x1]
    %v371 = vsel %vm369, 0, %v370
    %372 = vst [vmem:[#allocation3] sm:$0x1] %v371
    %v373 = vld [vmem:[#allocation3 + $0xc] sm:$0x1]
    %v374 = vsel %vm369, 0, %v373
    %375 = vst [vmem:[#allocation3 + $0xc] sm:$0x1] %v374
    %v376 = vld [vmem:[#allocation3 + $0x18] sm:$0x1]
    %v377 = vsel %vm369, 0, %v376
    %378 = vst [vmem:[#allocation3 + $0x18] sm:$0x1] %v377
    %v379 = vld [vmem:[#allocation3 + $0x24] sm:$0x1]
    %v380 = vsel %vm369, 0, %v379
    %381 = vst [vmem:[#allocation3 + $0x24] sm:$0x1] %v380
    %v382 = vld [vmem:[#allocation3 + $0x30] sm:$0x1]
    %v383 = vsel %vm369, 0, %v382
    %384 = vst [vmem:[#allocation3 + $0x30] sm:$0x1] %v383
    %v385 = vld [vmem:[#allocation3 + $0x3c] sm:$0x1]
    %v386 = vsel %vm369, 0, %v385
    %387 = vst [vmem:[#allocation3 + $0x3c] sm:$0x1] %v386
    %v388 = vld [vmem:[#allocation3 + $0x48] sm:$0x1]
    %v389 = vsel %vm369, 0, %v388
    %390 = vst [vmem:[#allocation3 + $0x48] sm:$0x1] %v389
    %v391 = vld [vmem:[#allocation3 + $0x54] sm:$0x1]
    %v392 = vsel %vm369, 0, %v391
    %393 = vst [vmem:[#allocation3 + $0x54] sm:$0x1] %v392
    %v394 = vld [vmem:[#allocation3 + $0x60] sm:$0x1]
    %v395 = vsel %vm369, 0, %v394
    %396 = vst [vmem:[#allocation3 + $0x60] sm:$0x1] %v395
    %v397 = vld [vmem:[#allocation3 + $0x6c] sm:$0x1]
    %v398 = vsel %vm369, 0, %v397
    %399 = vst [vmem:[#allocation3 + $0x6c] sm:$0x1] %v398
    %v400 = vld [vmem:[#allocation3 + $0x78] sm:$0x1]
    %v401 = vsel %vm369, 0, %v400
    %402 = vst [vmem:[#allocation3 + $0x78] sm:$0x1] %v401
    %v403 = vld [vmem:[#allocation3 + $0x84] sm:$0x1]
    %v404 = vsel %vm369, 0, %v403
    %405 = vst [vmem:[#allocation3 + $0x84] sm:$0x1] %v404
    %v406 = vld [vmem:[#allocation3 + $0x90] sm:$0x1]
    %v407 = vsel %vm369, 0, %v406
    %408 = vst [vmem:[#allocation3 + $0x90] sm:$0x1] %v407
    %v409 = vld [vmem:[#allocation3 + $0x9c] sm:$0x1]
    %v410 = vsel %vm369, 0, %v409
    %411 = vst [vmem:[#allocation3 + $0x9c] sm:$0x1] %v410
    %v412 = vld [vmem:[#allocation3 + $0xa8] sm:$0x1]
    %v413 = vsel %vm369, 0, %v412
    %414 = vst [vmem:[#allocation3 + $0xa8] sm:$0x1] %v413
    %v415 = vld [vmem:[#allocation3 + $0xb4] sm:$0x1]
    %v416 = vsel %vm369, 0, %v415
    %417 = vst [vmem:[#allocation3 + $0xb4] sm:$0x1] %v416
    %v418 = vld [vmem:[#allocation3 + $0xc0] sm:$0x1]
    %v419 = vsel %vm369, 0, %v418
    %420 = vst [vmem:[#allocation3 + $0xc0] sm:$0x1] %v419
    %v421 = vld [vmem:[#allocation3 + $0xcc] sm:$0x1]
    %v422 = vsel %vm369, 0, %v421
    %423 = vst [vmem:[#allocation3 + $0xcc] sm:$0x1] %v422
    %v424 = vld [vmem:[#allocation3 + $0xd8] sm:$0x1]
    %v425 = vsel %vm369, 0, %v424
    %426 = vst [vmem:[#allocation3 + $0xd8] sm:$0x1] %v425
    %v427 = vld [vmem:[#allocation3 + $0xe4] sm:$0x1]
    %v428 = vsel %vm369, 0, %v427
    %429 = vst [vmem:[#allocation3 + $0xe4] sm:$0x1] %v428
    %vm430 = vcmask 1043459
    %vm431 = vsmask.f32 7950
    %vm432 = vmand %vm430, %vm431
    %v433 = vld [vmem:[#allocation3 + $0x8] sm:$0x8]
    %v434 = vsel %vm432, 0, %v433
    %435 = vst [vmem:[#allocation3 + $0x8] sm:$0x8] %v434
    %v436 = vld [vmem:[#allocation3 + $0x14] sm:$0x8]
    %v437 = vsel %vm432, 0, %v436
    %438 = vst [vmem:[#allocation3 + $0x14] sm:$0x8] %v437
    %v439 = vld [vmem:[#allocation3 + $0x20] sm:$0x8]
    %v440 = vsel %vm432, 0, %v439
    %441 = vst [vmem:[#allocation3 + $0x20] sm:$0x8] %v440
    %v442 = vld [vmem:[#allocation3 + $0x2c] sm:$0x8]
    %v443 = vsel %vm432, 0, %v442
    %444 = vst [vmem:[#allocation3 + $0x2c] sm:$0x8] %v443
    %v445 = vld [vmem:[#allocation3 + $0x38] sm:$0x8]
    %v446 = vsel %vm432, 0, %v445
    %447 = vst [vmem:[#allocation3 + $0x38] sm:$0x8] %v446
    %v448 = vld [vmem:[#allocation3 + $0x44] sm:$0x8]
    %v449 = vsel %vm432, 0, %v448
    %450 = vst [vmem:[#allocation3 + $0x44] sm:$0x8] %v449
    %v451 = vld [vmem:[#allocation3 + $0x50] sm:$0x8]
    %v452 = vsel %vm432, 0, %v451
    %453 = vst [vmem:[#allocation3 + $0x50] sm:$0x8] %v452
    %v454 = vld [vmem:[#allocation3 + $0x5c] sm:$0x8]
    %v455 = vsel %vm432, 0, %v454
    %456 = vst [vmem:[#allocation3 + $0x5c] sm:$0x8] %v455
    %v457 = vld [vmem:[#allocation3 + $0x68] sm:$0x8]
    %v458 = vsel %vm432, 0, %v457
    %459 = vst [vmem:[#allocation3 + $0x68] sm:$0x8] %v458
    %v460 = vld [vmem:[#allocation3 + $0x74] sm:$0x8]
    %v461 = vsel %vm432, 0, %v460
    %462 = vst [vmem:[#allocation3 + $0x74] sm:$0x8] %v461
    %v463 = vld [vmem:[#allocation3 + $0x80] sm:$0x8]
    %v464 = vsel %vm432, 0, %v463
    %465 = vst [vmem:[#allocation3 + $0x80] sm:$0x8] %v464
    %v466 = vld [vmem:[#allocation3 + $0x8c] sm:$0x8]
    %v467 = vsel %vm432, 0, %v466
    %468 = vst [vmem:[#allocation3 + $0x8c] sm:$0x8] %v467
    %v469 = vld [vmem:[#allocation3 + $0x98] sm:$0x8]
    %v470 = vsel %vm432, 0, %v469
    %471 = vst [vmem:[#allocation3 + $0x98] sm:$0x8] %v470
    %v472 = vld [vmem:[#allocation3 + $0xa4] sm:$0x8]
    %v473 = vsel %vm432, 0, %v472
    %474 = vst [vmem:[#allocation3 + $0xa4] sm:$0x8] %v473
    %v475 = vld [vmem:[#allocation3 + $0xb0] sm:$0x8]
    %v476 = vsel %vm432, 0, %v475
    %477 = vst [vmem:[#allocation3 + $0xb0] sm:$0x8] %v476
    %v478 = vld [vmem:[#allocation3 + $0xbc] sm:$0x8]
    %v479 = vsel %vm432, 0, %v478
    %480 = vst [vmem:[#allocation3 + $0xbc] sm:$0x8] %v479
    %v481 = vld [vmem:[#allocation3 + $0xc8] sm:$0x8]
    %v482 = vsel %vm432, 0, %v481
    %483 = vst [vmem:[#allocation3 + $0xc8] sm:$0x8] %v482
    %v484 = vld [vmem:[#allocation3 + $0xd4] sm:$0x8]
    %v485 = vsel %vm432, 0, %v484
    %486 = vst [vmem:[#allocation3 + $0xd4] sm:$0x8] %v485
    %v487 = vld [vmem:[#allocation3 + $0xe0] sm:$0x8]
    %v488 = vsel %vm432, 0, %v487
    %489 = vst [vmem:[#allocation3 + $0xe0] sm:$0x8] %v488
    %v490 = vld [vmem:[#allocation3 + $0xec] sm:$0x8]
    %v491 = vsel %vm432, 0, %v490
    %492 = vst [vmem:[#allocation3 + $0xec] sm:$0x8] %v491
    %vm493 = vcmask 125952
    %494 = vst.msk [vmem:[#allocation2] sm:$0xf] %vm493, 0
    %vm495 = vcmask 122880
    %496 = vst.msk [vmem:[#allocation2 + $0x4] sm:$0x1] %vm495, 0
    %s497 = scalar_lea.vmem [#allocation2], 72
    %498 = vst.msk [vmem:[%s497] sm:$0xf] %vm493, 0
    %499 = vst.msk [vmem:[%s497 + $0x4] sm:$0x1] %vm495, 0
    %500 = vst [vmem:[#allocation3] sm:$0xff] 0
    %501 = vst [vmem:[#allocation3 + $0x8] sm:$0xf] 0
    %s502 = scalar_lea.vmem [#allocation3], 108
    %503 = vst [vmem:[%s502] sm:$0xff] 0
    %504 = vst [vmem:[%s502 + $0x8] sm:$0xf] 0
    %s505 = scalar_lea.vmem [#allocation2], 80
    %506 = vst.msk [vmem:[%s505] sm:$0xf] %vm493, 0
    %507 = vst.msk [vmem:[%s505 + $0x4] sm:$0x1] %vm495, 0
    %s508 = scalar_lea.vmem [#allocation2], 152
    %509 = vst.msk [vmem:[%s508] sm:$0xf] %vm493, 0
    %510 = vst.msk [vmem:[%s508 + $0x4] sm:$0x1] %vm495, 0
    %s511 = scalar_lea.vmem [#allocation3], 120
    %512 = vst [vmem:[%s511] sm:$0xff] 0
    %513 = vst [vmem:[%s511 + $0x8] sm:$0xf] 0
    %s514 = scalar_lea.vmem [#allocation3], 228
    %515 = vst [vmem:[%s514] sm:$0xff] 0
    %516 = vst [vmem:[%s514 + $0x8] sm:$0xf] 0
    %v518 = vshrl.u32 %v227, 16
    %v520 = vrot.slane %v518, 7
    %v521 = vshll.u32 %v227, 16
    %v523 = vor.u32 %v520, %v521
    %v524 = vrot.slane %v520, 4
    %v526 = vshrl.u32 %v228, 16
    %v528 = vrot.slane %v526, 7
    %v529 = vshll.u32 %v228, 16
    %v531 = vor.u32 %v528, %v529
    %v532 = vrot.slane %v528, 4
    %v534 = vshrl.u32 %v229, 16
    %v536 = vrot.slane %v534, 7
    %v537 = vshll.u32 %v229, 16
    %v539 = vor.u32 %v536, %v537
    %v540 = vrot.slane %v536, 4
    %v542 = vshrl.u32 %v230, 16
    %v544 = vrot.slane %v542, 7
    %v545 = vshll.u32 %v230, 16
    %v547 = vor.u32 %v544, %v545
    %v548 = vrot.slane %v544, 4
    %v550 = vshrl.u32 %v231, 16
    %v552 = vrot.slane %v550, 7
    %v553 = vshll.u32 %v231, 16
    %v555 = vor.u32 %v552, %v553
    %v556 = vrot.slane %v552, 4
    %v558 = vshrl.u32 %v232, 16
    %v560 = vrot.slane %v558, 7
    %v561 = vshll.u32 %v232, 16
    %v563 = vor.u32 %v560, %v561
    %v564 = vrot.slane %v560, 4
    %v566 = vshrl.u32 %v233, 16
    %v568 = vrot.slane %v566, 7
    %v569 = vshll.u32 %v233, 16
    %v571 = vor.u32 %v568, %v569
    %v572 = vrot.slane %v568, 4
    %v574 = vshrl.u32 %v234, 16
    %v576 = vrot.slane %v574, 7
    %v577 = vshll.u32 %v234, 16
    %v579 = vor.u32 %v576, %v577
    %v580 = vrot.slane %v576, 4
    %s597 = scalar_lea.vmem [#allocation2], 8
    %vm598 = vcmask 125952
    %vm599 = vmand %vm598, %vm306
    %v600 = vld [vmem:[%s597] sm:$0xf]
    %v601 = vsel %vm599, %v523, %v600
    %602 = vst [vmem:[%s597] sm:$0xf] %v601
    %v603 = vld [vmem:[%s597 + $0x4] sm:$0x1]
    %v604 = vsel %vm245, %v524, %v603
    %605 = vst [vmem:[%s597 + $0x4] sm:$0x1] %v604
    %v606 = vld [vmem:[%s597 + $0x8] sm:$0xf]
    %v607 = vsel %vm599, %v531, %v606
    %608 = vst [vmem:[%s597 + $0x8] sm:$0xf] %v607
    %v609 = vld [vmem:[%s597 + $0xc] sm:$0x1]
    %v610 = vsel %vm245, %v532, %v609
    %611 = vst [vmem:[%s597 + $0xc] sm:$0x1] %v610
    %v612 = vld [vmem:[%s597 + $0x10] sm:$0xf]
    %v613 = vsel %vm599, %v539, %v612
    %614 = vst [vmem:[%s597 + $0x10] sm:$0xf] %v613
    %v615 = vld [vmem:[%s597 + $0x14] sm:$0x1]
    %v616 = vsel %vm245, %v540, %v615
    %617 = vst [vmem:[%s597 + $0x14] sm:$0x1] %v616
    %v618 = vld [vmem:[%s597 + $0x18] sm:$0xf]
    %v619 = vsel %vm599, %v547, %v618
    %620 = vst [vmem:[%s597 + $0x18] sm:$0xf] %v619
    %v621 = vld [vmem:[%s597 + $0x1c] sm:$0x1]
    %v622 = vsel %vm245, %v548, %v621
    %623 = vst [vmem:[%s597 + $0x1c] sm:$0x1] %v622
    %v624 = vld [vmem:[%s597 + $0x20] sm:$0xf]
    %v625 = vsel %vm599, %v555, %v624
    %626 = vst [vmem:[%s597 + $0x20] sm:$0xf] %v625
    %v627 = vld [vmem:[%s597 + $0x24] sm:$0x1]
    %v628 = vsel %vm245, %v556, %v627
    %629 = vst [vmem:[%s597 + $0x24] sm:$0x1] %v628
    %v630 = vld [vmem:[%s597 + $0x28] sm:$0xf]
    %v631 = vsel %vm599, %v563, %v630
    %632 = vst [vmem:[%s597 + $0x28] sm:$0xf] %v631
    %v633 = vld [vmem:[%s597 + $0x2c] sm:$0x1]
    %v634 = vsel %vm245, %v564, %v633
    %635 = vst [vmem:[%s597 + $0x2c] sm:$0x1] %v634
    %v636 = vld [vmem:[%s597 + $0x30] sm:$0xf]
    %v637 = vsel %vm599, %v571, %v636
    %638 = vst [vmem:[%s597 + $0x30] sm:$0xf] %v637
    %v639 = vld [vmem:[%s597 + $0x34] sm:$0x1]
    %v640 = vsel %vm245, %v572, %v639
    %641 = vst [vmem:[%s597 + $0x34] sm:$0x1] %v640
    %v642 = vld [vmem:[%s597 + $0x38] sm:$0xf]
    %v643 = vsel %vm599, %v579, %v642
    %644 = vst [vmem:[%s597 + $0x38] sm:$0xf] %v643
    %v645 = vld [vmem:[%s597 + $0x3c] sm:$0x1]
    %v646 = vsel %vm245, %v580, %v645
    %647 = vst [vmem:[%s597 + $0x3c] sm:$0x1] %v646
    %v649 = vshrl.u32 %v235, 16
    %v651 = vrot.slane %v649, 7
    %v652 = vshll.u32 %v235, 16
    %v654 = vor.u32 %v651, %v652
    %v655 = vrot.slane %v651, 4
    %v657 = vshrl.u32 %v236, 16
    %v659 = vrot.slane %v657, 7
    %v660 = vshll.u32 %v236, 16
    %v662 = vor.u32 %v659, %v660
    %v663 = vrot.slane %v659, 4
    %v665 = vshrl.u32 %v237, 16
    %v667 = vrot.slane %v665, 7
    %v668 = vshll.u32 %v237, 16
    %v670 = vor.u32 %v667, %v668
    %v671 = vrot.slane %v667, 4
    %v673 = vshrl.u32 %v238, 16
    %v675 = vrot.slane %v673, 7
    %v676 = vshll.u32 %v238, 16
    %v678 = vor.u32 %v675, %v676
    %v679 = vrot.slane %v675, 4
    %v681 = vshrl.u32 %v239, 16
    %v683 = vrot.slane %v681, 7
    %v684 = vshll.u32 %v239, 16
    %v686 = vor.u32 %v683, %v684
    %v687 = vrot.slane %v683, 4
    %v689 = vshrl.u32 %v240, 16
    %v691 = vrot.slane %v689, 7
    %v692 = vshll.u32 %v240, 16
    %v694 = vor.u32 %v691, %v692
    %v695 = vrot.slane %v691, 4
    %v697 = vshrl.u32 %v241, 16
    %v699 = vrot.slane %v697, 7
    %v700 = vshll.u32 %v241, 16
    %v702 = vor.u32 %v699, %v700
    %v703 = vrot.slane %v699, 4
    %v705 = vshrl.u32 %v242, 16
    %v707 = vrot.slane %v705, 7
    %v708 = vshll.u32 %v242, 16
    %v710 = vor.u32 %v707, %v708
    %v711 = vrot.slane %v707, 4
    %s728 = scalar_lea.vmem [#allocation2], 88
    %v729 = vld [vmem:[%s728] sm:$0xf]
    %v730 = vsel %vm599, %v654, %v729
    %731 = vst [vmem:[%s728] sm:$0xf] %v730
    %v732 = vld [vmem:[%s728 + $0x4] sm:$0x1]
    %v733 = vsel %vm245, %v655, %v732
    %734 = vst [vmem:[%s728 + $0x4] sm:$0x1] %v733
    %v735 = vld [vmem:[%s728 + $0x8] sm:$0xf]
    %v736 = vsel %vm599, %v662, %v735
    %737 = vst [vmem:[%s728 + $0x8] sm:$0xf] %v736
    %v738 = vld [vmem:[%s728 + $0xc] sm:$0x1]
    %v739 = vsel %vm245, %v663, %v738
    %740 = vst [vmem:[%s728 + $0xc] sm:$0x1] %v739
    %v741 = vld [vmem:[%s728 + $0x10] sm:$0xf]
    %v742 = vsel %vm599, %v670, %v741
    %743 = vst [vmem:[%s728 + $0x10] sm:$0xf] %v742
    %v744 = vld [vmem:[%s728 + $0x14] sm:$0x1]
    %v745 = vsel %vm245, %v671, %v744
    %746 = vst [vmem:[%s728 + $0x14] sm:$0x1] %v745
    %v747 = vld [vmem:[%s728 + $0x18] sm:$0xf]
    %v748 = vsel %vm599, %v678, %v747
    %749 = vst [vmem:[%s728 + $0x18] sm:$0xf] %v748
    %v750 = vld [vmem:[%s728 + $0x1c] sm:$0x1]
    %v751 = vsel %vm245, %v679, %v750
    %752 = vst [vmem:[%s728 + $0x1c] sm:$0x1] %v751
    %v753 = vld [vmem:[%s728 + $0x20] sm:$0xf]
    %v754 = vsel %vm599, %v686, %v753
    %755 = vst [vmem:[%s728 + $0x20] sm:$0xf] %v754
    %v756 = vld [vmem:[%s728 + $0x24] sm:$0x1]
    %v757 = vsel %vm245, %v687, %v756
    %758 = vst [vmem:[%s728 + $0x24] sm:$0x1] %v757
    %v759 = vld [vmem:[%s728 + $0x28] sm:$0xf]
    %v760 = vsel %vm599, %v694, %v759
    %761 = vst [vmem:[%s728 + $0x28] sm:$0xf] %v760
    %v762 = vld [vmem:[%s728 + $0x2c] sm:$0x1]
    %v763 = vsel %vm245, %v695, %v762
    %764 = vst [vmem:[%s728 + $0x2c] sm:$0x1] %v763
    %v765 = vld [vmem:[%s728 + $0x30] sm:$0xf]
    %v766 = vsel %vm599, %v702, %v765
    %767 = vst [vmem:[%s728 + $0x30] sm:$0xf] %v766
    %v768 = vld [vmem:[%s728 + $0x34] sm:$0x1]
    %v769 = vsel %vm245, %v703, %v768
    %770 = vst [vmem:[%s728 + $0x34] sm:$0x1] %v769
    %v771 = vld [vmem:[%s728 + $0x38] sm:$0xf]
    %v772 = vsel %vm599, %v710, %v771
    %773 = vst [vmem:[%s728 + $0x38] sm:$0xf] %v772
    %v774 = vld [vmem:[%s728 + $0x3c] sm:$0x1]
    %v775 = vsel %vm245, %v711, %v774
    %776 = vst [vmem:[%s728 + $0x3c] sm:$0x1] %v775
    %v777 = vld [vmem:[#allocation2] sm:$0xf]
    %v778 = vld [vmem:[#allocation2 + $0x8] sm:$0xf]
    %v779 = vld [vmem:[#allocation2 + $0x10] sm:$0xf]
    %v780 = vld [vmem:[#allocation2 + $0x18] sm:$0xf]
    %v781 = vld [vmem:[#allocation2 + $0x20] sm:$0xf]
    %v782 = vld [vmem:[#allocation2 + $0x28] sm:$0xf]
    %v783 = vld [vmem:[#allocation2 + $0x30] sm:$0xf]
    %v784 = vld [vmem:[#allocation2 + $0x38] sm:$0xf]
    %v785 = vld [vmem:[#allocation2 + $0x40] sm:$0xf]
    %v786 = vld [vmem:[#allocation2 + $0x48] sm:$0xf]
    %v787 = vld [vmem:[#allocation2 + $0x50] sm:$0xf]
    %v788 = vld [vmem:[#allocation2 + $0x58] sm:$0xf]
    %v789 = vld [vmem:[#allocation2 + $0x60] sm:$0xf]
    %v790 = vld [vmem:[#allocation2 + $0x68] sm:$0xf]
    %v791 = vld [vmem:[#allocation2 + $0x70] sm:$0xf]
    %v792 = vld [vmem:[#allocation2 + $0x78] sm:$0xf]
    %v793 = vld [vmem:[#allocation2 + $0x80] sm:$0xf]
    %v794 = vld [vmem:[#allocation2 + $0x88] sm:$0xf]
    %v795 = vld [vmem:[#allocation10] sm:$0xf]
    %v796 = vld [vmem:[#allocation10 + $0x4] sm:$0xf]
    %v815 = vunpack.c.l.b16 %v777
    %v816 = vunpack.c.l.b16 %v778
    %v817 = vunpack.c.l.b16 %v779
    %v818 = vunpack.c.l.b16 %v780
    %v819 = vunpack.c.l.b16 %v781
    %v820 = vunpack.c.l.b16 %v782
    %v821 = vunpack.c.l.b16 %v783
    %v822 = vunpack.c.l.b16 %v784
    %v823 = vunpack.c.l.b16 %v785
    %v824 = vunpack.c.l.b16 %v786
    %v825 = vunpack.c.l.b16 %v787
    %v826 = vunpack.c.l.b16 %v788
    %v827 = vunpack.c.l.b16 %v789
    %v828 = vunpack.c.l.b16 %v790
    %v829 = vunpack.c.l.b16 %v791
    %v830 = vunpack.c.l.b16 %v792
    %v831 = vunpack.c.l.b16 %v793
    %v832 = vunpack.c.l.b16 %v794
    %v833 = vpack.c.b16 %v816, %v815
    %v834 = vpack.c.b16 %v818, %v817
    %v835 = vpack.c.b16 %v820, %v819
    %v836 = vpack.c.b16 %v822, %v821
    %v837 = vpack.c.b16 %v824, %v823
    %v838 = vpack.c.b16 %v826, %v825
    %v839 = vpack.c.b16 %v828, %v827
    %v840 = vpack.c.b16 %v830, %v829
    %v841 = vpack.c.b16 %v832, %v831
    %v844 = vunpack.c.l.b16 %v795
    %v845 = vunpack.c.l.b16 %v796
    %v846 = vpack.c.b16 %v845, %v844
    %vm848 = vcmask 130048
    %v850 = vsel %vm848, %v833, 0
    %v853 = vsel %vm848, %v834, 0
    %v856 = vsel %vm848, %v835, 0
    %v859 = vsel %vm848, %v836, 0
    %v862 = vsel %vm848, %v837, 0
    %v865 = vsel %vm848, %v838, 0
    %v868 = vsel %vm848, %v839, 0
    %v871 = vsel %vm848, %v840, 0
    %v874 = vsel %vm848, %v841, 0
    %876 = vmatpush.bf16.msra.mxu0 0
    %877 = vmatpush.bf16.msra.mxu0 0
    %878 = vmatpush.bf16.msra.mxu0 0
    %879 = vmatpush.bf16.msra.mxu0 0
    %880 = vmatpush.bf16.msra.mxu0 0
    %881 = vmatpush.bf16.msra.mxu0 0
    %882 = vmatpush.bf16.msra.mxu0 0
    %883 = vmatpush.bf16.msra.mxu0 %v846
    %884 = vmatmul.bf16.gmra.mxu0 %v850
    %v885 = vpop.f32.mrf.mxu0
    %v886 = vadd.f32 0.0, %v885
    %v887 = vpop.f32.mrf.mxu0
    %v888 = vadd.f32 0.0, %v887
    %889 = vmatmul.bf16.gmra.mxu0 %v853
    %v890 = vpop.f32.mrf.mxu0
    %v891 = vadd.f32 0.0, %v890
    %v892 = vpop.f32.mrf.mxu0
    %v893 = vadd.f32 0.0, %v892
    %894 = vmatmul.bf16.gmra.mxu0 %v856
    %v895 = vpop.f32.mrf.mxu0
    %v896 = vadd.f32 0.0, %v895
    %v897 = vpop.f32.mrf.mxu0
    %v898 = vadd.f32 0.0, %v897
    %899 = vmatmul.bf16.gmra.mxu0 %v859
    %v900 = vpop.f32.mrf.mxu0
    %v901 = vadd.f32 0.0, %v900
    %v902 = vpop.f32.mrf.mxu0
    %v903 = vadd.f32 0.0, %v902
    %904 = vmatmul.bf16.gmra.mxu0 %v862
    %v905 = vpop.f32.mrf.mxu0
    %v906 = vadd.f32 0.0, %v905
    %v907 = vpop.f32.mrf.mxu0
    %v908 = vadd.f32 0.0, %v907
    %909 = vmatmul.bf16.gmra.mxu0 %v865
    %v910 = vpop.f32.mrf.mxu0
    %v911 = vadd.f32 0.0, %v910
    %v912 = vpop.f32.mrf.mxu0
    %v913 = vadd.f32 0.0, %v912
    %914 = vmatmul.bf16.gmra.mxu0 %v868
    %v915 = vpop.f32.mrf.mxu0
    %v916 = vadd.f32 0.0, %v915
    %v917 = vpop.f32.mrf.mxu0
    %v918 = vadd.f32 0.0, %v917
    %919 = vmatmul.bf16.gmra.mxu0 %v871
    %v920 = vpop.f32.mrf.mxu0
    %v921 = vadd.f32 0.0, %v920
    %v922 = vpop.f32.mrf.mxu0
    %v923 = vadd.f32 0.0, %v922
    %924 = vmatmul.bf16.gmra.mxu0 %v874
    %v925 = vpop.f32.mrf.mxu0
    %v926 = vadd.f32 0.0, %v925
    %v927 = vpop.f32.mrf.mxu0
    %v928 = vadd.f32 0.0, %v927
    %929 = vdwg.mxu0
    %930 = vst [vmem:[#allocation4] sm:$0xff] %v886
    %931 = vst [vmem:[#allocation4 + $0x8] sm:$0xff] %v888
    %932 = vst [vmem:[#allocation4 + $0x10] sm:$0xff] %v891
    %933 = vst [vmem:[#allocation4 + $0x18] sm:$0xff] %v893
    %934 = vst [vmem:[#allocation4 + $0x20] sm:$0xff] %v896
    %935 = vst [vmem:[#allocation4 + $0x28] sm:$0xff] %v898
    %936 = vst [vmem:[#allocation4 + $0x30] sm:$0xff] %v901
    %937 = vst [vmem:[#allocation4 + $0x38] sm:$0xff] %v903
    %938 = vst [vmem:[#allocation4 + $0x40] sm:$0xff] %v906
    %939 = vst [vmem:[#allocation4 + $0x48] sm:$0xff] %v908
    %940 = vst [vmem:[#allocation4 + $0x50] sm:$0xff] %v911
    %941 = vst [vmem:[#allocation4 + $0x58] sm:$0xff] %v913
    %942 = vst [vmem:[#allocation4 + $0x60] sm:$0xff] %v916
    %943 = vst [vmem:[#allocation4 + $0x68] sm:$0xff] %v918
    %944 = vst [vmem:[#allocation4 + $0x70] sm:$0xff] %v921
    %945 = vst [vmem:[#allocation4 + $0x78] sm:$0xff] %v923
    %946 = vst [vmem:[#allocation4 + $0x80] sm:$0xff] %v926
    %947 = vst [vmem:[#allocation4 + $0x88] sm:$0xff] %v928
    %v948 = vld [vmem:[#allocation2] sm:$0xf]
    %v949 = vld [vmem:[#allocation2 + $0x4] sm:$0x1]
    %v950 = vld [vmem:[#allocation2 + $0x8] sm:$0xf]
    %v951 = vld [vmem:[#allocation2 + $0xc] sm:$0x1]
    %v952 = vld [vmem:[#allocation2 + $0x10] sm:$0xf]
    %v953 = vld [vmem:[#allocation2 + $0x14] sm:$0x1]
    %v954 = vld [vmem:[#allocation2 + $0x18] sm:$0xf]
    %v955 = vld [vmem:[#allocation2 + $0x1c] sm:$0x1]
    %v956 = vld [vmem:[#allocation2 + $0x20] sm:$0xf]
    %v957 = vld [vmem:[#allocation2 + $0x24] sm:$0x1]
    %v958 = vld [vmem:[#allocation2 + $0x28] sm:$0xf]
    %v959 = vld [vmem:[#allocation2 + $0x2c] sm:$0x1]
    %v960 = vld [vmem:[#allocation2 + $0x30] sm:$0xf]
    %v961 = vld [vmem:[#allocation2 + $0x34] sm:$0x1]
    %v962 = vld [vmem:[#allocation2 + $0x38] sm:$0xf]
    %v963 = vld [vmem:[#allocation2 + $0x3c] sm:$0x1]
    %v964 = vld [vmem:[#allocation2 + $0x40] sm:$0xf]
    %v965 = vld [vmem:[#allocation2 + $0x44] sm:$0x1]
    %v966 = vld [vmem:[#allocation2 + $0x48] sm:$0xf]
    %v967 = vld [vmem:[#allocation2 + $0x4c] sm:$0x1]
    %v968 = vld [vmem:[#allocation2 + $0x50] sm:$0xf]
    %v969 = vld [vmem:[#allocation2 + $0x54] sm:$0x1]
    %v970 = vld [vmem:[#allocation2 + $0x58] sm:$0xf]
    %v971 = vld [vmem:[#allocation2 + $0x5c] sm:$0x1]
    %v972 = vld [vmem:[#allocation2 + $0x60] sm:$0xf]
    %v973 = vld [vmem:[#allocation2 + $0x64] sm:$0x1]
    %v974 = vld [vmem:[#allocation2 + $0x68] sm:$0xf]
    %v975 = vld [vmem:[#allocation2 + $0x6c] sm:$0x1]
    %v976 = vld [vmem:[#allocation2 + $0x70] sm:$0xf]
    %v977 = vld [vmem:[#allocation2 + $0x74] sm:$0x1]
    %v978 = vld [vmem:[#allocation2 + $0x78] sm:$0xf]
    %v979 = vld [vmem:[#allocation2 + $0x7c] sm:$0x1]
    %v980 = vld [vmem:[#allocation2 + $0x80] sm:$0xf]
    %v981 = vld [vmem:[#allocation2 + $0x84] sm:$0x1]
    %v982 = vld [vmem:[#allocation2 + $0x88] sm:$0xf]
    %v983 = vld [vmem:[#allocation2 + $0x8c] sm:$0x1]
    %vm984 = vsmask.f32 3328
    %vm985 = vsmask.f32 7440
    %vm986 = vmor %vm984, %vm985
    %v988 = vshrl.u32 %v948, 16
    %v990 = vrot.slane %v988, 4
    %v991 = vshll.u32 %v948, 16
    %v993 = vrot.slane %v991, 5
    %v994 = vor.u32 %v990, %v993
    %v995 = vrot.slane %v994, 4
    %v997 = vshll.u32 %v949, 16
    %v999 = vrot.slane %v997, 5
    %v1000 = vsel %vm986, %v995, %v999
    %v1002 = vshrl.u32 %v950, 16
    %v1004 = vrot.slane %v1002, 4
    %v1005 = vshll.u32 %v950, 16
    %v1007 = vrot.slane %v1005, 5
    %v1008 = vor.u32 %v1004, %v1007
    %v1009 = vrot.slane %v1008, 4
    %v1011 = vshll.u32 %v951, 16
    %v1013 = vrot.slane %v1011, 5
    %v1014 = vsel %vm986, %v1009, %v1013
    %v1016 = vshrl.u32 %v952, 16
    %v1018 = vrot.slane %v1016, 4
    %v1019 = vshll.u32 %v952, 16
    %v1021 = vrot.slane %v1019, 5
    %v1022 = vor.u32 %v1018, %v1021
    %v1023 = vrot.slane %v1022, 4
    %v1025 = vshll.u32 %v953, 16
    %v1027 = vrot.slane %v1025, 5
    %v1028 = vsel %vm986, %v1023, %v1027
    %v1030 = vshrl.u32 %v954, 16
    %v1032 = vrot.slane %v1030, 4
    %v1033 = vshll.u32 %v954, 16
    %v1035 = vrot.slane %v1033, 5
    %v1036 = vor.u32 %v1032, %v1035
    %v1037 = vrot.slane %v1036, 4
    %v1039 = vshll.u32 %v955, 16
    %v1041 = vrot.slane %v1039, 5
    %v1042 = vsel %vm986, %v1037, %v1041
    %v1044 = vshrl.u32 %v956, 16
    %v1046 = vrot.slane %v1044, 4
    %v1047 = vshll.u32 %v956, 16
    %v1049 = vrot.slane %v1047, 5
    %v1050 = vor.u32 %v1046, %v1049
    %v1051 = vrot.slane %v1050, 4
    %v1053 = vshll.u32 %v957, 16
    %v1055 = vrot.slane %v1053, 5
    %v1056 = vsel %vm986, %v1051, %v1055
    %v1058 = vshrl.u32 %v958, 16
    %v1060 = vrot.slane %v1058, 4
    %v1061 = vshll.u32 %v958, 16
    %v1063 = vrot.slane %v1061, 5
    %v1064 = vor.u32 %v1060, %v1063
    %v1065 = vrot.slane %v1064, 4
    %v1067 = vshll.u32 %v959, 16
    %v1069 = vrot.slane %v1067, 5
    %v1070 = vsel %vm986, %v1065, %v1069
    %v1072 = vshrl.u32 %v960, 16
    %v1074 = vrot.slane %v1072, 4
    %v1075 = vshll.u32 %v960, 16
    %v1077 = vrot.slane %v1075, 5
    %v1078 = vor.u32 %v1074, %v1077
    %v1079 = vrot.slane %v1078, 4
    %v1081 = vshll.u32 %v961, 16
    %v1083 = vrot.slane %v1081, 5
    %v1084 = vsel %vm986, %v1079, %v1083
    %v1086 = vshrl.u32 %v962, 16
    %v1088 = vrot.slane %v1086, 4
    %v1089 = vshll.u32 %v962, 16
    %v1091 = vrot.slane %v1089, 5
    %v1092 = vor.u32 %v1088, %v1091
    %v1093 = vrot.slane %v1092, 4
    %v1095 = vshll.u32 %v963, 16
    %v1097 = vrot.slane %v1095, 5
    %v1098 = vsel %vm986, %v1093, %v1097
    %v1100 = vshrl.u32 %v964, 16
    %v1102 = vrot.slane %v1100, 4
    %v1103 = vshll.u32 %v964, 16
    %v1105 = vrot.slane %v1103, 5
    %v1106 = vor.u32 %v1102, %v1105
    %v1107 = vrot.slane %v1106, 4
    %v1109 = vshll.u32 %v965, 16
    %v1111 = vrot.slane %v1109, 5
    %v1112 = vsel %vm986, %v1107, %v1111
    %v1114 = vshrl.u32 %v966, 16
    %v1116 = vrot.slane %v1114, 4
    %v1117 = vshll.u32 %v966, 16
    %v1119 = vrot.slane %v1117, 5
    %v1120 = vor.u32 %v1116, %v1119
    %v1121 = vrot.slane %v1120, 4
    %v1123 = vshll.u32 %v967, 16
    %v1125 = vrot.slane %v1123, 5
    %v1126 = vsel %vm986, %v1121, %v1125
    %v1128 = vshrl.u32 %v968, 16
    %v1130 = vrot.slane %v1128, 4
    %v1131 = vshll.u32 %v968, 16
    %v1133 = vrot.slane %v1131, 5
    %v1134 = vor.u32 %v1130, %v1133
    %v1135 = vrot.slane %v1134, 4
    %v1137 = vshll.u32 %v969, 16
    %v1139 = vrot.slane %v1137, 5
    %v1140 = vsel %vm986, %v1135, %v1139
    %v1142 = vshrl.u32 %v970, 16
    %v1144 = vrot.slane %v1142, 4
    %v1145 = vshll.u32 %v970, 16
    %v1147 = vrot.slane %v1145, 5
    %v1148 = vor.u32 %v1144, %v1147
    %v1149 = vrot.slane %v1148, 4
    %v1151 = vshll.u32 %v971, 16
    %v1153 = vrot.slane %v1151, 5
    %v1154 = vsel %vm986, %v1149, %v1153
    %v1156 = vshrl.u32 %v972, 16
    %v1158 = vrot.slane %v1156, 4
    %v1159 = vshll.u32 %v972, 16
    %v1161 = vrot.slane %v1159, 5
    %v1162 = vor.u32 %v1158, %v1161
    %v1163 = vrot.slane %v1162, 4
    %v1165 = vshll.u32 %v973, 16
    %v1167 = vrot.slane %v1165, 5
    %v1168 = vsel %vm986, %v1163, %v1167
    %v1170 = vshrl.u32 %v974, 16
    %v1172 = vrot.slane %v1170, 4
    %v1173 = vshll.u32 %v974, 16
    %v1175 = vrot.slane %v1173, 5
    %v1176 = vor.u32 %v1172, %v1175
    %v1177 = vrot.slane %v1176, 4
    %v1179 = vshll.u32 %v975, 16
    %v1181 = vrot.slane %v1179, 5
    %v1182 = vsel %vm986, %v1177, %v1181
    %v1184 = vshrl.u32 %v976, 16
    %v1186 = vrot.slane %v1184, 4
    %v1187 = vshll.u32 %v976, 16
    %v1189 = vrot.slane %v1187, 5
    %v1190 = vor.u32 %v1186, %v1189
    %v1191 = vrot.slane %v1190, 4
    %v1193 = vshll.u32 %v977, 16
    %v1195 = vrot.slane %v1193, 5
    %v1196 = vsel %vm986, %v1191, %v1195
    %v1198 = vshrl.u32 %v978, 16
    %v1200 = vrot.slane %v1198, 4
    %v1201 = vshll.u32 %v978, 16
    %v1203 = vrot.slane %v1201, 5
    %v1204 = vor.u32 %v1200, %v1203
    %v1205 = vrot.slane %v1204, 4
    %v1207 = vshll.u32 %v979, 16
    %v1209 = vrot.slane %v1207, 5
    %v1210 = vsel %vm986, %v1205, %v1209
    %v1212 = vshrl.u32 %v980, 16
    %v1214 = vrot.slane %v1212, 4
    %v1215 = vshll.u32 %v980, 16
    %v1217 = vrot.slane %v1215, 5
    %v1218 = vor.u32 %v1214, %v1217
    %v1219 = vrot.slane %v1218, 4
    %v1221 = vshll.u32 %v981, 16
    %v1223 = vrot.slane %v1221, 5
    %v1224 = vsel %vm986, %v1219, %v1223
    %v1226 = vshrl.u32 %v982, 16
    %v1228 = vrot.slane %v1226, 4
    %v1229 = vshll.u32 %v982, 16
    %v1231 = vrot.slane %v1229, 5
    %v1232 = vor.u32 %v1228, %v1231
    %v1233 = vrot.slane %v1232, 4
    %v1235 = vshll.u32 %v983, 16
    %v1237 = vrot.slane %v1235, 5
    %v1238 = vsel %vm986, %v1233, %v1237
    %s1239 = scalar_lea.vmem [#allocation10], 8
    %v1240 = vld [vmem:[%s1239] sm:$0xf]
    %v1241 = vld [vmem:[%s1239 + $0x4] sm:$0xf]
    %v1242 = vunpack.c.l.b16 %v1000
    %v1243 = vunpack.c.l.b16 %v1014
    %v1244 = vunpack.c.l.b16 %v1028
    %v1245 = vunpack.c.l.b16 %v1042
    %v1246 = vunpack.c.l.b16 %v1056
    %v1247 = vunpack.c.l.b16 %v1070
    %v1248 = vunpack.c.l.b16 %v1084
    %v1249 = vunpack.c.l.b16 %v1098
    %v1250 = vunpack.c.l.b16 %v1112
    %v1251 = vunpack.c.l.b16 %v1126
    %v1252 = vunpack.c.l.b16 %v1140
    %v1253 = vunpack.c.l.b16 %v1154
    %v1254 = vunpack.c.l.b16 %v1168
    %v1255 = vunpack.c.l.b16 %v1182
    %v1256 = vunpack.c.l.b16 %v1196
    %v1257 = vunpack.c.l.b16 %v1210
    %v1258 = vunpack.c.l.b16 %v1224
    %v1259 = vunpack.c.l.b16 %v1238
    %v1260 = vpack.c.b16 %v1243, %v1242
    %v1261 = vpack.c.b16 %v1245, %v1244
    %v1262 = vpack.c.b16 %v1247, %v1246
    %v1263 = vpack.c.b16 %v1249, %v1248
    %v1264 = vpack.c.b16 %v1251, %v1250
    %v1265 = vpack.c.b16 %v1253, %v1252
    %v1266 = vpack.c.b16 %v1255, %v1254
    %v1267 = vpack.c.b16 %v1257, %v1256
    %v1268 = vpack.c.b16 %v1259, %v1258
    %v1271 = vunpack.c.l.b16 %v1240
    %v1272 = vunpack.c.l.b16 %v1241
    %v1273 = vpack.c.b16 %v1272, %v1271
    %v1276 = vsel %vm848, %v1260, 0
    %v1279 = vsel %vm848, %v1261, 0
    %v1282 = vsel %vm848, %v1262, 0
    %v1285 = vsel %vm848, %v1263, 0
    %v1288 = vsel %vm848, %v1264, 0
    %v1291 = vsel %vm848, %v1265, 0
    %v1294 = vsel %vm848, %v1266, 0
    %v1297 = vsel %vm848, %v1267, 0
    %v1300 = vsel %vm848, %v1268, 0
    %1302 = vmatpush.bf16.msra.mxu0 0
    %1303 = vmatpush.bf16.msra.mxu0 0
    %1304 = vmatpush.bf16.msra.mxu0 0
    %1305 = vmatpush.bf16.msra.mxu0 0
    %1306 = vmatpush.bf16.msra.mxu0 0
    %1307 = vmatpush.bf16.msra.mxu0 0
    %1308 = vmatpush.bf16.msra.mxu0 0
    %1309 = vmatpush.bf16.msra.mxu0 %v1273
    %1310 = vmatmul.bf16.gmra.mxu0 %v1276
    %v1311 = vpop.f32.mrf.mxu0
    %v1312 = vadd.f32 0.0, %v1311
    %v1313 = vpop.f32.mrf.mxu0
    %v1314 = vadd.f32 0.0, %v1313
    %1315 = vmatmul.bf16.gmra.mxu0 %v1279
    %v1316 = vpop.f32.mrf.mxu0
    %v1317 = vadd.f32 0.0, %v1316
    %v1318 = vpop.f32.mrf.mxu0
    %v1319 = vadd.f32 0.0, %v1318
    %1320 = vmatmul.bf16.gmra.mxu0 %v1282
    %v1321 = vpop.f32.mrf.mxu0
    %v1322 = vadd.f32 0.0, %v1321
    %v1323 = vpop.f32.mrf.mxu0
    %v1324 = vadd.f32 0.0, %v1323
    %1325 = vmatmul.bf16.gmra.mxu0 %v1285
    %v1326 = vpop.f32.mrf.mxu0
    %v1327 = vadd.f32 0.0, %v1326
    %v1328 = vpop.f32.mrf.mxu0
    %v1329 = vadd.f32 0.0, %v1328
    %1330 = vmatmul.bf16.gmra.mxu0 %v1288
    %v1331 = vpop.f32.mrf.mxu0
    %v1332 = vadd.f32 0.0, %v1331
    %v1333 = vpop.f32.mrf.mxu0
    %v1334 = vadd.f32 0.0, %v1333
    %1335 = vmatmul.bf16.gmra.mxu0 %v1291
    %v1336 = vpop.f32.mrf.mxu0
    %v1337 = vadd.f32 0.0, %v1336
    %v1338 = vpop.f32.mrf.mxu0
    %v1339 = vadd.f32 0.0, %v1338
    %1340 = vmatmul.bf16.gmra.mxu0 %v1294
    %v1341 = vpop.f32.mrf.mxu0
    %v1342 = vadd.f32 0.0, %v1341
    %v1343 = vpop.f32.mrf.mxu0
    %v1344 = vadd.f32 0.0, %v1343
    %1345 = vmatmul.bf16.gmra.mxu0 %v1297
    %v1346 = vpop.f32.mrf.mxu0
    %v1347 = vadd.f32 0.0, %v1346
    %v1348 = vpop.f32.mrf.mxu0
    %v1349 = vadd.f32 0.0, %v1348
    %1350 = vmatmul.bf16.gmra.mxu0 %v1300
    %v1351 = vpop.f32.mrf.mxu0
    %v1352 = vadd.f32 0.0, %v1351
    %v1353 = vpop.f32.mrf.mxu0
    %v1354 = vadd.f32 0.0, %v1353
    %1355 = vdwg.mxu0
    %v1356 = vld [vmem:[#allocation4] sm:$0xff]
    %v1357 = vld [vmem:[#allocation4 + $0x8] sm:$0xff]
    %v1358 = vld [vmem:[#allocation4 + $0x10] sm:$0xff]
    %v1359 = vld [vmem:[#allocation4 + $0x18] sm:$0xff]
    %v1360 = vld [vmem:[#allocation4 + $0x20] sm:$0xff]
    %v1361 = vld [vmem:[#allocation4 + $0x28] sm:$0xff]
    %v1362 = vld [vmem:[#allocation4 + $0x30] sm:$0xff]
    %v1363 = vld [vmem:[#allocation4 + $0x38] sm:$0xff]
    %v1364 = vld [vmem:[#allocation4 + $0x40] sm:$0xff]
    %v1365 = vld [vmem:[#allocation4 + $0x48] sm:$0xff]
    %v1366 = vld [vmem:[#allocation4 + $0x50] sm:$0xff]
    %v1367 = vld [vmem:[#allocation4 + $0x58] sm:$0xff]
    %v1368 = vld [vmem:[#allocation4 + $0x60] sm:$0xff]
    %v1369 = vld [vmem:[#allocation4 + $0x68] sm:$0xff]
    %v1370 = vld [vmem:[#allocation4 + $0x70] sm:$0xff]
    %v1371 = vld [vmem:[#allocation4 + $0x78] sm:$0xff]
    %v1372 = vld [vmem:[#allocation4 + $0x80] sm:$0xff]
    %v1373 = vld [vmem:[#allocation4 + $0x88] sm:$0xff]
    %v1374 = vadd.f32 %v1356, %v1312
    %v1375 = vadd.f32 %v1357, %v1314
    %v1376 = vadd.f32 %v1358, %v1317
    %v1377 = vadd.f32 %v1359, %v1319
    %v1378 = vadd.f32 %v1360, %v1322
    %v1379 = vadd.f32 %v1361, %v1324
    %v1380 = vadd.f32 %v1362, %v1327
    %v1381 = vadd.f32 %v1363, %v1329
    %v1382 = vadd.f32 %v1364, %v1332
    %v1383 = vadd.f32 %v1365, %v1334
    %v1384 = vadd.f32 %v1366, %v1337
    %v1385 = vadd.f32 %v1367, %v1339
    %v1386 = vadd.f32 %v1368, %v1342
    %v1387 = vadd.f32 %v1369, %v1344
    %v1388 = vadd.f32 %v1370, %v1347
    %v1389 = vadd.f32 %v1371, %v1349
    %v1390 = vadd.f32 %v1372, %v1352
    %v1391 = vadd.f32 %v1373, %v1354
    %1392 = vst [vmem:[#allocation4] sm:$0xff] %v1374
    %1393 = vst [vmem:[#allocation4 + $0x8] sm:$0xff] %v1375
    %1394 = vst [vmem:[#allocation4 + $0x10] sm:$0xff] %v1376
    %1395 = vst [vmem:[#allocation4 + $0x18] sm:$0xff] %v1377
    %1396 = vst [vmem:[#allocation4 + $0x20] sm:$0xff] %v1378
    %1397 = vst [vmem:[#allocation4 + $0x28] sm:$0xff] %v1379
    %1398 = vst [vmem:[#allocation4 + $0x30] sm:$0xff] %v1380
    %1399 = vst [vmem:[#allocation4 + $0x38] sm:$0xff] %v1381
    %1400 = vst [vmem:[#allocation4 + $0x40] sm:$0xff] %v1382
    %1401 = vst [vmem:[#allocation4 + $0x48] sm:$0xff] %v1383
    %1402 = vst [vmem:[#allocation4 + $0x50] sm:$0xff] %v1384
    %1403 = vst [vmem:[#allocation4 + $0x58] sm:$0xff] %v1385
    %1404 = vst [vmem:[#allocation4 + $0x60] sm:$0xff] %v1386
    %1405 = vst [vmem:[#allocation4 + $0x68] sm:$0xff] %v1387
    %1406 = vst [vmem:[#allocation4 + $0x70] sm:$0xff] %v1388
    %1407 = vst [vmem:[#allocation4 + $0x78] sm:$0xff] %v1389
    %1408 = vst [vmem:[#allocation4 + $0x80] sm:$0xff] %v1390
    %1409 = vst [vmem:[#allocation4 + $0x88] sm:$0xff] %v1391
    %v1410 = vld [vmem:[%s597] sm:$0xf]
    %v1411 = vld [vmem:[%s597 + $0x8] sm:$0xf]
    %v1412 = vld [vmem:[%s597 + $0x10] sm:$0xf]
    %v1413 = vld [vmem:[%s597 + $0x18] sm:$0xf]
    %v1414 = vld [vmem:[%s597 + $0x20] sm:$0xf]
    %v1415 = vld [vmem:[%s597 + $0x28] sm:$0xf]
    %v1416 = vld [vmem:[%s597 + $0x30] sm:$0xf]
    %v1417 = vld [vmem:[%s597 + $0x38] sm:$0xf]
    %v1418 = vld [vmem:[%s597 + $0x40] sm:$0xf]
    %v1419 = vld [vmem:[%s597 + $0x48] sm:$0xf]
    %v1420 = vld [vmem:[%s597 + $0x50] sm:$0xf]
    %v1421 = vld [vmem:[%s597 + $0x58] sm:$0xf]
    %v1422 = vld [vmem:[%s597 + $0x60] sm:$0xf]
    %v1423 = vld [vmem:[%s597 + $0x68] sm:$0xf]
    %v1424 = vld [vmem:[%s597 + $0x70] sm:$0xf]
    %v1425 = vld [vmem:[%s597 + $0x78] sm:$0xf]
    %v1426 = vld [vmem:[%s597 + $0x80] sm:$0xf]
    %v1427 = vld [vmem:[%s597 + $0x88] sm:$0xf]
    %s1428 = scalar_lea.vmem [#allocation10], 16
    %v1429 = vld [vmem:[%s1428] sm:$0xf]
    %v1430 = vld [vmem:[%s1428 + $0x4] sm:$0xf]
    %v1449 = vunpack.c.l.b16 %v1410
    %v1450 = vunpack.c.l.b16 %v1411
    %v1451 = vunpack.c.l.b16 %v1412
    %v1452 = vunpack.c.l.b16 %v1413
    %v1453 = vunpack.c.l.b16 %v1414
    %v1454 = vunpack.c.l.b16 %v1415
    %v1455 = vunpack.c.l.b16 %v1416
    %v1456 = vunpack.c.l.b16 %v1417
    %v1457 = vunpack.c.l.b16 %v1418
    %v1458 = vunpack.c.l.b16 %v1419
    %v1459 = vunpack.c.l.b16 %v1420
    %v1460 = vunpack.c.l.b16 %v1421
    %v1461 = vunpack.c.l.b16 %v1422
    %v1462 = vunpack.c.l.b16 %v1423
    %v1463 = vunpack.c.l.b16 %v1424
    %v1464 = vunpack.c.l.b16 %v1425
    %v1465 = vunpack.c.l.b16 %v1426
    %v1466 = vunpack.c.l.b16 %v1427
    %v1467 = vpack.c.b16 %v1450, %v1449
    %v1468 = vpack.c.b16 %v1452, %v1451
    %v1469 = vpack.c.b16 %v1454, %v1453
    %v1470 = vpack.c.b16 %v1456, %v1455
    %v1471 = vpack.c.b16 %v1458, %v1457
    %v1472 = vpack.c.b16 %v1460, %v1459
    %v1473 = vpack.c.b16 %v1462, %v1461
    %v1474 = vpack.c.b16 %v1464, %v1463
    %v1475 = vpack.c.b16 %v1466, %v1465
    %v1478 = vunpack.c.l.b16 %v1429
    %v1479 = vunpack.c.l.b16 %v1430
    %v1480 = vpack.c.b16 %v1479, %v1478
    %v1483 = vsel %vm848, %v1467, 0
    %v1486 = vsel %vm848, %v1468, 0
    %v1489 = vsel %vm848, %v1469, 0
    %v1492 = vsel %vm848, %v1470, 0
    %v1495 = vsel %vm848, %v1471, 0
    %v1498 = vsel %vm848, %v1472, 0
    %v1501 = vsel %vm848, %v1473, 0
    %v1504 = vsel %vm848, %v1474, 0
    %v1507 = vsel %vm848, %v1475, 0
    %1509 = vmatpush.bf16.msra.mxu0 0
    %1510 = vmatpush.bf16.msra.mxu0 0
    %1511 = vmatpush.bf16.msra.mxu0 0
    %1512 = vmatpush.bf16.msra.mxu0 0
    %1513 = vmatpush.bf16.msra.mxu0 0
    %1514 = vmatpush.bf16.msra.mxu0 0
    %1515 = vmatpush.bf16.msra.mxu0 0
    %1516 = vmatpush.bf16.msra.mxu0 %v1480
    %1517 = vmatmul.bf16.gmra.mxu0 %v1483
    %v1518 = vpop.f32.mrf.mxu0
    %v1519 = vadd.f32 0.0, %v1518
    %v1520 = vpop.f32.mrf.mxu0
    %v1521 = vadd.f32 0.0, %v1520
    %1522 = vmatmul.bf16.gmra.mxu0 %v1486
    %v1523 = vpop.f32.mrf.mxu0
    %v1524 = vadd.f32 0.0, %v1523
    %v1525 = vpop.f32.mrf.mxu0
    %v1526 = vadd.f32 0.0, %v1525
    %1527 = vmatmul.bf16.gmra.mxu0 %v1489
    %v1528 = vpop.f32.mrf.mxu0
    %v1529 = vadd.f32 0.0, %v1528
    %v1530 = vpop.f32.mrf.mxu0
    %v1531 = vadd.f32 0.0, %v1530
    %1532 = vmatmul.bf16.gmra.mxu0 %v1492
    %v1533 = vpop.f32.mrf.mxu0
    %v1534 = vadd.f32 0.0, %v1533
    %v1535 = vpop.f32.mrf.mxu0
    %v1536 = vadd.f32 0.0, %v1535
    %1537 = vmatmul.bf16.gmra.mxu0 %v1495
    %v1538 = vpop.f32.mrf.mxu0
    %v1539 = vadd.f32 0.0, %v1538
    %v1540 = vpop.f32.mrf.mxu0
    %v1541 = vadd.f32 0.0, %v1540
    %1542 = vmatmul.bf16.gmra.mxu0 %v1498
    %v1543 = vpop.f32.mrf.mxu0
    %v1544 = vadd.f32 0.0, %v1543
    %v1545 = vpop.f32.mrf.mxu0
    %v1546 = vadd.f32 0.0, %v1545
    %1547 = vmatmul.bf16.gmra.mxu0 %v1501
    %v1548 = vpop.f32.mrf.mxu0
    %v1549 = vadd.f32 0.0, %v1548
    %v1550 = vpop.f32.mrf.mxu0
    %v1551 = vadd.f32 0.0, %v1550
    %1552 = vmatmul.bf16.gmra.mxu0 %v1504
    %v1553 = vpop.f32.mrf.mxu0
    %v1554 = vadd.f32 0.0, %v1553
    %v1555 = vpop.f32.mrf.mxu0
    %v1556 = vadd.f32 0.0, %v1555
    %1557 = vmatmul.bf16.gmra.mxu0 %v1507
    %v1558 = vpop.f32.mrf.mxu0
    %v1559 = vadd.f32 0.0, %v1558
    %v1560 = vpop.f32.mrf.mxu0
    %v1561 = vadd.f32 0.0, %v1560
    %1562 = vdwg.mxu0
    %v1563 = vld [vmem:[#allocation4] sm:$0xff]
    %v1564 = vld [vmem:[#allocation4 + $0x8] sm:$0xff]
    %v1565 = vld [vmem:[#allocation4 + $0x10] sm:$0xff]
    %v1566 = vld [vmem:[#allocation4 + $0x18] sm:$0xff]
    %v1567 = vld [vmem:[#allocation4 + $0x20] sm:$0xff]
    %v1568 = vld [vmem:[#allocation4 + $0x28] sm:$0xff]
    %v1569 = vld [vmem:[#allocation4 + $0x30] sm:$0xff]
    %v1570 = vld [vmem:[#allocation4 + $0x38] sm:$0xff]
    %v1571 = vld [vmem:[#allocation4 + $0x40] sm:$0xff]
    %v1572 = vld [vmem:[#allocation4 + $0x48] sm:$0xff]
    %v1573 = vld [vmem:[#allocation4 + $0x50] sm:$0xff]
    %v1574 = vld [vmem:[#allocation4 + $0x58] sm:$0xff]
    %v1575 = vld [vmem:[#allocation4 + $0x60] sm:$0xff]
    %v1576 = vld [vmem:[#allocation4 + $0x68] sm:$0xff]
    %v1577 = vld [vmem:[#allocation4 + $0x70] sm:$0xff]
    %v1578 = vld [vmem:[#allocation4 + $0x78] sm:$0xff]
    %v1579 = vld [vmem:[#allocation4 + $0x80] sm:$0xff]
    %v1580 = vld [vmem:[#allocation4 + $0x88] sm:$0xff]
    %v1581 = vadd.f32 %v1563, %v1519
    %v1582 = vadd.f32 %v1564, %v1521
    %v1583 = vadd.f32 %v1565, %v1524
    %v1584 = vadd.f32 %v1566, %v1526
    %v1585 = vadd.f32 %v1567, %v1529
    %v1586 = vadd.f32 %v1568, %v1531
    %v1587 = vadd.f32 %v1569, %v1534
    %v1588 = vadd.f32 %v1570, %v1536
    %v1589 = vadd.f32 %v1571, %v1539
    %v1590 = vadd.f32 %v1572, %v1541
    %v1591 = vadd.f32 %v1573, %v1544
    %v1592 = vadd.f32 %v1574, %v1546
    %v1593 = vadd.f32 %v1575, %v1549
    %v1594 = vadd.f32 %v1576, %v1551
    %v1595 = vadd.f32 %v1577, %v1554
    %v1596 = vadd.f32 %v1578, %v1556
    %v1597 = vadd.f32 %v1579, %v1559
    %v1598 = vadd.f32 %v1580, %v1561
    %1599 = vst [vmem:[#allocation4] sm:$0xff] %v1581
    %1600 = vst [vmem:[#allocation4 + $0x8] sm:$0xff] %v1582
    %1601 = vst [vmem:[#allocation4 + $0x10] sm:$0xff] %v1583
    %1602 = vst [vmem:[#allocation4 + $0x18] sm:$0xff] %v1584
    %1603 = vst [vmem:[#allocation4 + $0x20] sm:$0xff] %v1585
    %1604 = vst [vmem:[#allocation4 + $0x28] sm:$0xff] %v1586
    %1605 = vst [vmem:[#allocation4 + $0x30] sm:$0xff] %v1587
    %1606 = vst [vmem:[#allocation4 + $0x38] sm:$0xff] %v1588
    %1607 = vst [vmem:[#allocation4 + $0x40] sm:$0xff] %v1589
    %1608 = vst [vmem:[#allocation4 + $0x48] sm:$0xff] %v1590
    %1609 = vst [vmem:[#allocation4 + $0x50] sm:$0xff] %v1591
    %1610 = vst [vmem:[#allocation4 + $0x58] sm:$0xff] %v1592
    %1611 = vst [vmem:[#allocation4 + $0x60] sm:$0xff] %v1593
    %1612 = vst [vmem:[#allocation4 + $0x68] sm:$0xff] %v1594
    %1613 = vst [vmem:[#allocation4 + $0x70] sm:$0xff] %v1595
    %1614 = vst [vmem:[#allocation4 + $0x78] sm:$0xff] %v1596
    %1615 = vst [vmem:[#allocation4 + $0x80] sm:$0xff] %v1597
    %1616 = vst [vmem:[#allocation4 + $0x88] sm:$0xff] %v1598
    %v1617 = vld [vmem:[%s597] sm:$0xf]
    %v1618 = vld [vmem:[%s597 + $0x4] sm:$0x1]
    %v1619 = vld [vmem:[%s597 + $0x8] sm:$0xf]
    %v1620 = vld [vmem:[%s597 + $0xc] sm:$0x1]
    %v1621 = vld [vmem:[%s597 + $0x10] sm:$0xf]
    %v1622 = vld [vmem:[%s597 + $0x14] sm:$0x1]
    %v1623 = vld [vmem:[%s597 + $0x18] sm:$0xf]
    %v1624 = vld [vmem:[%s597 + $0x1c] sm:$0x1]
    %v1625 = vld [vmem:[%s597 + $0x20] sm:$0xf]
    %v1626 = vld [vmem:[%s597 + $0x24] sm:$0x1]
    %v1627 = vld [vmem:[%s597 + $0x28] sm:$0xf]
    %v1628 = vld [vmem:[%s597 + $0x2c] sm:$0x1]
    %v1629 = vld [vmem:[%s597 + $0x30] sm:$0xf]
    %v1630 = vld [vmem:[%s597 + $0x34] sm:$0x1]
    %v1631 = vld [vmem:[%s597 + $0x38] sm:$0xf]
    %v1632 = vld [vmem:[%s597 + $0x3c] sm:$0x1]
    %v1633 = vld [vmem:[%s597 + $0x40] sm:$0xf]
    %v1634 = vld [vmem:[%s597 + $0x44] sm:$0x1]
    %v1635 = vld [vmem:[%s597 + $0x48] sm:$0xf]
    %v1636 = vld [vmem:[%s597 + $0x4c] sm:$0x1]
    %v1637 = vld [vmem:[%s597 + $0x50] sm:$0xf]
    %v1638 = vld [vmem:[%s597 + $0x54] sm:$0x1]
    %v1639 = vld [vmem:[%s597 + $0x58] sm:$0xf]
    %v1640 = vld [vmem:[%s597 + $0x5c] sm:$0x1]
    %v1641 = vld [vmem:[%s597 + $0x60] sm:$0xf]
    %v1642 = vld [vmem:[%s597 + $0x64] sm:$0x1]
    %v1643 = vld [vmem:[%s597 + $0x68] sm:$0xf]
    %v1644 = vld [vmem:[%s597 + $0x6c] sm:$0x1]
    %v1645 = vld [vmem:[%s597 + $0x70] sm:$0xf]
    %v1646 = vld [vmem:[%s597 + $0x74] sm:$0x1]
    %v1647 = vld [vmem:[%s597 + $0x78] sm:$0xf]
    %v1648 = vld [vmem:[%s597 + $0x7c] sm:$0x1]
    %v1649 = vld [vmem:[%s597 + $0x80] sm:$0xf]
    %v1650 = vld [vmem:[%s597 + $0x84] sm:$0x1]
    %v1651 = vld [vmem:[%s597 + $0x88] sm:$0xf]
    %v1652 = vld [vmem:[%s597 + $0x8c] sm:$0x1]
    %v1654 = vshrl.u32 %v1617, 16
    %v1656 = vrot.slane %v1654, 4
    %v1657 = vshll.u32 %v1617, 16
    %v1659 = vrot.slane %v1657, 5
    %v1660 = vor.u32 %v1656, %v1659
    %v1661 = vrot.slane %v1660, 4
    %v1663 = vshll.u32 %v1618, 16
    %v1665 = vrot.slane %v1663, 5
    %v1666 = vsel %vm986, %v1661, %v1665
    %v1668 = vshrl.u32 %v1619, 16
    %v1670 = vrot.slane %v1668, 4
    %v1671 = vshll.u32 %v1619, 16
    %v1673 = vrot.slane %v1671, 5
    %v1674 = vor.u32 %v1670, %v1673
    %v1675 = vrot.slane %v1674, 4
    %v1677 = vshll.u32 %v1620, 16
    %v1679 = vrot.slane %v1677, 5
    %v1680 = vsel %vm986, %v1675, %v1679
    %v1682 = vshrl.u32 %v1621, 16
    %v1684 = vrot.slane %v1682, 4
    %v1685 = vshll.u32 %v1621, 16
    %v1687 = vrot.slane %v1685, 5
    %v1688 = vor.u32 %v1684, %v1687
    %v1689 = vrot.slane %v1688, 4
    %v1691 = vshll.u32 %v1622, 16
    %v1693 = vrot.slane %v1691, 5
    %v1694 = vsel %vm986, %v1689, %v1693
    %v1696 = vshrl.u32 %v1623, 16
    %v1698 = vrot.slane %v1696, 4
    %v1699 = vshll.u32 %v1623, 16
    %v1701 = vrot.slane %v1699, 5
    %v1702 = vor.u32 %v1698, %v1701
    %v1703 = vrot.slane %v1702, 4
    %v1705 = vshll.u32 %v1624, 16
    %v1707 = vrot.slane %v1705, 5
    %v1708 = vsel %vm986, %v1703, %v1707
    %v1710 = vshrl.u32 %v1625, 16
    %v1712 = vrot.slane %v1710, 4
    %v1713 = vshll.u32 %v1625, 16
    %v1715 = vrot.slane %v1713, 5
    %v1716 = vor.u32 %v1712, %v1715
    %v1717 = vrot.slane %v1716, 4
    %v1719 = vshll.u32 %v1626, 16
    %v1721 = vrot.slane %v1719, 5
    %v1722 = vsel %vm986, %v1717, %v1721
    %v1724 = vshrl.u32 %v1627, 16
    %v1726 = vrot.slane %v1724, 4
    %v1727 = vshll.u32 %v1627, 16
    %v1729 = vrot.slane %v1727, 5
    %v1730 = vor.u32 %v1726, %v1729
    %v1731 = vrot.slane %v1730, 4
    %v1733 = vshll.u32 %v1628, 16
    %v1735 = vrot.slane %v1733, 5
    %v1736 = vsel %vm986, %v1731, %v1735
    %v1738 = vshrl.u32 %v1629, 16
    %v1740 = vrot.slane %v1738, 4
    %v1741 = vshll.u32 %v1629, 16
    %v1743 = vrot.slane %v1741, 5
    %v1744 = vor.u32 %v1740, %v1743
    %v1745 = vrot.slane %v1744, 4
    %v1747 = vshll.u32 %v1630, 16
    %v1749 = vrot.slane %v1747, 5
    %v1750 = vsel %vm986, %v1745, %v1749
    %v1752 = vshrl.u32 %v1631, 16
    %v1754 = vrot.slane %v1752, 4
    %v1755 = vshll.u32 %v1631, 16
    %v1757 = vrot.slane %v1755, 5
    %v1758 = vor.u32 %v1754, %v1757
    %v1759 = vrot.slane %v1758, 4
    %v1761 = vshll.u32 %v1632, 16
    %v1763 = vrot.slane %v1761, 5
    %v1764 = vsel %vm986, %v1759, %v1763
    %v1766 = vshrl.u32 %v1633, 16
    %v1768 = vrot.slane %v1766, 4
    %v1769 = vshll.u32 %v1633, 16
    %v1771 = vrot.slane %v1769, 5
    %v1772 = vor.u32 %v1768, %v1771
    %v1773 = vrot.slane %v1772, 4
    %v1775 = vshll.u32 %v1634, 16
    %v1777 = vrot.slane %v1775, 5
    %v1778 = vsel %vm986, %v1773, %v1777
    %v1780 = vshrl.u32 %v1635, 16
    %v1782 = vrot.slane %v1780, 4
    %v1783 = vshll.u32 %v1635, 16
    %v1785 = vrot.slane %v1783, 5
    %v1786 = vor.u32 %v1782, %v1785
    %v1787 = vrot.slane %v1786, 4
    %v1789 = vshll.u32 %v1636, 16
    %v1791 = vrot.slane %v1789, 5
    %v1792 = vsel %vm986, %v1787, %v1791
    %v1794 = vshrl.u32 %v1637, 16
    %v1796 = vrot.slane %v1794, 4
    %v1797 = vshll.u32 %v1637, 16
    %v1799 = vrot.slane %v1797, 5
    %v1800 = vor.u32 %v1796, %v1799
    %v1801 = vrot.slane %v1800, 4
    %v1803 = vshll.u32 %v1638, 16
    %v1805 = vrot.slane %v1803, 5
    %v1806 = vsel %vm986, %v1801, %v1805
    %v1808 = vshrl.u32 %v1639, 16
    %v1810 = vrot.slane %v1808, 4
    %v1811 = vshll.u32 %v1639, 16
    %v1813 = vrot.slane %v1811, 5
    %v1814 = vor.u32 %v1810, %v1813
    %v1815 = vrot.slane %v1814, 4
    %v1817 = vshll.u32 %v1640, 16
    %v1819 = vrot.slane %v1817, 5
    %v1820 = vsel %vm986, %v1815, %v1819
    %v1822 = vshrl.u32 %v1641, 16
    %v1824 = vrot.slane %v1822, 4
    %v1825 = vshll.u32 %v1641, 16
    %v1827 = vrot.slane %v1825, 5
    %v1828 = vor.u32 %v1824, %v1827
    %v1829 = vrot.slane %v1828, 4
    %v1831 = vshll.u32 %v1642, 16
    %v1833 = vrot.slane %v1831, 5
    %v1834 = vsel %vm986, %v1829, %v1833
    %v1836 = vshrl.u32 %v1643, 16
    %v1838 = vrot.slane %v1836, 4
    %v1839 = vshll.u32 %v1643, 16
    %v1841 = vrot.slane %v1839, 5
    %v1842 = vor.u32 %v1838, %v1841
    %v1843 = vrot.slane %v1842, 4
    %v1845 = vshll.u32 %v1644, 16
    %v1847 = vrot.slane %v1845, 5
    %v1848 = vsel %vm986, %v1843, %v1847
    %v1850 = vshrl.u32 %v1645, 16
    %v1852 = vrot.slane %v1850, 4
    %v1853 = vshll.u32 %v1645, 16
    %v1855 = vrot.slane %v1853, 5
    %v1856 = vor.u32 %v1852, %v1855
    %v1857 = vrot.slane %v1856, 4
    %v1859 = vshll.u32 %v1646, 16
    %v1861 = vrot.slane %v1859, 5
    %v1862 = vsel %vm986, %v1857, %v1861
    %v1864 = vshrl.u32 %v1647, 16
    %v1866 = vrot.slane %v1864, 4
    %v1867 = vshll.u32 %v1647, 16
    %v1869 = vrot.slane %v1867, 5
    %v1870 = vor.u32 %v1866, %v1869
    %v1871 = vrot.slane %v1870, 4
    %v1873 = vshll.u32 %v1648, 16
    %v1875 = vrot.slane %v1873, 5
    %v1876 = vsel %vm986, %v1871, %v1875
    %v1878 = vshrl.u32 %v1649, 16
    %v1880 = vrot.slane %v1878, 4
    %v1881 = vshll.u32 %v1649, 16
    %v1883 = vrot.slane %v1881, 5
    %v1884 = vor.u32 %v1880, %v1883
    %v1885 = vrot.slane %v1884, 4
    %v1887 = vshll.u32 %v1650, 16
    %v1889 = vrot.slane %v1887, 5
    %v1890 = vsel %vm986, %v1885, %v1889
    %v1892 = vshrl.u32 %v1651, 16
    %v1894 = vrot.slane %v1892, 4
    %v1895 = vshll.u32 %v1651, 16
    %v1897 = vrot.slane %v1895, 5
    %v1898 = vor.u32 %v1894, %v1897
    %v1899 = vrot.slane %v1898, 4
    %v1901 = vshll.u32 %v1652, 16
    %v1903 = vrot.slane %v1901, 5
    %v1904 = vsel %vm986, %v1899, %v1903
    %s1905 = scalar_lea.vmem [#allocation10], 24
    %v1906 = vld [vmem:[%s1905] sm:$0xf]
    %v1907 = vld [vmem:[%s1905 + $0x4] sm:$0xf]
    %v1908 = vunpack.c.l.b16 %v1666
    %v1909 = vunpack.c.l.b16 %v1680
    %v1910 = vunpack.c.l.b16 %v1694
    %v1911 = vunpack.c.l.b16 %v1708
    %v1912 = vunpack.c.l.b16 %v1722
    %v1913 = vunpack.c.l.b16 %v1736
    %v1914 = vunpack.c.l.b16 %v1750
    %v1915 = vunpack.c.l.b16 %v1764
    %v1916 = vunpack.c.l.b16 %v1778
    %v1917 = vunpack.c.l.b16 %v1792
    %v1918 = vunpack.c.l.b16 %v1806
    %v1919 = vunpack.c.l.b16 %v1820
    %v1920 = vunpack.c.l.b16 %v1834
    %v1921 = vunpack.c.l.b16 %v1848
    %v1922 = vunpack.c.l.b16 %v1862
    %v1923 = vunpack.c.l.b16 %v1876
    %v1924 = vunpack.c.l.b16 %v1890
    %v1925 = vunpack.c.l.b16 %v1904
    %v1926 = vpack.c.b16 %v1909, %v1908
    %v1927 = vpack.c.b16 %v1911, %v1910
    %v1928 = vpack.c.b16 %v1913, %v1912
    %v1929 = vpack.c.b16 %v1915, %v1914
    %v1930 = vpack.c.b16 %v1917, %v1916
    %v1931 = vpack.c.b16 %v1919, %v1918
    %v1932 = vpack.c.b16 %v1921, %v1920
    %v1933 = vpack.c.b16 %v1923, %v1922
    %v1934 = vpack.c.b16 %v1925, %v1924
    %v1937 = vunpack.c.l.b16 %v1906
    %v1938 = vunpack.c.l.b16 %v1907
    %v1939 = vpack.c.b16 %v1938, %v1937
    %v1942 = vsel %vm848, %v1926, 0
    %v1945 = vsel %vm848, %v1927, 0
    %v1948 = vsel %vm848, %v1928, 0
    %v1951 = vsel %vm848, %v1929, 0
    %v1954 = vsel %vm848, %v1930, 0
    %v1957 = vsel %vm848, %v1931, 0
    %v1960 = vsel %vm848, %v1932, 0
    %v1963 = vsel %vm848, %v1933, 0
    %v1966 = vsel %vm848, %v1934, 0
    %1968 = vmatpush.bf16.msra.mxu0 0
    %1969 = vmatpush.bf16.msra.mxu0 0
    %1970 = vmatpush.bf16.msra.mxu0 0
    %1971 = vmatpush.bf16.msra.mxu0 0
    %1972 = vmatpush.bf16.msra.mxu0 0
    %1973 = vmatpush.bf16.msra.mxu0 0
    %1974 = vmatpush.bf16.msra.mxu0 0
    %1975 = vmatpush.bf16.msra.mxu0 %v1939
    %1976 = vmatmul.bf16.gmra.mxu0 %v1942
    %v1977 = vpop.f32.mrf.mxu0
    %v1978 = vadd.f32 0.0, %v1977
    %v1979 = vpop.f32.mrf.mxu0
    %v1980 = vadd.f32 0.0, %v1979
    %1981 = vmatmul.bf16.gmra.mxu0 %v1945
    %v1982 = vpop.f32.mrf.mxu0
    %v1983 = vadd.f32 0.0, %v1982
    %v1984 = vpop.f32.mrf.mxu0
    %v1985 = vadd.f32 0.0, %v1984
    %1986 = vmatmul.bf16.gmra.mxu0 %v1948
    %v1987 = vpop.f32.mrf.mxu0
    %v1988 = vadd.f32 0.0, %v1987
    %v1989 = vpop.f32.mrf.mxu0
    %v1990 = vadd.f32 0.0, %v1989
    %1991 = vmatmul.bf16.gmra.mxu0 %v1951
    %v1992 = vpop.f32.mrf.mxu0
    %v1993 = vadd.f32 0.0, %v1992
    %v1994 = vpop.f32.mrf.mxu0
    %v1995 = vadd.f32 0.0, %v1994
    %1996 = vmatmul.bf16.gmra.mxu0 %v1954
    %v1997 = vpop.f32.mrf.mxu0
    %v1998 = vadd.f32 0.0, %v1997
    %v1999 = vpop.f32.mrf.mxu0
    %v2000 = vadd.f32 0.0, %v1999
    %2001 = vmatmul.bf16.gmra.mxu0 %v1957
    %v2002 = vpop.f32.mrf.mxu0
    %v2003 = vadd.f32 0.0, %v2002
    %v2004 = vpop.f32.mrf.mxu0
    %v2005 = vadd.f32 0.0, %v2004
    %2006 = vmatmul.bf16.gmra.mxu0 %v1960
    %v2007 = vpop.f32.mrf.mxu0
    %v2008 = vadd.f32 0.0, %v2007
    %v2009 = vpop.f32.mrf.mxu0
    %v2010 = vadd.f32 0.0, %v2009
    %2011 = vmatmul.bf16.gmra.mxu0 %v1963
    %v2012 = vpop.f32.mrf.mxu0
    %v2013 = vadd.f32 0.0, %v2012
    %v2014 = vpop.f32.mrf.mxu0
    %v2015 = vadd.f32 0.0, %v2014
    %2016 = vmatmul.bf16.gmra.mxu0 %v1966
    %v2017 = vpop.f32.mrf.mxu0
    %v2018 = vadd.f32 0.0, %v2017
    %v2019 = vpop.f32.mrf.mxu0
    %v2020 = vadd.f32 0.0, %v2019
    %2021 = vdwg.mxu0
    %v2022 = vld [vmem:[#allocation4] sm:$0xff]
    %v2023 = vld [vmem:[#allocation4 + $0x8] sm:$0xff]
    %v2024 = vld [vmem:[#allocation4 + $0x10] sm:$0xff]
    %v2025 = vld [vmem:[#allocation4 + $0x18] sm:$0xff]
    %v2026 = vld [vmem:[#allocation4 + $0x20] sm:$0xff]
    %v2027 = vld [vmem:[#allocation4 + $0x28] sm:$0xff]
    %v2028 = vld [vmem:[#allocation4 + $0x30] sm:$0xff]
    %v2029 = vld [vmem:[#allocation4 + $0x38] sm:$0xff]
    %v2030 = vld [vmem:[#allocation4 + $0x40] sm:$0xff]
    %v2031 = vld [vmem:[#allocation4 + $0x48] sm:$0xff]
    %v2032 = vld [vmem:[#allocation4 + $0x50] sm:$0xff]
    %v2033 = vld [vmem:[#allocation4 + $0x58] sm:$0xff]
    %v2034 = vld [vmem:[#allocation4 + $0x60] sm:$0xff]
    %v2035 = vld [vmem:[#allocation4 + $0x68] sm:$0xff]
    %v2036 = vld [vmem:[#allocation4 + $0x70] sm:$0xff]
    %v2037 = vld [vmem:[#allocation4 + $0x78] sm:$0xff]
    %v2038 = vld [vmem:[#allocation4 + $0x80] sm:$0xff]
    %v2039 = vld [vmem:[#allocation4 + $0x88] sm:$0xff]
    %v2040 = vadd.f32 %v2022, %v1978
    %v2041 = vadd.f32 %v2023, %v1980
    %v2042 = vadd.f32 %v2024, %v1983
    %v2043 = vadd.f32 %v2025, %v1985
    %v2044 = vadd.f32 %v2026, %v1988
    %v2045 = vadd.f32 %v2027, %v1990
    %v2046 = vadd.f32 %v2028, %v1993
    %v2047 = vadd.f32 %v2029, %v1995
    %v2048 = vadd.f32 %v2030, %v1998
    %v2049 = vadd.f32 %v2031, %v2000
    %v2050 = vadd.f32 %v2032, %v2003
    %v2051 = vadd.f32 %v2033, %v2005
    %v2052 = vadd.f32 %v2034, %v2008
    %v2053 = vadd.f32 %v2035, %v2010
    %v2054 = vadd.f32 %v2036, %v2013
    %v2055 = vadd.f32 %v2037, %v2015
    %v2056 = vadd.f32 %v2038, %v2018
    %v2057 = vadd.f32 %v2039, %v2020
    %2058 = vst [vmem:[#allocation4] sm:$0xff] %v2040
    %2059 = vst [vmem:[#allocation4 + $0x8] sm:$0xff] %v2041
    %2060 = vst [vmem:[#allocation4 + $0x10] sm:$0xff] %v2042
    %2061 = vst [vmem:[#allocation4 + $0x18] sm:$0xff] %v2043
    %2062 = vst [vmem:[#allocation4 + $0x20] sm:$0xff] %v2044
    %2063 = vst [vmem:[#allocation4 + $0x28] sm:$0xff] %v2045
    %2064 = vst [vmem:[#allocation4 + $0x30] sm:$0xff] %v2046
    %2065 = vst [vmem:[#allocation4 + $0x38] sm:$0xff] %v2047
    %2066 = vst [vmem:[#allocation4 + $0x40] sm:$0xff] %v2048
    %2067 = vst [vmem:[#allocation4 + $0x48] sm:$0xff] %v2049
    %2068 = vst [vmem:[#allocation4 + $0x50] sm:$0xff] %v2050
    %2069 = vst [vmem:[#allocation4 + $0x58] sm:$0xff] %v2051
    %2070 = vst [vmem:[#allocation4 + $0x60] sm:$0xff] %v2052
    %2071 = vst [vmem:[#allocation4 + $0x68] sm:$0xff] %v2053
    %2072 = vst [vmem:[#allocation4 + $0x70] sm:$0xff] %v2054
    %2073 = vst [vmem:[#allocation4 + $0x78] sm:$0xff] %v2055
    %2074 = vst [vmem:[#allocation4 + $0x80] sm:$0xff] %v2056
    %2075 = vst [vmem:[#allocation4 + $0x88] sm:$0xff] %v2057
    %v2076 = vld [vmem:[#allocation4] sm:$0xff]
    %v2077 = vld [vmem:[#allocation4 + $0x8] sm:$0xff]
    %v2078 = vld [vmem:[#allocation4 + $0x10] sm:$0xff]
    %v2079 = vld [vmem:[#allocation4 + $0x18] sm:$0xff]
    %v2080 = vld [vmem:[#allocation4 + $0x20] sm:$0xff]
    %v2081 = vld [vmem:[#allocation4 + $0x28] sm:$0xff]
    %v2082 = vld [vmem:[#allocation4 + $0x30] sm:$0xff]
    %v2083 = vld [vmem:[#allocation4 + $0x38] sm:$0xff]
    %v2084 = vld [vmem:[#allocation4 + $0x50] sm:$0xff]
    %v2085 = vld [vmem:[#allocation4 + $0x58] sm:$0xff]
    %v2086 = vld [vmem:[#allocation4 + $0x60] sm:$0xff]
    %v2087 = vld [vmem:[#allocation4 + $0x68] sm:$0xff]
    %v2088 = vld [vmem:[#allocation4 + $0x70] sm:$0xff]
    %v2089 = vld [vmem:[#allocation4 + $0x78] sm:$0xff]
    %v2090 = vld [vmem:[#allocation4 + $0x80] sm:$0xff]
    %v2091 = vld [vmem:[#allocation4 + $0x88] sm:$0xff]
    %v2092 = vld [vmem:[%s3] sm:$0x1]
    %v2094 = vperm.slane %v2092, 0
    %v2096 = vmul.f32 %v2076, %v2094
    %v2097 = vmul.f32 %v2077, %v2094
    %v2098 = vmul.f32 %v2078, %v2094
    %v2099 = vmul.f32 %v2079, %v2094
    %v2100 = vmul.f32 %v2080, %v2094
    %v2101 = vmul.f32 %v2081, %v2094
    %v2102 = vmul.f32 %v2082, %v2094
    %v2103 = vmul.f32 %v2083, %v2094
    %v2104 = vmul.f32 %v2084, %v2094
    %v2105 = vmul.f32 %v2085, %v2094
    %v2106 = vmul.f32 %v2086, %v2094
    %v2107 = vmul.f32 %v2087, %v2094
    %v2108 = vmul.f32 %v2088, %v2094
    %v2109 = vmul.f32 %v2089, %v2094
    %v2110 = vmul.f32 %v2090, %v2094
    %v2111 = vmul.f32 %v2091, %v2094
    %v2112 = vld [vmem:[%s4] sm:$0x1]
    %v2114 = vperm.slane %v2112, 0
    %v2116 = vadd.f32 %v2096, %v2114
    %v2117 = vadd.f32 %v2097, %v2114
    %v2118 = vadd.f32 %v2098, %v2114
    %v2119 = vadd.f32 %v2099, %v2114
    %v2120 = vadd.f32 %v2100, %v2114
    %v2121 = vadd.f32 %v2101, %v2114
    %v2122 = vadd.f32 %v2102, %v2114
    %v2123 = vadd.f32 %v2103, %v2114
    %v2124 = vadd.f32 %v2104, %v2114
    %v2125 = vadd.f32 %v2105, %v2114
    %v2126 = vadd.f32 %v2106, %v2114
    %v2127 = vadd.f32 %v2107, %v2114
    %v2128 = vadd.f32 %v2108, %v2114
    %v2129 = vadd.f32 %v2109, %v2114
    %v2130 = vadd.f32 %v2110, %v2114
    %v2131 = vadd.f32 %v2111, %v2114
    %vm2132 = vcmp.gt.f32.partialorder %v2116, 0.0
    %vm2133 = vcmp.gt.f32.partialorder %v2117, 0.0
    %vm2134 = vcmp.gt.f32.partialorder %v2118, 0.0
    %vm2135 = vcmp.gt.f32.partialorder %v2119, 0.0
    %vm2136 = vcmp.gt.f32.partialorder %v2120, 0.0
    %vm2137 = vcmp.gt.f32.partialorder %v2121, 0.0
    %vm2138 = vcmp.gt.f32.partialorder %v2122, 0.0
    %vm2139 = vcmp.gt.f32.partialorder %v2123, 0.0
    %vm2140 = vcmp.gt.f32.partialorder %v2124, 0.0
    %vm2141 = vcmp.gt.f32.partialorder %v2125, 0.0
    %vm2142 = vcmp.gt.f32.partialorder %v2126, 0.0
    %vm2143 = vcmp.gt.f32.partialorder %v2127, 0.0
    %vm2144 = vcmp.gt.f32.partialorder %v2128, 0.0
    %vm2145 = vcmp.gt.f32.partialorder %v2129, 0.0
    %vm2146 = vcmp.gt.f32.partialorder %v2130, 0.0
    %vm2147 = vcmp.gt.f32.partialorder %v2131, 0.0
    %v2148 = vmul.f32 %v2116, 0.1
    %v2149 = vmul.f32 %v2117, 0.1
    %v2150 = vmul.f32 %v2118, 0.1
    %v2151 = vmul.f32 %v2119, 0.1
    %v2152 = vmul.f32 %v2120, 0.1
    %v2153 = vmul.f32 %v2121, 0.1
    %v2154 = vmul.f32 %v2122, 0.1
    %v2155 = vmul.f32 %v2123, 0.1
    %v2156 = vmul.f32 %v2124, 0.1
    %v2157 = vmul.f32 %v2125, 0.1
    %v2158 = vmul.f32 %v2126, 0.1
    %v2159 = vmul.f32 %v2127, 0.1
    %v2160 = vmul.f32 %v2128, 0.1
    %v2161 = vmul.f32 %v2129, 0.1
    %v2162 = vmul.f32 %v2130, 0.1
    %v2163 = vmul.f32 %v2131, 0.1
    %v2164 = vsel %vm2132, %v2116, %v2148
    %v2165 = vsel %vm2133, %v2117, %v2149
    %v2166 = vsel %vm2134, %v2118, %v2150
    %v2167 = vsel %vm2135, %v2119, %v2151
    %v2168 = vsel %vm2136, %v2120, %v2152
    %v2169 = vsel %vm2137, %v2121, %v2153
    %v2170 = vsel %vm2138, %v2122, %v2154
    %v2171 = vsel %vm2139, %v2123, %v2155
    %v2172 = vsel %vm2140, %v2124, %v2156
    %v2173 = vsel %vm2141, %v2125, %v2157
    %v2174 = vsel %vm2142, %v2126, %v2158
    %v2175 = vsel %vm2143, %v2127, %v2159
    %v2176 = vsel %vm2144, %v2128, %v2160
    %v2177 = vsel %vm2145, %v2129, %v2161
    %v2178 = vsel %vm2146, %v2130, %v2162
    %v2179 = vsel %vm2147, %v2131, %v2163
    %v2180 = vpack.c.bf16 %v2164, %v2164
    %v2181 = vpack.c.bf16 %v2165, %v2165
    %v2182 = vpack.c.bf16 %v2166, %v2166
    %v2183 = vpack.c.bf16 %v2167, %v2167
    %v2184 = vpack.c.bf16 %v2168, %v2168
    %v2185 = vpack.c.bf16 %v2169, %v2169
    %v2186 = vpack.c.bf16 %v2170, %v2170
    %v2187 = vpack.c.bf16 %v2171, %v2171
    %v2188 = vpack.c.bf16 %v2172, %v2172
    %v2189 = vpack.c.bf16 %v2173, %v2173
    %v2190 = vpack.c.bf16 %v2174, %v2174
    %v2191 = vpack.c.bf16 %v2175, %v2175
    %v2192 = vpack.c.bf16 %v2176, %v2176
    %v2193 = vpack.c.bf16 %v2177, %v2177
    %v2194 = vpack.c.bf16 %v2178, %v2178
    %v2195 = vpack.c.bf16 %v2179, %v2179
    %v2197 = vshrl.u32 %v2180, 16
    %v2199 = vrot.slane %v2197, 7
    %v2200 = vshll.u32 %v2180, 16
    %v2202 = vor.u32 %v2199, %v2200
    %v2204 = vshrl.u32 %v2181, 16
    %v2206 = vrot.slane %v2204, 7
    %v2207 = vshll.u32 %v2181, 16
    %v2209 = vor.u32 %v2206, %v2207
    %v2211 = vshrl.u32 %v2182, 16
    %v2213 = vrot.slane %v2211, 7
    %v2214 = vshll.u32 %v2182, 16
    %v2216 = vor.u32 %v2213, %v2214
    %v2218 = vshrl.u32 %v2183, 16
    %v2220 = vrot.slane %v2218, 7
    %v2221 = vshll.u32 %v2183, 16
    %v2223 = vor.u32 %v2220, %v2221
    %v2225 = vshrl.u32 %v2184, 16
    %v2227 = vrot.slane %v2225, 7
    %v2228 = vshll.u32 %v2184, 16
    %v2230 = vor.u32 %v2227, %v2228
    %v2232 = vshrl.u32 %v2185, 16
    %v2234 = vrot.slane %v2232, 7
    %v2235 = vshll.u32 %v2185, 16
    %v2237 = vor.u32 %v2234, %v2235
    %v2239 = vshrl.u32 %v2186, 16
    %v2241 = vrot.slane %v2239, 7
    %v2242 = vshll.u32 %v2186, 16
    %v2244 = vor.u32 %v2241, %v2242
    %v2246 = vshrl.u32 %v2187, 16
    %v2248 = vrot.slane %v2246, 7
    %v2249 = vshll.u32 %v2187, 16
    %v2251 = vor.u32 %v2248, %v2249
    %s2260 = scalar_lea.vmem [#allocation3], 12
    %vm2261 = vcmask 1043456
    %vm2262 = vmand %vm2261, %vm306
    %v2263 = vld [vmem:[%s2260] sm:$0xf]
    %v2264 = vsel %vm2262, %v2202, %v2263
    %2265 = vst [vmem:[%s2260] sm:$0xf] %v2264
    %v2266 = vld [vmem:[%s2260 + $0xc] sm:$0xf]
    %v2267 = vsel %vm2262, %v2209, %v2266
    %2268 = vst [vmem:[%s2260 + $0xc] sm:$0xf] %v2267
    %v2269 = vld [vmem:[%s2260 + $0x18] sm:$0xf]
    %v2270 = vsel %vm2262, %v2216, %v2269
    %2271 = vst [vmem:[%s2260 + $0x18] sm:$0xf] %v2270
    %v2272 = vld [vmem:[%s2260 + $0x24] sm:$0xf]
    %v2273 = vsel %vm2262, %v2223, %v2272
    %2274 = vst [vmem:[%s2260 + $0x24] sm:$0xf] %v2273
    %v2275 = vld [vmem:[%s2260 + $0x30] sm:$0xf]
    %v2276 = vsel %vm2262, %v2230, %v2275
    %2277 = vst [vmem:[%s2260 + $0x30] sm:$0xf] %v2276
    %v2278 = vld [vmem:[%s2260 + $0x3c] sm:$0xf]
    %v2279 = vsel %vm2262, %v2237, %v2278
    %2280 = vst [vmem:[%s2260 + $0x3c] sm:$0xf] %v2279
    %v2281 = vld [vmem:[%s2260 + $0x48] sm:$0xf]
    %v2282 = vsel %vm2262, %v2244, %v2281
    %2283 = vst [vmem:[%s2260 + $0x48] sm:$0xf] %v2282
    %v2284 = vld [vmem:[%s2260 + $0x54] sm:$0xf]
    %v2285 = vsel %vm2262, %v2251, %v2284
    %2286 = vst [vmem:[%s2260 + $0x54] sm:$0xf] %v2285
    %2287 = vst [vmem:[%s2260 + $0x4] sm:$0xf] %v2180
    %2288 = vst [vmem:[%s2260 + $0x10] sm:$0xf] %v2181
    %2289 = vst [vmem:[%s2260 + $0x1c] sm:$0xf] %v2182
    %2290 = vst [vmem:[%s2260 + $0x28] sm:$0xf] %v2183
    %2291 = vst [vmem:[%s2260 + $0x34] sm:$0xf] %v2184
    %2292 = vst [vmem:[%s2260 + $0x40] sm:$0xf] %v2185
    %2293 = vst [vmem:[%s2260 + $0x4c] sm:$0xf] %v2186
    %2294 = vst [vmem:[%s2260 + $0x58] sm:$0xf] %v2187
    %v2295 = vrot.slane %v2197, 4
    %v2296 = vrot.slane %v2200, 5
    %v2297 = vor.u32 %v2295, %v2296
    %v2298 = vrot.slane %v2297, 4
    %v2299 = vrot.slane %v2204, 4
    %v2300 = vrot.slane %v2207, 5
    %v2301 = vor.u32 %v2299, %v2300
    %v2302 = vrot.slane %v2301, 4
    %v2303 = vrot.slane %v2211, 4
    %v2304 = vrot.slane %v2214, 5
    %v2305 = vor.u32 %v2303, %v2304
    %v2306 = vrot.slane %v2305, 4
    %v2307 = vrot.slane %v2218, 4
    %v2308 = vrot.slane %v2221, 5
    %v2309 = vor.u32 %v2307, %v2308
    %v2310 = vrot.slane %v2309, 4
    %v2311 = vrot.slane %v2225, 4
    %v2312 = vrot.slane %v2228, 5
    %v2313 = vor.u32 %v2311, %v2312
    %v2314 = vrot.slane %v2313, 4
    %v2315 = vrot.slane %v2232, 4
    %v2316 = vrot.slane %v2235, 5
    %v2317 = vor.u32 %v2315, %v2316
    %v2318 = vrot.slane %v2317, 4
    %v2319 = vrot.slane %v2239, 4
    %v2320 = vrot.slane %v2242, 5
    %v2321 = vor.u32 %v2319, %v2320
    %v2322 = vrot.slane %v2321, 4
    %v2323 = vrot.slane %v2246, 4
    %v2324 = vrot.slane %v2249, 5
    %v2325 = vor.u32 %v2323, %v2324
    %v2326 = vrot.slane %v2325, 4
    %vm2335 = vmand %vm2261, %vm984
    %v2336 = vld [vmem:[%s2260 + $0x8] sm:$0xf]
    %v2337 = vsel %vm2335, %v2298, %v2336
    %2338 = vst [vmem:[%s2260 + $0x8] sm:$0xf] %v2337
    %v2339 = vld [vmem:[%s2260 + $0x14] sm:$0xf]
    %v2340 = vsel %vm2335, %v2302, %v2339
    %2341 = vst [vmem:[%s2260 + $0x14] sm:$0xf] %v2340
    %v2342 = vld [vmem:[%s2260 + $0x20] sm:$0xf]
    %v2343 = vsel %vm2335, %v2306, %v2342
    %2344 = vst [vmem:[%s2260 + $0x20] sm:$0xf] %v2343
    %v2345 = vld [vmem:[%s2260 + $0x2c] sm:$0xf]
    %v2346 = vsel %vm2335, %v2310, %v2345
    %2347 = vst [vmem:[%s2260 + $0x2c] sm:$0xf] %v2346
    %v2348 = vld [vmem:[%s2260 + $0x38] sm:$0xf]
    %v2349 = vsel %vm2335, %v2314, %v2348
    %2350 = vst [vmem:[%s2260 + $0x38] sm:$0xf] %v2349
    %v2351 = vld [vmem:[%s2260 + $0x44] sm:$0xf]
    %v2352 = vsel %vm2335, %v2318, %v2351
    %2353 = vst [vmem:[%s2260 + $0x44] sm:$0xf] %v2352
    %v2354 = vld [vmem:[%s2260 + $0x50] sm:$0xf]
    %v2355 = vsel %vm2335, %v2322, %v2354
    %2356 = vst [vmem:[%s2260 + $0x50] sm:$0xf] %v2355
    %v2357 = vld [vmem:[%s2260 + $0x5c] sm:$0xf]
    %v2358 = vsel %vm2335, %v2326, %v2357
    %2359 = vst [vmem:[%s2260 + $0x5c] sm:$0xf] %v2358
    %v2361 = vshrl.u32 %v2188, 16
    %v2363 = vrot.slane %v2361, 7
    %v2364 = vshll.u32 %v2188, 16
    %v2366 = vor.u32 %v2363, %v2364
    %v2368 = vshrl.u32 %v2189, 16
    %v2370 = vrot.slane %v2368, 7
    %v2371 = vshll.u32 %v2189, 16
    %v2373 = vor.u32 %v2370, %v2371
    %v2375 = vshrl.u32 %v2190, 16
    %v2377 = vrot.slane %v2375, 7
    %v2378 = vshll.u32 %v2190, 16
    %v2380 = vor.u32 %v2377, %v2378
    %v2382 = vshrl.u32 %v2191, 16
    %v2384 = vrot.slane %v2382, 7
    %v2385 = vshll.u32 %v2191, 16
    %v2387 = vor.u32 %v2384, %v2385
    %v2389 = vshrl.u32 %v2192, 16
    %v2391 = vrot.slane %v2389, 7
    %v2392 = vshll.u32 %v2192, 16
    %v2394 = vor.u32 %v2391, %v2392
    %v2396 = vshrl.u32 %v2193, 16
    %v2398 = vrot.slane %v2396, 7
    %v2399 = vshll.u32 %v2193, 16
    %v2401 = vor.u32 %v2398, %v2399
    %v2403 = vshrl.u32 %v2194, 16
    %v2405 = vrot.slane %v2403, 7
    %v2406 = vshll.u32 %v2194, 16
    %v2408 = vor.u32 %v2405, %v2406
    %v2410 = vshrl.u32 %v2195, 16
    %v2412 = vrot.slane %v2410, 7
    %v2413 = vshll.u32 %v2195, 16
    %v2415 = vor.u32 %v2412, %v2413
    %s2424 = scalar_lea.vmem [#allocation3], 132
    %v2425 = vld [vmem:[%s2424] sm:$0xf]
    %v2426 = vsel %vm2262, %v2366, %v2425
    %2427 = vst [vmem:[%s2424] sm:$0xf] %v2426
    %v2428 = vld [vmem:[%s2424 + $0xc] sm:$0xf]
    %v2429 = vsel %vm2262, %v2373, %v2428
    %2430 = vst [vmem:[%s2424 + $0xc] sm:$0xf] %v2429
    %v2431 = vld [vmem:[%s2424 + $0x18] sm:$0xf]
    %v2432 = vsel %vm2262, %v2380, %v2431
    %2433 = vst [vmem:[%s2424 + $0x18] sm:$0xf] %v2432
    %v2434 = vld [vmem:[%s2424 + $0x24] sm:$0xf]
    %v2435 = vsel %vm2262, %v2387, %v2434
    %2436 = vst [vmem:[%s2424 + $0x24] sm:$0xf] %v2435
    %v2437 = vld [vmem:[%s2424 + $0x30] sm:$0xf]
    %v2438 = vsel %vm2262, %v2394, %v2437
    %2439 = vst [vmem:[%s2424 + $0x30] sm:$0xf] %v2438
    %v2440 = vld [vmem:[%s2424 + $0x3c] sm:$0xf]
    %v2441 = vsel %vm2262, %v2401, %v2440
    %2442 = vst [vmem:[%s2424 + $0x3c] sm:$0xf] %v2441
    %v2443 = vld [vmem:[%s2424 + $0x48] sm:$0xf]
    %v2444 = vsel %vm2262, %v2408, %v2443
    %2445 = vst [vmem:[%s2424 + $0x48] sm:$0xf] %v2444
    %v2446 = vld [vmem:[%s2424 + $0x54] sm:$0xf]
    %v2447 = vsel %vm2262, %v2415, %v2446
    %2448 = vst [vmem:[%s2424 + $0x54] sm:$0xf] %v2447
    %2449 = vst [vmem:[%s2424 + $0x4] sm:$0xf] %v2188
    %2450 = vst [vmem:[%s2424 + $0x10] sm:$0xf] %v2189
    %2451 = vst [vmem:[%s2424 + $0x1c] sm:$0xf] %v2190
    %2452 = vst [vmem:[%s2424 + $0x28] sm:$0xf] %v2191
    %2453 = vst [vmem:[%s2424 + $0x34] sm:$0xf] %v2192
    %2454 = vst [vmem:[%s2424 + $0x40] sm:$0xf] %v2193
    %2455 = vst [vmem:[%s2424 + $0x4c] sm:$0xf] %v2194
    %2456 = vst [vmem:[%s2424 + $0x58] sm:$0xf] %v2195
    %v2457 = vrot.slane %v2361, 4
    %v2458 = vrot.slane %v2364, 5
    %v2459 = vor.u32 %v2457, %v2458
    %v2460 = vrot.slane %v2459, 4
    %v2461 = vrot.slane %v2368, 4
    %v2462 = vrot.slane %v2371, 5
    %v2463 = vor.u32 %v2461, %v2462
    %v2464 = vrot.slane %v2463, 4
    %v2465 = vrot.slane %v2375, 4
    %v2466 = vrot.slane %v2378, 5
    %v2467 = vor.u32 %v2465, %v2466
    %v2468 = vrot.slane %v2467, 4
    %v2469 = vrot.slane %v2382, 4
    %v2470 = vrot.slane %v2385, 5
    %v2471 = vor.u32 %v2469, %v2470
    %v2472 = vrot.slane %v2471, 4
    %v2473 = vrot.slane %v2389, 4
    %v2474 = vrot.slane %v2392, 5
    %v2475 = vor.u32 %v2473, %v2474
    %v2476 = vrot.slane %v2475, 4
    %v2477 = vrot.slane %v2396, 4
    %v2478 = vrot.slane %v2399, 5
    %v2479 = vor.u32 %v2477, %v2478
    %v2480 = vrot.slane %v2479, 4
    %v2481 = vrot.slane %v2403, 4
    %v2482 = vrot.slane %v2406, 5
    %v2483 = vor.u32 %v2481, %v2482
    %v2484 = vrot.slane %v2483, 4
    %v2485 = vrot.slane %v2410, 4
    %v2486 = vrot.slane %v2413, 5
    %v2487 = vor.u32 %v2485, %v2486
    %v2488 = vrot.slane %v2487, 4
    %v2497 = vld [vmem:[%s2424 + $0x8] sm:$0xf]
    %v2498 = vsel %vm2335, %v2460, %v2497
    %2499 = vst [vmem:[%s2424 + $0x8] sm:$0xf] %v2498
    %v2500 = vld [vmem:[%s2424 + $0x14] sm:$0xf]
    %v2501 = vsel %vm2335, %v2464, %v2500
    %2502 = vst [vmem:[%s2424 + $0x14] sm:$0xf] %v2501
    %v2503 = vld [vmem:[%s2424 + $0x20] sm:$0xf]
    %v2504 = vsel %vm2335, %v2468, %v2503
    %2505 = vst [vmem:[%s2424 + $0x20] sm:$0xf] %v2504
    %v2506 = vld [vmem:[%s2424 + $0x2c] sm:$0xf]
    %v2507 = vsel %vm2335, %v2472, %v2506
    %2508 = vst [vmem:[%s2424 + $0x2c] sm:$0xf] %v2507
    %v2509 = vld [vmem:[%s2424 + $0x38] sm:$0xf]
    %v2510 = vsel %vm2335, %v2476, %v2509
    %2511 = vst [vmem:[%s2424 + $0x38] sm:$0xf] %v2510
    %v2512 = vld [vmem:[%s2424 + $0x44] sm:$0xf]
    %v2513 = vsel %vm2335, %v2480, %v2512
    %2514 = vst [vmem:[%s2424 + $0x44] sm:$0xf] %v2513
    %v2515 = vld [vmem:[%s2424 + $0x50] sm:$0xf]
    %v2516 = vsel %vm2335, %v2484, %v2515
    %2517 = vst [vmem:[%s2424 + $0x50] sm:$0xf] %v2516
    %v2518 = vld [vmem:[%s2424 + $0x5c] sm:$0xf]
    %v2519 = vsel %vm2335, %v2488, %v2518
    %2520 = vst [vmem:[%s2424 + $0x5c] sm:$0xf] %v2519
    %v2521 = vld [vmem:[%s597] sm:$0xf]
    %v2522 = vld [vmem:[%s597 + $0x4] sm:$0x1]
    %v2523 = vld [vmem:[%s597 + $0x8] sm:$0xf]
    %v2524 = vld [vmem:[%s597 + $0xc] sm:$0x1]
    %v2525 = vld [vmem:[%s597 + $0x10] sm:$0xf]
    %v2526 = vld [vmem:[%s597 + $0x14] sm:$0x1]
    %v2527 = vld [vmem:[%s597 + $0x18] sm:$0xf]
    %v2528 = vld [vmem:[%s597 + $0x1c] sm:$0x1]
    %v2529 = vld [vmem:[%s597 + $0x20] sm:$0xf]
    %v2530 = vld [vmem:[%s597 + $0x24] sm:$0x1]
    %v2531 = vld [vmem:[%s597 + $0x28] sm:$0xf]
    %v2532 = vld [vmem:[%s597 + $0x2c] sm:$0x1]
    %v2533 = vld [vmem:[%s597 + $0x30] sm:$0xf]
    %v2534 = vld [vmem:[%s597 + $0x34] sm:$0x1]
    %v2535 = vld [vmem:[%s597 + $0x38] sm:$0xf]
    %v2536 = vld [vmem:[%s597 + $0x3c] sm:$0x1]
    %v2537 = vld [vmem:[%s597 + $0x40] sm:$0xf]
    %v2538 = vld [vmem:[%s597 + $0x44] sm:$0x1]
    %v2539 = vld [vmem:[%s597 + $0x48] sm:$0xf]
    %v2540 = vld [vmem:[%s597 + $0x4c] sm:$0x1]
    %v2541 = vld [vmem:[%s597 + $0x50] sm:$0xf]
    %v2542 = vld [vmem:[%s597 + $0x54] sm:$0x1]
    %v2543 = vld [vmem:[%s597 + $0x58] sm:$0xf]
    %v2544 = vld [vmem:[%s597 + $0x5c] sm:$0x1]
    %v2545 = vld [vmem:[%s597 + $0x60] sm:$0xf]
    %v2546 = vld [vmem:[%s597 + $0x64] sm:$0x1]
    %v2547 = vld [vmem:[%s597 + $0x68] sm:$0xf]
    %v2548 = vld [vmem:[%s597 + $0x6c] sm:$0x1]
    %v2549 = vld [vmem:[%s597 + $0x70] sm:$0xf]
    %v2550 = vld [vmem:[%s597 + $0x74] sm:$0x1]
    %v2551 = vld [vmem:[%s597 + $0x78] sm:$0xf]
    %v2552 = vld [vmem:[%s597 + $0x7c] sm:$0x1]
    %v2553 = vld [vmem:[%s597 + $0x80] sm:$0xf]
    %v2554 = vld [vmem:[%s597 + $0x84] sm:$0x1]
    %v2555 = vld [vmem:[%s597 + $0x88] sm:$0xf]
    %v2556 = vld [vmem:[%s597 + $0x8c] sm:$0x1]
    %v2558 = vshrl.u32 %v2521, 16
    %v2560 = vrot.slane %v2558, 4
    %v2561 = vshll.u32 %v2521, 16
    %v2563 = vrot.slane %v2561, 5
    %v2564 = vor.u32 %v2560, %v2563
    %v2565 = vrot.slane %v2564, 4
    %v2567 = vshll.u32 %v2522, 16
    %v2569 = vrot.slane %v2567, 5
    %v2570 = vsel %vm986, %v2565, %v2569
    %v2572 = vshrl.u32 %v2523, 16
    %v2574 = vrot.slane %v2572, 4
    %v2575 = vshll.u32 %v2523, 16
    %v2577 = vrot.slane %v2575, 5
    %v2578 = vor.u32 %v2574, %v2577
    %v2579 = vrot.slane %v2578, 4
    %v2581 = vshll.u32 %v2524, 16
    %v2583 = vrot.slane %v2581, 5
    %v2584 = vsel %vm986, %v2579, %v2583
    %v2586 = vshrl.u32 %v2525, 16
    %v2588 = vrot.slane %v2586, 4
    %v2589 = vshll.u32 %v2525, 16
    %v2591 = vrot.slane %v2589, 5
    %v2592 = vor.u32 %v2588, %v2591
    %v2593 = vrot.slane %v2592, 4
    %v2595 = vshll.u32 %v2526, 16
    %v2597 = vrot.slane %v2595, 5
    %v2598 = vsel %vm986, %v2593, %v2597
    %v2600 = vshrl.u32 %v2527, 16
    %v2602 = vrot.slane %v2600, 4
    %v2603 = vshll.u32 %v2527, 16
    %v2605 = vrot.slane %v2603, 5
    %v2606 = vor.u32 %v2602, %v2605
    %v2607 = vrot.slane %v2606, 4
    %v2609 = vshll.u32 %v2528, 16
    %v2611 = vrot.slane %v2609, 5
    %v2612 = vsel %vm986, %v2607, %v2611
    %v2614 = vshrl.u32 %v2529, 16
    %v2616 = vrot.slane %v2614, 4
    %v2617 = vshll.u32 %v2529, 16
    %v2619 = vrot.slane %v2617, 5
    %v2620 = vor.u32 %v2616, %v2619
    %v2621 = vrot.slane %v2620, 4
    %v2623 = vshll.u32 %v2530, 16
    %v2625 = vrot.slane %v2623, 5
    %v2626 = vsel %vm986, %v2621, %v2625
    %v2628 = vshrl.u32 %v2531, 16
    %v2630 = vrot.slane %v2628, 4
    %v2631 = vshll.u32 %v2531, 16
    %v2633 = vrot.slane %v2631, 5
    %v2634 = vor.u32 %v2630, %v2633
    %v2635 = vrot.slane %v2634, 4
    %v2637 = vshll.u32 %v2532, 16
    %v2639 = vrot.slane %v2637, 5
    %v2640 = vsel %vm986, %v2635, %v2639
    %v2642 = vshrl.u32 %v2533, 16
    %v2644 = vrot.slane %v2642, 4
    %v2645 = vshll.u32 %v2533, 16
    %v2647 = vrot.slane %v2645, 5
    %v2648 = vor.u32 %v2644, %v2647
    %v2649 = vrot.slane %v2648, 4
    %v2651 = vshll.u32 %v2534, 16
    %v2653 = vrot.slane %v2651, 5
    %v2654 = vsel %vm986, %v2649, %v2653
    %v2656 = vshrl.u32 %v2535, 16
    %v2658 = vrot.slane %v2656, 4
    %v2659 = vshll.u32 %v2535, 16
    %v2661 = vrot.slane %v2659, 5
    %v2662 = vor.u32 %v2658, %v2661
    %v2663 = vrot.slane %v2662, 4
    %v2665 = vshll.u32 %v2536, 16
    %v2667 = vrot.slane %v2665, 5
    %v2668 = vsel %vm986, %v2663, %v2667
    %v2670 = vshrl.u32 %v2537, 16
    %v2672 = vrot.slane %v2670, 4
    %v2673 = vshll.u32 %v2537, 16
    %v2675 = vrot.slane %v2673, 5
    %v2676 = vor.u32 %v2672, %v2675
    %v2677 = vrot.slane %v2676, 4
    %v2679 = vshll.u32 %v2538, 16
    %v2681 = vrot.slane %v2679, 5
    %v2682 = vsel %vm986, %v2677, %v2681
    %v2684 = vshrl.u32 %v2539, 16
    %v2686 = vrot.slane %v2684, 4
    %v2687 = vshll.u32 %v2539, 16
    %v2689 = vrot.slane %v2687, 5
    %v2690 = vor.u32 %v2686, %v2689
    %v2691 = vrot.slane %v2690, 4
    %v2693 = vshll.u32 %v2540, 16
    %v2695 = vrot.slane %v2693, 5
    %v2696 = vsel %vm986, %v2691, %v2695
    %v2698 = vshrl.u32 %v2541, 16
    %v2700 = vrot.slane %v2698, 4
    %v2701 = vshll.u32 %v2541, 16
    %v2703 = vrot.slane %v2701, 5
    %v2704 = vor.u32 %v2700, %v2703
    %v2705 = vrot.slane %v2704, 4
    %v2707 = vshll.u32 %v2542, 16
    %v2709 = vrot.slane %v2707, 5
    %v2710 = vsel %vm986, %v2705, %v2709
    %v2712 = vshrl.u32 %v2543, 16
    %v2714 = vrot.slane %v2712, 4
    %v2715 = vshll.u32 %v2543, 16
    %v2717 = vrot.slane %v2715, 5
    %v2718 = vor.u32 %v2714, %v2717
    %v2719 = vrot.slane %v2718, 4
    %v2721 = vshll.u32 %v2544, 16
    %v2723 = vrot.slane %v2721, 5
    %v2724 = vsel %vm986, %v2719, %v2723
    %v2726 = vshrl.u32 %v2545, 16
    %v2728 = vrot.slane %v2726, 4
    %v2729 = vshll.u32 %v2545, 16
    %v2731 = vrot.slane %v2729, 5
    %v2732 = vor.u32 %v2728, %v2731
    %v2733 = vrot.slane %v2732, 4
    %v2735 = vshll.u32 %v2546, 16
    %v2737 = vrot.slane %v2735, 5
    %v2738 = vsel %vm986, %v2733, %v2737
    %v2740 = vshrl.u32 %v2547, 16
    %v2742 = vrot.slane %v2740, 4
    %v2743 = vshll.u32 %v2547, 16
    %v2745 = vrot.slane %v2743, 5
    %v2746 = vor.u32 %v2742, %v2745
    %v2747 = vrot.slane %v2746, 4
    %v2749 = vshll.u32 %v2548, 16
    %v2751 = vrot.slane %v2749, 5
    %v2752 = vsel %vm986, %v2747, %v2751
    %v2754 = vshrl.u32 %v2549, 16
    %v2756 = vrot.slane %v2754, 4
    %v2757 = vshll.u32 %v2549, 16
    %v2759 = vrot.slane %v2757, 5
    %v2760 = vor.u32 %v2756, %v2759
    %v2761 = vrot.slane %v2760, 4
    %v2763 = vshll.u32 %v2550, 16
    %v2765 = vrot.slane %v2763, 5
    %v2766 = vsel %vm986, %v2761, %v2765
    %v2768 = vshrl.u32 %v2551, 16
    %v2770 = vrot.slane %v2768, 4
    %v2771 = vshll.u32 %v2551, 16
    %v2773 = vrot.slane %v2771, 5
    %v2774 = vor.u32 %v2770, %v2773
    %v2775 = vrot.slane %v2774, 4
    %v2777 = vshll.u32 %v2552, 16
    %v2779 = vrot.slane %v2777, 5
    %v2780 = vsel %vm986, %v2775, %v2779
    %v2782 = vshrl.u32 %v2553, 16
    %v2784 = vrot.slane %v2782, 4
    %v2785 = vshll.u32 %v2553, 16
    %v2787 = vrot.slane %v2785, 5
    %v2788 = vor.u32 %v2784, %v2787
    %v2789 = vrot.slane %v2788, 4
    %v2791 = vshll.u32 %v2554, 16
    %v2793 = vrot.slane %v2791, 5
    %v2794 = vsel %vm986, %v2789, %v2793
    %v2796 = vshrl.u32 %v2555, 16
    %v2798 = vrot.slane %v2796, 4
    %v2799 = vshll.u32 %v2555, 16
    %v2801 = vrot.slane %v2799, 5
    %v2802 = vor.u32 %v2798, %v2801
    %v2803 = vrot.slane %v2802, 4
    %v2805 = vshll.u32 %v2556, 16
    %v2807 = vrot.slane %v2805, 5
    %v2808 = vsel %vm986, %v2803, %v2807
    %v2809 = vld [vmem:[#allocation13] sm:$0xf]
    %v2810 = vld [vmem:[#allocation13 + $0x4] sm:$0xf]
    %v2811 = vunpack.c.l.b16 %v2570
    %v2812 = vunpack.c.l.b16 %v2584
    %v2813 = vunpack.c.l.b16 %v2598
    %v2814 = vunpack.c.l.b16 %v2612
    %v2815 = vunpack.c.l.b16 %v2626
    %v2816 = vunpack.c.l.b16 %v2640
    %v2817 = vunpack.c.l.b16 %v2654
    %v2818 = vunpack.c.l.b16 %v2668
    %v2819 = vunpack.c.l.b16 %v2682
    %v2820 = vunpack.c.l.b16 %v2696
    %v2821 = vunpack.c.l.b16 %v2710
    %v2822 = vunpack.c.l.b16 %v2724
    %v2823 = vunpack.c.l.b16 %v2738
    %v2824 = vunpack.c.l.b16 %v2752
    %v2825 = vunpack.c.l.b16 %v2766
    %v2826 = vunpack.c.l.b16 %v2780
    %v2827 = vunpack.c.l.b16 %v2794
    %v2828 = vunpack.c.l.b16 %v2808
    %v2829 = vpack.c.b16 %v2812, %v2811
    %v2830 = vpack.c.b16 %v2814, %v2813
    %v2831 = vpack.c.b16 %v2816, %v2815
    %v2832 = vpack.c.b16 %v2818, %v2817
    %v2833 = vpack.c.b16 %v2820, %v2819
    %v2834 = vpack.c.b16 %v2822, %v2821
    %v2835 = vpack.c.b16 %v2824, %v2823
    %v2836 = vpack.c.b16 %v2826, %v2825
    %v2837 = vpack.c.b16 %v2828, %v2827
    %v2840 = vunpack.c.l.b16 %v2809
    %v2841 = vunpack.c.l.b16 %v2810
    %v2842 = vpack.c.b16 %v2841, %v2840
    %v2845 = vsel %vm848, %v2829, 0
    %v2848 = vsel %vm848, %v2830, 0
    %v2851 = vsel %vm848, %v2831, 0
    %v2854 = vsel %vm848, %v2832, 0
    %v2857 = vsel %vm848, %v2833, 0
    %v2860 = vsel %vm848, %v2834, 0
    %v2863 = vsel %vm848, %v2835, 0
    %v2866 = vsel %vm848, %v2836, 0
    %v2869 = vsel %vm848, %v2837, 0
    %2871 = vmatpush.bf16.msra.mxu0 0
    %2872 = vmatpush.bf16.msra.mxu0 0
    %2873 = vmatpush.bf16.msra.mxu0 0
    %2874 = vmatpush.bf16.msra.mxu0 0
    %2875 = vmatpush.bf16.msra.mxu0 0
    %2876 = vmatpush.bf16.msra.mxu0 0
    %2877 = vmatpush.bf16.msra.mxu0 0
    %2878 = vmatpush.bf16.msra.mxu0 %v2842
    %2879 = vmatmul.bf16.gmra.mxu0 %v2845
    %v2880 = vpop.f32.mrf.mxu0
    %v2881 = vadd.f32 0.0, %v2880
    %v2882 = vpop.f32.mrf.mxu0
    %v2883 = vadd.f32 0.0, %v2882
    %2884 = vmatmul.bf16.gmra.mxu0 %v2848
    %v2885 = vpop.f32.mrf.mxu0
    %v2886 = vadd.f32 0.0, %v2885
    %v2887 = vpop.f32.mrf.mxu0
    %v2888 = vadd.f32 0.0, %v2887
    %2889 = vmatmul.bf16.gmra.mxu0 %v2851
    %v2890 = vpop.f32.mrf.mxu0
    %v2891 = vadd.f32 0.0, %v2890
    %v2892 = vpop.f32.mrf.mxu0
    %v2893 = vadd.f32 0.0, %v2892
    %2894 = vmatmul.bf16.gmra.mxu0 %v2854
    %v2895 = vpop.f32.mrf.mxu0
    %v2896 = vadd.f32 0.0, %v2895
    %v2897 = vpop.f32.mrf.mxu0
    %v2898 = vadd.f32 0.0, %v2897
    %2899 = vmatmul.bf16.gmra.mxu0 %v2857
    %v2900 = vpop.f32.mrf.mxu0
    %v2901 = vadd.f32 0.0, %v2900
    %v2902 = vpop.f32.mrf.mxu0
    %v2903 = vadd.f32 0.0, %v2902
    %2904 = vmatmul.bf16.gmra.mxu0 %v2860
    %v2905 = vpop.f32.mrf.mxu0
    %v2906 = vadd.f32 0.0, %v2905
    %v2907 = vpop.f32.mrf.mxu0
    %v2908 = vadd.f32 0.0, %v2907
    %2909 = vmatmul.bf16.gmra.mxu0 %v2863
    %v2910 = vpop.f32.mrf.mxu0
    %v2911 = vadd.f32 0.0, %v2910
    %v2912 = vpop.f32.mrf.mxu0
    %v2913 = vadd.f32 0.0, %v2912
    %2914 = vmatmul.bf16.gmra.mxu0 %v2866
    %v2915 = vpop.f32.mrf.mxu0
    %v2916 = vadd.f32 0.0, %v2915
    %v2917 = vpop.f32.mrf.mxu0
    %v2918 = vadd.f32 0.0, %v2917
    %2919 = vmatmul.bf16.gmra.mxu0 %v2869
    %v2920 = vpop.f32.mrf.mxu0
    %v2921 = vadd.f32 0.0, %v2920
    %v2922 = vpop.f32.mrf.mxu0
    %v2923 = vadd.f32 0.0, %v2922
    %2924 = vdwg.mxu0
    %2925 = vst [vmem:[#allocation4] sm:$0xff] %v2881
    %2926 = vst [vmem:[#allocation4 + $0x8] sm:$0xff] %v2883
    %2927 = vst [vmem:[#allocation4 + $0x10] sm:$0xff] %v2886
    %2928 = vst [vmem:[#allocation4 + $0x18] sm:$0xff] %v2888
    %2929 = vst [vmem:[#allocation4 + $0x20] sm:$0xff] %v2891
    %2930 = vst [vmem:[#allocation4 + $0x28] sm:$0xff] %v2893
    %2931 = vst [vmem:[#allocation4 + $0x30] sm:$0xff] %v2896
    %2932 = vst [vmem:[#allocation4 + $0x38] sm:$0xff] %v2898
    %2933 = vst [vmem:[#allocation4 + $0x40] sm:$0xff] %v2901
    %2934 = vst [vmem:[#allocation4 + $0x48] sm:$0xff] %v2903
    %2935 = vst [vmem:[#allocation4 + $0x50] sm:$0xff] %v2906
    %2936 = vst [vmem:[#allocation4 + $0x58] sm:$0xff] %v2908
    %2937 = vst [vmem:[#allocation4 + $0x60] sm:$0xff] %v2911
    %2938 = vst [vmem:[#allocation4 + $0x68] sm:$0xff] %v2913
    %2939 = vst [vmem:[#allocation4 + $0x70] sm:$0xff] %v2916
    %2940 = vst [vmem:[#allocation4 + $0x78] sm:$0xff] %v2918
    %2941 = vst [vmem:[#allocation4 + $0x80] sm:$0xff] %v2921
    %2942 = vst [vmem:[#allocation4 + $0x88] sm:$0xff] %v2923
    %v2943 = vld [vmem:[#allocation3] sm:$0xff]
    %v2944 = vld [vmem:[#allocation3 + $0x8] sm:$0xf]
    %v2945 = vld [vmem:[#allocation3 + $0xc] sm:$0xff]
    %v2946 = vld [vmem:[#allocation3 + $0x14] sm:$0xf]
    %v2947 = vld [vmem:[#allocation3 + $0x18] sm:$0xff]
    %v2948 = vld [vmem:[#allocation3 + $0x20] sm:$0xf]
    %v2949 = vld [vmem:[#allocation3 + $0x24] sm:$0xff]
    %v2950 = vld [vmem:[#allocation3 + $0x2c] sm:$0xf]
    %v2951 = vld [vmem:[#allocation3 + $0x30] sm:$0xff]
    %v2952 = vld [vmem:[#allocation3 + $0x38] sm:$0xf]
    %v2953 = vld [vmem:[#allocation3 + $0x3c] sm:$0xff]
    %v2954 = vld [vmem:[#allocation3 + $0x44] sm:$0xf]
    %v2955 = vld [vmem:[#allocation3 + $0x48] sm:$0xff]
    %v2956 = vld [vmem:[#allocation3 + $0x50] sm:$0xf]
    %v2957 = vld [vmem:[#allocation3 + $0x54] sm:$0xff]
    %v2958 = vld [vmem:[#allocation3 + $0x5c] sm:$0xf]
    %v2959 = vld [vmem:[#allocation3 + $0x60] sm:$0xff]
    %v2960 = vld [vmem:[#allocation3 + $0x68] sm:$0xf]
    %v2961 = vld [vmem:[#allocation3 + $0x6c] sm:$0xff]
    %v2962 = vld [vmem:[#allocation3 + $0x74] sm:$0xf]
    %v2963 = vld [vmem:[#allocation3 + $0x78] sm:$0xff]
    %v2964 = vld [vmem:[#allocation3 + $0x80] sm:$0xf]
    %v2965 = vld [vmem:[#allocation3 + $0x84] sm:$0xff]
    %v2966 = vld [vmem:[#allocation3 + $0x8c] sm:$0xf]
    %v2967 = vld [vmem:[#allocation3 + $0x90] sm:$0xff]
    %v2968 = vld [vmem:[#allocation3 + $0x98] sm:$0xf]
    %v2969 = vld [vmem:[#allocation3 + $0x9c] sm:$0xff]
    %v2970 = vld [vmem:[#allocation3 + $0xa4] sm:$0xf]
    %v2971 = vld [vmem:[#allocation3 + $0xa8] sm:$0xff]
    %v2972 = vld [vmem:[#allocation3 + $0xb0] sm:$0xf]
    %v2973 = vld [vmem:[#allocation3 + $0xb4] sm:$0xff]
    %v2974 = vld [vmem:[#allocation3 + $0xbc] sm:$0xf]
    %v2975 = vld [vmem:[#allocation3 + $0xc0] sm:$0xff]
    %v2976 = vld [vmem:[#allocation3 + $0xc8] sm:$0xf]
    %v2977 = vld [vmem:[#allocation3 + $0xcc] sm:$0xff]
    %v2978 = vld [vmem:[#allocation3 + $0xd4] sm:$0xf]
    %v2979 = vld [vmem:[#allocation11] sm:$0xf]
    %v2980 = vld [vmem:[#allocation11 + $0x4] sm:$0xf]
    %v2981 = vld [vmem:[#allocation11 + $0x8] sm:$0xf]
    %v2982 = vld [vmem:[#allocation11 + $0xc] sm:$0xf]
    %v2983 = vld [vmem:[#allocation11 + $0x10] sm:$0xf]
    %v2984 = vld [vmem:[#allocation11 + $0x14] sm:$0xf]
    %v2985 = vld [vmem:[#allocation11 + $0x18] sm:$0xf]
    %v2986 = vld [vmem:[#allocation11 + $0x1c] sm:$0xf]
    %v2987 = vld [vmem:[#allocation11 + $0x20] sm:$0xf]
    %v2988 = vld [vmem:[#allocation11 + $0x24] sm:$0xf]
    %v2989 = vld [vmem:[#allocation11 + $0x28] sm:$0xf]
    %v2990 = vld [vmem:[#allocation11 + $0x2c] sm:$0xf]
    %v2991 = vld [vmem:[#allocation11 + $0x30] sm:$0xf]
    %v2992 = vld [vmem:[#allocation11 + $0x34] sm:$0xf]
    %v2993 = vld [vmem:[#allocation11 + $0x38] sm:$0xf]
    %v2994 = vld [vmem:[#allocation11 + $0x3c] sm:$0xf]
    %v2995 = vld [vmem:[#allocation11 + $0x40] sm:$0xf]
    %v2996 = vld [vmem:[#allocation11 + $0x44] sm:$0xf]
    %v2997 = vld [vmem:[#allocation11 + $0x48] sm:$0xf]
    %v2998 = vld [vmem:[#allocation11 + $0x4c] sm:$0xf]
    %v2999 = vld [vmem:[#allocation11 + $0x50] sm:$0xf]
    %v3000 = vld [vmem:[#allocation11 + $0x54] sm:$0xf]
    %v3001 = vld [vmem:[#allocation11 + $0x58] sm:$0xf]
    %v3002 = vld [vmem:[#allocation11 + $0x5c] sm:$0xf]
    %v3003 = vld [vmem:[#allocation11 + $0x60] sm:$0xf]
    %v3004 = vld [vmem:[#allocation11 + $0x64] sm:$0xf]
    %v3005 = vld [vmem:[#allocation11 + $0x68] sm:$0xf]
    %v3006 = vld [vmem:[#allocation11 + $0x6c] sm:$0xf]
    %v3007 = vld [vmem:[#allocation11 + $0x70] sm:$0xf]
    %v3008 = vld [vmem:[#allocation11 + $0x74] sm:$0xf]
    %v3009 = vld [vmem:[#allocation11 + $0x78] sm:$0xf]
    %v3010 = vld [vmem:[#allocation11 + $0x7c] sm:$0xf]
    %v3011 = vld [vmem:[#allocation11 + $0x80] sm:$0xf]
    %v3012 = vld [vmem:[#allocation11 + $0x84] sm:$0xf]
    %v3013 = vld [vmem:[#allocation11 + $0x88] sm:$0xf]
    %v3014 = vld [vmem:[#allocation11 + $0x8c] sm:$0xf]
    %v3015 = vld [vmem:[#allocation11 + $0x90] sm:$0xf]
    %v3016 = vld [vmem:[#allocation11 + $0x94] sm:$0xf]
    %v3017 = vld [vmem:[#allocation11 + $0x98] sm:$0xf]
    %v3018 = vld [vmem:[#allocation11 + $0x9c] sm:$0xf]
    %v3019 = vld [vmem:[#allocation11 + $0xa0] sm:$0xf]
    %v3020 = vld [vmem:[#allocation11 + $0xa4] sm:$0xf]
    %v3021 = vld [vmem:[#allocation11 + $0xa8] sm:$0xf]
    %v3022 = vld [vmem:[#allocation11 + $0xac] sm:$0xf]
    %v3023 = vld [vmem:[#allocation11 + $0xb0] sm:$0xf]
    %v3024 = vld [vmem:[#allocation11 + $0xb4] sm:$0xf]
    %v3025 = vld [vmem:[#allocation11 + $0xb8] sm:$0xf]
    %v3026 = vld [vmem:[#allocation11 + $0xbc] sm:$0xf]
    %v3063 = vunpack.c.l.b16 %v2943
    %v3064 = vunpack.c.h.b16 %v2943
    %v3065 = vunpack.c.l.b16 %v2944
    %v3066 = vunpack.c.l.b16 %v2945
    %v3067 = vunpack.c.h.b16 %v2945
    %v3068 = vunpack.c.l.b16 %v2946
    %v3069 = vunpack.c.l.b16 %v2947
    %v3070 = vunpack.c.h.b16 %v2947
    %v3071 = vunpack.c.l.b16 %v2948
    %v3072 = vunpack.c.l.b16 %v2949
    %v3073 = vunpack.c.h.b16 %v2949
    %v3074 = vunpack.c.l.b16 %v2950
    %v3075 = vunpack.c.l.b16 %v2951
    %v3076 = vunpack.c.h.b16 %v2951
    %v3077 = vunpack.c.l.b16 %v2952
    %v3078 = vunpack.c.l.b16 %v2953
    %v3079 = vunpack.c.h.b16 %v2953
    %v3080 = vunpack.c.l.b16 %v2954
    %v3081 = vunpack.c.l.b16 %v2955
    %v3082 = vunpack.c.h.b16 %v2955
    %v3083 = vunpack.c.l.b16 %v2956
    %v3084 = vunpack.c.l.b16 %v2957
    %v3085 = vunpack.c.h.b16 %v2957
    %v3086 = vunpack.c.l.b16 %v2958
    %v3087 = vunpack.c.l.b16 %v2959
    %v3088 = vunpack.c.h.b16 %v2959
    %v3089 = vunpack.c.l.b16 %v2960
    %v3090 = vunpack.c.l.b16 %v2961
    %v3091 = vunpack.c.h.b16 %v2961
    %v3092 = vunpack.c.l.b16 %v2962
    %v3093 = vunpack.c.l.b16 %v2963
    %v3094 = vunpack.c.h.b16 %v2963
    %v3095 = vunpack.c.l.b16 %v2964
    %v3096 = vunpack.c.l.b16 %v2965
    %v3097 = vunpack.c.h.b16 %v2965
    %v3098 = vunpack.c.l.b16 %v2966
    %v3099 = vunpack.c.l.b16 %v2967
    %v3100 = vunpack.c.h.b16 %v2967
    %v3101 = vunpack.c.l.b16 %v2968
    %v3102 = vunpack.c.l.b16 %v2969
    %v3103 = vunpack.c.h.b16 %v2969
    %v3104 = vunpack.c.l.b16 %v2970
    %v3105 = vunpack.c.l.b16 %v2971
    %v3106 = vunpack.c.h.b16 %v2971
    %v3107 = vunpack.c.l.b16 %v2972
    %v3108 = vunpack.c.l.b16 %v2973
    %v3109 = vunpack.c.h.b16 %v2973
    %v3110 = vunpack.c.l.b16 %v2974
    %v3111 = vunpack.c.l.b16 %v2975
    %v3112 = vunpack.c.h.b16 %v2975
    %v3113 = vunpack.c.l.b16 %v2976
    %v3114 = vunpack.c.l.b16 %v2977
    %v3115 = vunpack.c.h.b16 %v2977
    %v3116 = vunpack.c.l.b16 %v2978
    %v3117 = vpack.c.b16 %v3066, %v3063
    %v3118 = vpack.c.b16 %v3067, %v3064
    %v3119 = vpack.c.b16 %v3068, %v3065
    %v3120 = vpack.c.b16 %v3072, %v3069
    %v3121 = vpack.c.b16 %v3073, %v3070
    %v3122 = vpack.c.b16 %v3074, %v3071
    %v3123 = vpack.c.b16 %v3078, %v3075
    %v3124 = vpack.c.b16 %v3079, %v3076
    %v3125 = vpack.c.b16 %v3080, %v3077
    %v3126 = vpack.c.b16 %v3084, %v3081
    %v3127 = vpack.c.b16 %v3085, %v3082
    %v3128 = vpack.c.b16 %v3086, %v3083
    %v3129 = vpack.c.b16 %v3090, %v3087
    %v3130 = vpack.c.b16 %v3091, %v3088
    %v3131 = vpack.c.b16 %v3092, %v3089
    %v3132 = vpack.c.b16 %v3096, %v3093
    %v3133 = vpack.c.b16 %v3097, %v3094
    %v3134 = vpack.c.b16 %v3098, %v3095
    %v3135 = vpack.c.b16 %v3102, %v3099
    %v3136 = vpack.c.b16 %v3103, %v3100
    %v3137 = vpack.c.b16 %v3104, %v3101
    %v3138 = vpack.c.b16 %v3108, %v3105
    %v3139 = vpack.c.b16 %v3109, %v3106
    %v3140 = vpack.c.b16 %v3110, %v3107
    %v3141 = vpack.c.b16 %v3114, %v3111
    %v3142 = vpack.c.b16 %v3115, %v3112
    %v3143 = vpack.c.b16 %v3116, %v3113
    %v3219 = vunpack.c.l.b16 %v2979
    %v3220 = vunpack.c.l.b16 %v2980
    %v3221 = vunpack.c.l.b16 %v2981
    %v3222 = vunpack.c.l.b16 %v2982
    %v3223 = vunpack.c.l.b16 %v2983
    %v3224 = vunpack.c.l.b16 %v2984
    %v3225 = vunpack.c.l.b16 %v2985
    %v3226 = vunpack.c.l.b16 %v2986
    %v3227 = vunpack.c.l.b16 %v2987
    %v3228 = vunpack.c.l.b16 %v2988
    %v3229 = vunpack.c.l.b16 %v2989
    %v3230 = vunpack.c.l.b16 %v2990
    %v3231 = vunpack.c.l.b16 %v2991
    %v3232 = vunpack.c.l.b16 %v2992
    %v3233 = vunpack.c.l.b16 %v2993
    %v3234 = vunpack.c.l.b16 %v2994
    %v3235 = vunpack.c.l.b16 %v2995
    %v3236 = vunpack.c.l.b16 %v2996
    %v3237 = vunpack.c.l.b16 %v2997
    %v3238 = vunpack.c.l.b16 %v2998
    %v3239 = vunpack.c.l.b16 %v2999
    %v3240 = vunpack.c.l.b16 %v3000
    %v3241 = vunpack.c.l.b16 %v3001
    %v3242 = vunpack.c.l.b16 %v3002
    %v3243 = vunpack.c.l.b16 %v3003
    %v3244 = vunpack.c.l.b16 %v3004
    %v3245 = vunpack.c.l.b16 %v3005
    %v3246 = vunpack.c.l.b16 %v3006
    %v3247 = vunpack.c.l.b16 %v3007
    %v3248 = vunpack.c.l.b16 %v3008
    %v3249 = vunpack.c.l.b16 %v3009
    %v3250 = vunpack.c.l.b16 %v3010
    %v3251 = vunpack.c.l.b16 %v3011
    %v3252 = vunpack.c.l.b16 %v3012
    %v3253 = vunpack.c.l.b16 %v3013
    %v3254 = vunpack.c.l.b16 %v3014
    %v3255 = vunpack.c.l.b16 %v3015
    %v3256 = vunpack.c.l.b16 %v3016
    %v3257 = vunpack.c.l.b16 %v3017
    %v3258 = vunpack.c.l.b16 %v3018
    %v3259 = vunpack.c.l.b16 %v3019
    %v3260 = vunpack.c.l.b16 %v3020
    %v3261 = vunpack.c.l.b16 %v3021
    %v3262 = vunpack.c.l.b16 %v3022
    %v3263 = vunpack.c.l.b16 %v3023
    %v3264 = vunpack.c.l.b16 %v3024
    %v3265 = vunpack.c.l.b16 %v3025
    %v3266 = vunpack.c.l.b16 %v3026
    %v3267 = vpack.c.b16 %v3220, %v3219
    %v3268 = vpack.c.b16 %v3222, %v3221
    %v3269 = vpack.c.b16 %v3224, %v3223
    %v3270 = vpack.c.b16 %v3226, %v3225
    %v3271 = vpack.c.b16 %v3228, %v3227
    %v3272 = vpack.c.b16 %v3230, %v3229
    %v3273 = vpack.c.b16 %v3232, %v3231
    %v3274 = vpack.c.b16 %v3234, %v3233
    %v3275 = vpack.c.b16 %v3236, %v3235
    %v3276 = vpack.c.b16 %v3238, %v3237
    %v3277 = vpack.c.b16 %v3240, %v3239
    %v3278 = vpack.c.b16 %v3242, %v3241
    %v3279 = vpack.c.b16 %v3244, %v3243
    %v3280 = vpack.c.b16 %v3246, %v3245
    %v3281 = vpack.c.b16 %v3248, %v3247
    %v3282 = vpack.c.b16 %v3250, %v3249
    %v3283 = vpack.c.b16 %v3252, %v3251
    %v3284 = vpack.c.b16 %v3254, %v3253
    %v3285 = vpack.c.b16 %v3256, %v3255
    %v3286 = vpack.c.b16 %v3258, %v3257
    %v3287 = vpack.c.b16 %v3260, %v3259
    %v3288 = vpack.c.b16 %v3262, %v3261
    %v3289 = vpack.c.b16 %v3264, %v3263
    %v3290 = vpack.c.b16 %v3266, %v3265
    %3315 = vmatpush.bf16.msra.mxu0 %v3274
    %3316 = vmatpush.bf16.msra.mxu0 %v3273
    %3317 = vmatpush.bf16.msra.mxu0 %v3272
    %3318 = vmatpush.bf16.msra.mxu0 %v3271
    %3319 = vmatpush.bf16.msra.mxu0 %v3270
    %3320 = vmatpush.bf16.msra.mxu0 %v3269
    %3321 = vmatpush.bf16.msra.mxu0 %v3268
    %3322 = vmatpush.bf16.msra.mxu0 %v3267
    %3323 = vmatmul.bf16.gmra.mxu0 %v3117
    %v3324 = vpop.f32.mrf.mxu0
    %v3325 = vadd.f32 0.0, %v3324
    %v3326 = vpop.f32.mrf.mxu0
    %v3327 = vadd.f32 0.0, %v3326
    %3328 = vmatmul.bf16.gmra.mxu0 %v3120
    %v3329 = vpop.f32.mrf.mxu0
    %v3330 = vadd.f32 0.0, %v3329
    %v3331 = vpop.f32.mrf.mxu0
    %v3332 = vadd.f32 0.0, %v3331
    %3333 = vmatmul.bf16.gmra.mxu0 %v3123
    %v3334 = vpop.f32.mrf.mxu0
    %v3335 = vadd.f32 0.0, %v3334
    %v3336 = vpop.f32.mrf.mxu0
    %v3337 = vadd.f32 0.0, %v3336
    %3338 = vmatmul.bf16.gmra.mxu0 %v3126
    %v3339 = vpop.f32.mrf.mxu0
    %v3340 = vadd.f32 0.0, %v3339
    %v3341 = vpop.f32.mrf.mxu0
    %v3342 = vadd.f32 0.0, %v3341
    %3343 = vmatmul.bf16.gmra.mxu0 %v3129
    %v3344 = vpop.f32.mrf.mxu0
    %v3345 = vadd.f32 0.0, %v3344
    %v3346 = vpop.f32.mrf.mxu0
    %v3347 = vadd.f32 0.0, %v3346
    %3348 = vmatmul.bf16.gmra.mxu0 %v3132
    %v3349 = vpop.f32.mrf.mxu0
    %v3350 = vadd.f32 0.0, %v3349
    %v3351 = vpop.f32.mrf.mxu0
    %v3352 = vadd.f32 0.0, %v3351
    %3353 = vmatmul.bf16.gmra.mxu0 %v3135
    %v3354 = vpop.f32.mrf.mxu0
    %v3355 = vadd.f32 0.0, %v3354
    %v3356 = vpop.f32.mrf.mxu0
    %v3357 = vadd.f32 0.0, %v3356
    %3358 = vmatmul.bf16.gmra.mxu0 %v3138
    %v3359 = vpop.f32.mrf.mxu0
    %v3360 = vadd.f32 0.0, %v3359
    %v3361 = vpop.f32.mrf.mxu0
    %v3362 = vadd.f32 0.0, %v3361
    %3363 = vmatmul.bf16.gmra.mxu0 %v3141
    %v3364 = vpop.f32.mrf.mxu0
    %v3365 = vadd.f32 0.0, %v3364
    %v3366 = vpop.f32.mrf.mxu0
    %v3367 = vadd.f32 0.0, %v3366
    %3368 = vdwg.mxu0
    %3369 = vmatpush.bf16.msra.mxu0 %v3282
    %3370 = vmatpush.bf16.msra.mxu0 %v3281
    %3371 = vmatpush.bf16.msra.mxu0 %v3280
    %3372 = vmatpush.bf16.msra.mxu0 %v3279
    %3373 = vmatpush.bf16.msra.mxu0 %v3278
    %3374 = vmatpush.bf16.msra.mxu0 %v3277
    %3375 = vmatpush.bf16.msra.mxu0 %v3276
    %3376 = vmatpush.bf16.msra.mxu0 %v3275
    %3377 = vmatmul.bf16.gmra.mxu0 %v3118
    %v3378 = vpop.f32.mrf.mxu0
    %v3379 = vadd.f32 %v3325, %v3378
    %v3380 = vpop.f32.mrf.mxu0
    %v3381 = vadd.f32 %v3327, %v3380
    %3382 = vmatmul.bf16.gmra.mxu0 %v3121
    %v3383 = vpop.f32.mrf.mxu0
    %v3384 = vadd.f32 %v3330, %v3383
    %v3385 = vpop.f32.mrf.mxu0
    %v3386 = vadd.f32 %v3332, %v3385
    %3387 = vmatmul.bf16.gmra.mxu0 %v3124
    %v3388 = vpop.f32.mrf.mxu0
    %v3389 = vadd.f32 %v3335, %v3388
    %v3390 = vpop.f32.mrf.mxu0
    %v3391 = vadd.f32 %v3337, %v3390
    %3392 = vmatmul.bf16.gmra.mxu0 %v3127
    %v3393 = vpop.f32.mrf.mxu0
    %v3394 = vadd.f32 %v3340, %v3393
    %v3395 = vpop.f32.mrf.mxu0
    %v3396 = vadd.f32 %v3342, %v3395
    %3397 = vmatmul.bf16.gmra.mxu0 %v3130
    %v3398 = vpop.f32.mrf.mxu0
    %v3399 = vadd.f32 %v3345, %v3398
    %v3400 = vpop.f32.mrf.mxu0
    %v3401 = vadd.f32 %v3347, %v3400
    %3402 = vmatmul.bf16.gmra.mxu0 %v3133
    %v3403 = vpop.f32.mrf.mxu0
    %v3404 = vadd.f32 %v3350, %v3403
    %v3405 = vpop.f32.mrf.mxu0
    %v3406 = vadd.f32 %v3352, %v3405
    %3407 = vmatmul.bf16.gmra.mxu0 %v3136
    %v3408 = vpop.f32.mrf.mxu0
    %v3409 = vadd.f32 %v3355, %v3408
    %v3410 = vpop.f32.mrf.mxu0
    %v3411 = vadd.f32 %v3357, %v3410
    %3412 = vmatmul.bf16.gmra.mxu0 %v3139
    %v3413 = vpop.f32.mrf.mxu0
    %v3414 = vadd.f32 %v3360, %v3413
    %v3415 = vpop.f32.mrf.mxu0
    %v3416 = vadd.f32 %v3362, %v3415
    %3417 = vmatmul.bf16.gmra.mxu0 %v3142
    %v3418 = vpop.f32.mrf.mxu0
    %v3419 = vadd.f32 %v3365, %v3418
    %v3420 = vpop.f32.mrf.mxu0
    %v3421 = vadd.f32 %v3367, %v3420
    %3422 = vdwg.mxu0
    %3423 = vmatpush.bf16.msra.mxu0 %v3290
    %3424 = vmatpush.bf16.msra.mxu0 %v3289
    %3425 = vmatpush.bf16.msra.mxu0 %v3288
    %3426 = vmatpush.bf16.msra.mxu0 %v3287
    %3427 = vmatpush.bf16.msra.mxu0 %v3286
    %3428 = vmatpush.bf16.msra.mxu0 %v3285
    %3429 = vmatpush.bf16.msra.mxu0 %v3284
    %3430 = vmatpush.bf16.msra.mxu0 %v3283
    %3431 = vmatmul.bf16.gmra.mxu0 %v3119
    %v3432 = vpop.f32.mrf.mxu0
    %v3433 = vadd.f32 %v3379, %v3432
    %v3434 = vpop.f32.mrf.mxu0
    %v3435 = vadd.f32 %v3381, %v3434
    %3436 = vmatmul.bf16.gmra.mxu0 %v3122
    %v3437 = vpop.f32.mrf.mxu0
    %v3438 = vadd.f32 %v3384, %v3437
    %v3439 = vpop.f32.mrf.mxu0
    %v3440 = vadd.f32 %v3386, %v3439
    %3441 = vmatmul.bf16.gmra.mxu0 %v3125
    %v3442 = vpop.f32.mrf.mxu0
    %v3443 = vadd.f32 %v3389, %v3442
    %v3444 = vpop.f32.mrf.mxu0
    %v3445 = vadd.f32 %v3391, %v3444
    %3446 = vmatmul.bf16.gmra.mxu0 %v3128
    %v3447 = vpop.f32.mrf.mxu0
    %v3448 = vadd.f32 %v3394, %v3447
    %v3449 = vpop.f32.mrf.mxu0
    %v3450 = vadd.f32 %v3396, %v3449
    %3451 = vmatmul.bf16.gmra.mxu0 %v3131
    %v3452 = vpop.f32.mrf.mxu0
    %v3453 = vadd.f32 %v3399, %v3452
    %v3454 = vpop.f32.mrf.mxu0
    %v3455 = vadd.f32 %v3401, %v3454
    %3456 = vmatmul.bf16.gmra.mxu0 %v3134
    %v3457 = vpop.f32.mrf.mxu0
    %v3458 = vadd.f32 %v3404, %v3457
    %v3459 = vpop.f32.mrf.mxu0
    %v3460 = vadd.f32 %v3406, %v3459
    %3461 = vmatmul.bf16.gmra.mxu0 %v3137
    %v3462 = vpop.f32.mrf.mxu0
    %v3463 = vadd.f32 %v3409, %v3462
    %v3464 = vpop.f32.mrf.mxu0
    %v3465 = vadd.f32 %v3411, %v3464
    %3466 = vmatmul.bf16.gmra.mxu0 %v3140
    %v3467 = vpop.f32.mrf.mxu0
    %v3468 = vadd.f32 %v3414, %v3467
    %v3469 = vpop.f32.mrf.mxu0
    %v3470 = vadd.f32 %v3416, %v3469
    %3471 = vmatmul.bf16.gmra.mxu0 %v3143
    %v3472 = vpop.f32.mrf.mxu0
    %v3473 = vadd.f32 %v3419, %v3472
    %v3474 = vpop.f32.mrf.mxu0
    %v3475 = vadd.f32 %v3421, %v3474
    %3476 = vdwg.mxu0
    %v3477 = vld [vmem:[#allocation4] sm:$0xff]
    %v3478 = vld [vmem:[#allocation4 + $0x8] sm:$0xff]
    %v3479 = vld [vmem:[#allocation4 + $0x10] sm:$0xff]
    %v3480 = vld [vmem:[#allocation4 + $0x18] sm:$0xff]
    %v3481 = vld [vmem:[#allocation4 + $0x20] sm:$0xff]
    %v3482 = vld [vmem:[#allocation4 + $0x28] sm:$0xff]
    %v3483 = vld [vmem:[#allocation4 + $0x30] sm:$0xff]
    %v3484 = vld [vmem:[#allocation4 + $0x38] sm:$0xff]
    %v3485 = vld [vmem:[#allocation4 + $0x40] sm:$0xff]
    %v3486 = vld [vmem:[#allocation4 + $0x48] sm:$0xff]
    %v3487 = vld [vmem:[#allocation4 + $0x50] sm:$0xff]
    %v3488 = vld [vmem:[#allocation4 + $0x58] sm:$0xff]
    %v3489 = vld [vmem:[#allocation4 + $0x60] sm:$0xff]
    %v3490 = vld [vmem:[#allocation4 + $0x68] sm:$0xff]
    %v3491 = vld [vmem:[#allocation4 + $0x70] sm:$0xff]
    %v3492 = vld [vmem:[#allocation4 + $0x78] sm:$0xff]
    %v3493 = vld [vmem:[#allocation4 + $0x80] sm:$0xff]
    %v3494 = vld [vmem:[#allocation4 + $0x88] sm:$0xff]
    %v3495 = vadd.f32 %v3477, %v3433
    %v3496 = vadd.f32 %v3478, %v3435
    %v3497 = vadd.f32 %v3479, %v3438
    %v3498 = vadd.f32 %v3480, %v3440
    %v3499 = vadd.f32 %v3481, %v3443
    %v3500 = vadd.f32 %v3482, %v3445
    %v3501 = vadd.f32 %v3483, %v3448
    %v3502 = vadd.f32 %v3484, %v3450
    %v3503 = vadd.f32 %v3485, %v3453
    %v3504 = vadd.f32 %v3486, %v3455
    %v3505 = vadd.f32 %v3487, %v3458
    %v3506 = vadd.f32 %v3488, %v3460
    %v3507 = vadd.f32 %v3489, %v3463
    %v3508 = vadd.f32 %v3490, %v3465
    %v3509 = vadd.f32 %v3491, %v3468
    %v3510 = vadd.f32 %v3492, %v3470
    %v3511 = vadd.f32 %v3493, %v3473
    %v3512 = vadd.f32 %v3494, %v3475
    %3513 = vst [vmem:[#allocation4] sm:$0xff] %v3495
    %3514 = vst [vmem:[#allocation4 + $0x8] sm:$0xff] %v3496
    %3515 = vst [vmem:[#allocation4 + $0x10] sm:$0xff] %v3497
    %3516 = vst [vmem:[#allocation4 + $0x18] sm:$0xff] %v3498
    %3517 = vst [vmem:[#allocation4 + $0x20] sm:$0xff] %v3499
    %3518 = vst [vmem:[#allocation4 + $0x28] sm:$0xff] %v3500
    %3519 = vst [vmem:[#allocation4 + $0x30] sm:$0xff] %v3501
    %3520 = vst [vmem:[#allocation4 + $0x38] sm:$0xff] %v3502
    %3521 = vst [vmem:[#allocation4 + $0x40] sm:$0xff] %v3503
    %3522 = vst [vmem:[#allocation4 + $0x48] sm:$0xff] %v3504
    %3523 = vst [vmem:[#allocation4 + $0x50] sm:$0xff] %v3505
    %3524 = vst [vmem:[#allocation4 + $0x58] sm:$0xff] %v3506
    %3525 = vst [vmem:[#allocation4 + $0x60] sm:$0xff] %v3507
    %3526 = vst [vmem:[#allocation4 + $0x68] sm:$0xff] %v3508
    %3527 = vst [vmem:[#allocation4 + $0x70] sm:$0xff] %v3509
    %3528 = vst [vmem:[#allocation4 + $0x78] sm:$0xff] %v3510
    %3529 = vst [vmem:[#allocation4 + $0x80] sm:$0xff] %v3511
    %3530 = vst [vmem:[#allocation4 + $0x88] sm:$0xff] %v3512
    %v3531 = vld [vmem:[%s2260] sm:$0xff]
    %v3532 = vld [vmem:[%s2260 + $0x8] sm:$0xf]
    %v3533 = vld [vmem:[%s2260 + $0xc] sm:$0xff]
    %v3534 = vld [vmem:[%s2260 + $0x14] sm:$0xf]
    %v3535 = vld [vmem:[%s2260 + $0x18] sm:$0xff]
    %v3536 = vld [vmem:[%s2260 + $0x20] sm:$0xf]
    %v3537 = vld [vmem:[%s2260 + $0x24] sm:$0xff]
    %v3538 = vld [vmem:[%s2260 + $0x2c] sm:$0xf]
    %v3539 = vld [vmem:[%s2260 + $0x30] sm:$0xff]
    %v3540 = vld [vmem:[%s2260 + $0x38] sm:$0xf]
    %v3541 = vld [vmem:[%s2260 + $0x3c] sm:$0xff]
    %v3542 = vld [vmem:[%s2260 + $0x44] sm:$0xf]
    %v3543 = vld [vmem:[%s2260 + $0x48] sm:$0xff]
    %v3544 = vld [vmem:[%s2260 + $0x50] sm:$0xf]
    %v3545 = vld [vmem:[%s2260 + $0x54] sm:$0xff]
    %v3546 = vld [vmem:[%s2260 + $0x5c] sm:$0xf]
    %v3547 = vld [vmem:[%s2260 + $0x60] sm:$0xff]
    %v3548 = vld [vmem:[%s2260 + $0x68] sm:$0xf]
    %v3549 = vld [vmem:[%s2260 + $0x6c] sm:$0xff]
    %v3550 = vld [vmem:[%s2260 + $0x74] sm:$0xf]
    %v3551 = vld [vmem:[%s2260 + $0x78] sm:$0xff]
    %v3552 = vld [vmem:[%s2260 + $0x80] sm:$0xf]
    %v3553 = vld [vmem:[%s2260 + $0x84] sm:$0xff]
    %v3554 = vld [vmem:[%s2260 + $0x8c] sm:$0xf]
    %v3555 = vld [vmem:[%s2260 + $0x90] sm:$0xff]
    %v3556 = vld [vmem:[%s2260 + $0x98] sm:$0xf]
    %v3557 = vld [vmem:[%s2260 + $0x9c] sm:$0xff]
    %v3558 = vld [vmem:[%s2260 + $0xa4] sm:$0xf]
    %v3559 = vld [vmem:[%s2260 + $0xa8] sm:$0xff]
    %v3560 = vld [vmem:[%s2260 + $0xb0] sm:$0xf]
    %v3561 = vld [vmem:[%s2260 + $0xb4] sm:$0xff]
    %v3562 = vld [vmem:[%s2260 + $0xbc] sm:$0xf]
    %v3563 = vld [vmem:[%s2260 + $0xc0] sm:$0xff]
    %v3564 = vld [vmem:[%s2260 + $0xc8] sm:$0xf]
    %v3565 = vld [vmem:[%s2260 + $0xcc] sm:$0xff]
    %v3566 = vld [vmem:[%s2260 + $0xd4] sm:$0xf]
    %s3567 = scalar_lea.vmem [#allocation11], 192
    %v3568 = vld [vmem:[%s3567] sm:$0xf]
    %v3569 = vld [vmem:[%s3567 + $0x4] sm:$0xf]
    %v3570 = vld [vmem:[%s3567 + $0x8] sm:$0xf]
    %v3571 = vld [vmem:[%s3567 + $0xc] sm:$0xf]
    %v3572 = vld [vmem:[%s3567 + $0x10] sm:$0xf]
    %v3573 = vld [vmem:[%s3567 + $0x14] sm:$0xf]
    %v3574 = vld [vmem:[%s3567 + $0x18] sm:$0xf]
    %v3575 = vld [vmem:[%s3567 + $0x1c] sm:$0xf]
    %v3576 = vld [vmem:[%s3567 + $0x20] sm:$0xf]
    %v3577 = vld [vmem:[%s3567 + $0x24] sm:$0xf]
    %v3578 = vld [vmem:[%s3567 + $0x28] sm:$0xf]
    %v3579 = vld [vmem:[%s3567 + $0x2c] sm:$0xf]
    %v3580 = vld [vmem:[%s3567 + $0x30] sm:$0xf]
    %v3581 = vld [vmem:[%s3567 + $0x34] sm:$0xf]
    %v3582 = vld [vmem:[%s3567 + $0x38] sm:$0xf]
    %v3583 = vld [vmem:[%s3567 + $0x3c] sm:$0xf]
    %v3584 = vld [vmem:[%s3567 + $0x40] sm:$0xf]
    %v3585 = vld [vmem:[%s3567 + $0x44] sm:$0xf]
    %v3586 = vld [vmem:[%s3567 + $0x48] sm:$0xf]
    %v3587 = vld [vmem:[%s3567 + $0x4c] sm:$0xf]
    %v3588 = vld [vmem:[%s3567 + $0x50] sm:$0xf]
    %v3589 = vld [vmem:[%s3567 + $0x54] sm:$0xf]
    %v3590 = vld [vmem:[%s3567 + $0x58] sm:$0xf]
    %v3591 = vld [vmem:[%s3567 + $0x5c] sm:$0xf]
    %v3592 = vld [vmem:[%s3567 + $0x60] sm:$0xf]
    %v3593 = vld [vmem:[%s3567 + $0x64] sm:$0xf]
    %v3594 = vld [vmem:[%s3567 + $0x68] sm:$0xf]
    %v3595 = vld [vmem:[%s3567 + $0x6c] sm:$0xf]
    %v3596 = vld [vmem:[%s3567 + $0x70] sm:$0xf]
    %v3597 = vld [vmem:[%s3567 + $0x74] sm:$0xf]
    %v3598 = vld [vmem:[%s3567 + $0x78] sm:$0xf]
    %v3599 = vld [vmem:[%s3567 + $0x7c] sm:$0xf]
    %v3600 = vld [vmem:[%s3567 + $0x80] sm:$0xf]
    %v3601 = vld [vmem:[%s3567 + $0x84] sm:$0xf]
    %v3602 = vld [vmem:[%s3567 + $0x88] sm:$0xf]
    %v3603 = vld [vmem:[%s3567 + $0x8c] sm:$0xf]
    %v3604 = vld [vmem:[%s3567 + $0x90] sm:$0xf]
    %v3605 = vld [vmem:[%s3567 + $0x94] sm:$0xf]
    %v3606 = vld [vmem:[%s3567 + $0x98] sm:$0xf]
    %v3607 = vld [vmem:[%s3567 + $0x9c] sm:$0xf]
    %v3608 = vld [vmem:[%s3567 + $0xa0] sm:$0xf]
    %v3609 = vld [vmem:[%s3567 + $0xa4] sm:$0xf]
    %v3610 = vld [vmem:[%s3567 + $0xa8] sm:$0xf]
    %v3611 = vld [vmem:[%s3567 + $0xac] sm:$0xf]
    %v3612 = vld [vmem:[%s3567 + $0xb0] sm:$0xf]
    %v3613 = vld [vmem:[%s3567 + $0xb4] sm:$0xf]
    %v3614 = vld [vmem:[%s3567 + $0xb8] sm:$0xf]
    %v3615 = vld [vmem:[%s3567 + $0xbc] sm:$0xf]
    %v3652 = vunpack.c.l.b16 %v3531
    %v3653 = vunpack.c.h.b16 %v3531
    %v3654 = vunpack.c.l.b16 %v3532
    %v3655 = vunpack.c.l.b16 %v3533
    %v3656 = vunpack.c.h.b16 %v3533
    %v3657 = vunpack.c.l.b16 %v3534
    %v3658 = vunpack.c.l.b16 %v3535
    %v3659 = vunpack.c.h.b16 %v3535
    %v3660 = vunpack.c.l.b16 %v3536
    %v3661 = vunpack.c.l.b16 %v3537
    %v3662 = vunpack.c.h.b16 %v3537
    %v3663 = vunpack.c.l.b16 %v3538
    %v3664 = vunpack.c.l.b16 %v3539
    %v3665 = vunpack.c.h.b16 %v3539
    %v3666 = vunpack.c.l.b16 %v3540
    %v3667 = vunpack.c.l.b16 %v3541
    %v3668 = vunpack.c.h.b16 %v3541
    %v3669 = vunpack.c.l.b16 %v3542
    %v3670 = vunpack.c.l.b16 %v3543
    %v3671 = vunpack.c.h.b16 %v3543
    %v3672 = vunpack.c.l.b16 %v3544
    %v3673 = vunpack.c.l.b16 %v3545
    %v3674 = vunpack.c.h.b16 %v3545
    %v3675 = vunpack.c.l.b16 %v3546
    %v3676 = vunpack.c.l.b16 %v3547
    %v3677 = vunpack.c.h.b16 %v3547
    %v3678 = vunpack.c.l.b16 %v3548
    %v3679 = vunpack.c.l.b16 %v3549
    %v3680 = vunpack.c.h.b16 %v3549
    %v3681 = vunpack.c.l.b16 %v3550
    %v3682 = vunpack.c.l.b16 %v3551
    %v3683 = vunpack.c.h.b16 %v3551
    %v3684 = vunpack.c.l.b16 %v3552
    %v3685 = vunpack.c.l.b16 %v3553
    %v3686 = vunpack.c.h.b16 %v3553
    %v3687 = vunpack.c.l.b16 %v3554
    %v3688 = vunpack.c.l.b16 %v3555
    %v3689 = vunpack.c.h.b16 %v3555
    %v3690 = vunpack.c.l.b16 %v3556
    %v3691 = vunpack.c.l.b16 %v3557
    %v3692 = vunpack.c.h.b16 %v3557
    %v3693 = vunpack.c.l.b16 %v3558
    %v3694 = vunpack.c.l.b16 %v3559
    %v3695 = vunpack.c.h.b16 %v3559
    %v3696 = vunpack.c.l.b16 %v3560
    %v3697 = vunpack.c.l.b16 %v3561
    %v3698 = vunpack.c.h.b16 %v3561
    %v3699 = vunpack.c.l.b16 %v3562
    %v3700 = vunpack.c.l.b16 %v3563
    %v3701 = vunpack.c.h.b16 %v3563
    %v3702 = vunpack.c.l.b16 %v3564
    %v3703 = vunpack.c.l.b16 %v3565
    %v3704 = vunpack.c.h.b16 %v3565
    %v3705 = vunpack.c.l.b16 %v3566
    %v3706 = vpack.c.b16 %v3655, %v3652
    %v3707 = vpack.c.b16 %v3656, %v3653
    %v3708 = vpack.c.b16 %v3657, %v3654
    %v3709 = vpack.c.b16 %v3661, %v3658
    %v3710 = vpack.c.b16 %v3662, %v3659
    %v3711 = vpack.c.b16 %v3663, %v3660
    %v3712 = vpack.c.b16 %v3667, %v3664
    %v3713 = vpack.c.b16 %v3668, %v3665
    %v3714 = vpack.c.b16 %v3669, %v3666
    %v3715 = vpack.c.b16 %v3673, %v3670
    %v3716 = vpack.c.b16 %v3674, %v3671
    %v3717 = vpack.c.b16 %v3675, %v3672
    %v3718 = vpack.c.b16 %v3679, %v3676
    %v3719 = vpack.c.b16 %v3680, %v3677
    %v3720 = vpack.c.b16 %v3681, %v3678
    %v3721 = vpack.c.b16 %v3685, %v3682
    %v3722 = vpack.c.b16 %v3686, %v3683
    %v3723 = vpack.c.b16 %v3687, %v3684
    %v3724 = vpack.c.b16 %v3691, %v3688
    %v3725 = vpack.c.b16 %v3692, %v3689
    %v3726 = vpack.c.b16 %v3693, %v3690
    %v3727 = vpack.c.b16 %v3697, %v3694
    %v3728 = vpack.c.b16 %v3698, %v3695
    %v3729 = vpack.c.b16 %v3699, %v3696
    %v3730 = vpack.c.b16 %v3703, %v3700
    %v3731 = vpack.c.b16 %v3704, %v3701
    %v3732 = vpack.c.b16 %v3705, %v3702
    %v3808 = vunpack.c.l.b16 %v3568
    %v3809 = vunpack.c.l.b16 %v3569
    %v3810 = vunpack.c.l.b16 %v3570
    %v3811 = vunpack.c.l.b16 %v3571
    %v3812 = vunpack.c.l.b16 %v3572
    %v3813 = vunpack.c.l.b16 %v3573
    %v3814 = vunpack.c.l.b16 %v3574
    %v3815 = vunpack.c.l.b16 %v3575
    %v3816 = vunpack.c.l.b16 %v3576
    %v3817 = vunpack.c.l.b16 %v3577
    %v3818 = vunpack.c.l.b16 %v3578
    %v3819 = vunpack.c.l.b16 %v3579
    %v3820 = vunpack.c.l.b16 %v3580
    %v3821 = vunpack.c.l.b16 %v3581
    %v3822 = vunpack.c.l.b16 %v3582
    %v3823 = vunpack.c.l.b16 %v3583
    %v3824 = vunpack.c.l.b16 %v3584
    %v3825 = vunpack.c.l.b16 %v3585
    %v3826 = vunpack.c.l.b16 %v3586
    %v3827 = vunpack.c.l.b16 %v3587
    %v3828 = vunpack.c.l.b16 %v3588
    %v3829 = vunpack.c.l.b16 %v3589
    %v3830 = vunpack.c.l.b16 %v3590
    %v3831 = vunpack.c.l.b16 %v3591
    %v3832 = vunpack.c.l.b16 %v3592
    %v3833 = vunpack.c.l.b16 %v3593
    %v3834 = vunpack.c.l.b16 %v3594
    %v3835 = vunpack.c.l.b16 %v3595
    %v3836 = vunpack.c.l.b16 %v3596
    %v3837 = vunpack.c.l.b16 %v3597
    %v3838 = vunpack.c.l.b16 %v3598
    %v3839 = vunpack.c.l.b16 %v3599
    %v3840 = vunpack.c.l.b16 %v3600
    %v3841 = vunpack.c.l.b16 %v3601
    %v3842 = vunpack.c.l.b16 %v3602
    %v3843 = vunpack.c.l.b16 %v3603
    %v3844 = vunpack.c.l.b16 %v3604
    %v3845 = vunpack.c.l.b16 %v3605
    %v3846 = vunpack.c.l.b16 %v3606
    %v3847 = vunpack.c.l.b16 %v3607
    %v3848 = vunpack.c.l.b16 %v3608
    %v3849 = vunpack.c.l.b16 %v3609
    %v3850 = vunpack.c.l.b16 %v3610
    %v3851 = vunpack.c.l.b16 %v3611
    %v3852 = vunpack.c.l.b16 %v3612
    %v3853 = vunpack.c.l.b16 %v3613
    %v3854 = vunpack.c.l.b16 %v3614
    %v3855 = vunpack.c.l.b16 %v3615
    %v3856 = vpack.c.b16 %v3809, %v3808
    %v3857 = vpack.c.b16 %v3811, %v3810
    %v3858 = vpack.c.b16 %v3813, %v3812
    %v3859 = vpack.c.b16 %v3815, %v3814
    %v3860 = vpack.c.b16 %v3817, %v3816
    %v3861 = vpack.c.b16 %v3819, %v3818
    %v3862 = vpack.c.b16 %v3821, %v3820
    %v3863 = vpack.c.b16 %v3823, %v3822
    %v3864 = vpack.c.b16 %v3825, %v3824
    %v3865 = vpack.c.b16 %v3827, %v3826
    %v3866 = vpack.c.b16 %v3829, %v3828
    %v3867 = vpack.c.b16 %v3831, %v3830
    %v3868 = vpack.c.b16 %v3833, %v3832
    %v3869 = vpack.c.b16 %v3835, %v3834
    %v3870 = vpack.c.b16 %v3837, %v3836
    %v3871 = vpack.c.b16 %v3839, %v3838
    %v3872 = vpack.c.b16 %v3841, %v3840
    %v3873 = vpack.c.b16 %v3843, %v3842
    %v3874 = vpack.c.b16 %v3845, %v3844
    %v3875 = vpack.c.b16 %v3847, %v3846
    %v3876 = vpack.c.b16 %v3849, %v3848
    %v3877 = vpack.c.b16 %v3851, %v3850
    %v3878 = vpack.c.b16 %v3853, %v3852
    %v3879 = vpack.c.b16 %v3855, %v3854
    %3904 = vmatpush.bf16.msra.mxu0 %v3863
    %3905 = vmatpush.bf16.msra.mxu0 %v3862
    %3906 = vmatpush.bf16.msra.mxu0 %v3861
    %3907 = vmatpush.bf16.msra.mxu0 %v3860
    %3908 = vmatpush.bf16.msra.mxu0 %v3859
    %3909 = vmatpush.bf16.msra.mxu0 %v3858
    %3910 = vmatpush.bf16.msra.mxu0 %v3857
    %3911 = vmatpush.bf16.msra.mxu0 %v3856
    %3912 = vmatmul.bf16.gmra.mxu0 %v3706
    %v3913 = vpop.f32.mrf.mxu0
    %v3914 = vadd.f32 0.0, %v3913
    %v3915 = vpop.f32.mrf.mxu0
    %v3916 = vadd.f32 0.0, %v3915
    %3917 = vmatmul.bf16.gmra.mxu0 %v3709
    %v3918 = vpop.f32.mrf.mxu0
    %v3919 = vadd.f32 0.0, %v3918
    %v3920 = vpop.f32.mrf.mxu0
    %v3921 = vadd.f32 0.0, %v3920
    %3922 = vmatmul.bf16.gmra.mxu0 %v3712
    %v3923 = vpop.f32.mrf.mxu0
    %v3924 = vadd.f32 0.0, %v3923
    %v3925 = vpop.f32.mrf.mxu0
    %v3926 = vadd.f32 0.0, %v3925
    %3927 = vmatmul.bf16.gmra.mxu0 %v3715
    %v3928 = vpop.f32.mrf.mxu0
    %v3929 = vadd.f32 0.0, %v3928
    %v3930 = vpop.f32.mrf.mxu0
    %v3931 = vadd.f32 0.0, %v3930
    %3932 = vmatmul.bf16.gmra.mxu0 %v3718
    %v3933 = vpop.f32.mrf.mxu0
    %v3934 = vadd.f32 0.0, %v3933
    %v3935 = vpop.f32.mrf.mxu0
    %v3936 = vadd.f32 0.0, %v3935
    %3937 = vmatmul.bf16.gmra.mxu0 %v3721
    %v3938 = vpop.f32.mrf.mxu0
    %v3939 = vadd.f32 0.0, %v3938
    %v3940 = vpop.f32.mrf.mxu0
    %v3941 = vadd.f32 0.0, %v3940
    %3942 = vmatmul.bf16.gmra.mxu0 %v3724
    %v3943 = vpop.f32.mrf.mxu0
    %v3944 = vadd.f32 0.0, %v3943
    %v3945 = vpop.f32.mrf.mxu0
    %v3946 = vadd.f32 0.0, %v3945
    %3947 = vmatmul.bf16.gmra.mxu0 %v3727
    %v3948 = vpop.f32.mrf.mxu0
    %v3949 = vadd.f32 0.0, %v3948
    %v3950 = vpop.f32.mrf.mxu0
    %v3951 = vadd.f32 0.0, %v3950
    %3952 = vmatmul.bf16.gmra.mxu0 %v3730
    %v3953 = vpop.f32.mrf.mxu0
    %v3954 = vadd.f32 0.0, %v3953
    %v3955 = vpop.f32.mrf.mxu0
    %v3956 = vadd.f32 0.0, %v3955
    %3957 = vdwg.mxu0
    %3958 = vmatpush.bf16.msra.mxu0 %v3871
    %3959 = vmatpush.bf16.msra.mxu0 %v3870
    %3960 = vmatpush.bf16.msra.mxu0 %v3869
    %3961 = vmatpush.bf16.msra.mxu0 %v3868
    %3962 = vmatpush.bf16.msra.mxu0 %v3867
    %3963 = vmatpush.bf16.msra.mxu0 %v3866
    %3964 = vmatpush.bf16.msra.mxu0 %v3865
    %3965 = vmatpush.bf16.msra.mxu0 %v3864
    %3966 = vmatmul.bf16.gmra.mxu0 %v3707
    %v3967 = vpop.f32.mrf.mxu0
    %v3968 = vadd.f32 %v3914, %v3967
    %v3969 = vpop.f32.mrf.mxu0
    %v3970 = vadd.f32 %v3916, %v3969
    %3971 = vmatmul.bf16.gmra.mxu0 %v3710
    %v3972 = vpop.f32.mrf.mxu0
    %v3973 = vadd.f32 %v3919, %v3972
    %v3974 = vpop.f32.mrf.mxu0
    %v3975 = vadd.f32 %v3921, %v3974
    %3976 = vmatmul.bf16.gmra.mxu0 %v3713
    %v3977 = vpop.f32.mrf.mxu0
    %v3978 = vadd.f32 %v3924, %v3977
    %v3979 = vpop.f32.mrf.mxu0
    %v3980 = vadd.f32 %v3926, %v3979
    %3981 = vmatmul.bf16.gmra.mxu0 %v3716
    %v3982 = vpop.f32.mrf.mxu0
    %v3983 = vadd.f32 %v3929, %v3982
    %v3984 = vpop.f32.mrf.mxu0
    %v3985 = vadd.f32 %v3931, %v3984
    %3986 = vmatmul.bf16.gmra.mxu0 %v3719
    %v3987 = vpop.f32.mrf.mxu0
    %v3988 = vadd.f32 %v3934, %v3987
    %v3989 = vpop.f32.mrf.mxu0
    %v3990 = vadd.f32 %v3936, %v3989
    %3991 = vmatmul.bf16.gmra.mxu0 %v3722
    %v3992 = vpop.f32.mrf.mxu0
    %v3993 = vadd.f32 %v3939, %v3992
    %v3994 = vpop.f32.mrf.mxu0
    %v3995 = vadd.f32 %v3941, %v3994
    %3996 = vmatmul.bf16.gmra.mxu0 %v3725
    %v3997 = vpop.f32.mrf.mxu0
    %v3998 = vadd.f32 %v3944, %v3997
    %v3999 = vpop.f32.mrf.mxu0
    %v4000 = vadd.f32 %v3946, %v3999
    %4001 = vmatmul.bf16.gmra.mxu0 %v3728
    %v4002 = vpop.f32.mrf.mxu0
    %v4003 = vadd.f32 %v3949, %v4002
    %v4004 = vpop.f32.mrf.mxu0
    %v4005 = vadd.f32 %v3951, %v4004
    %4006 = vmatmul.bf16.gmra.mxu0 %v3731
    %v4007 = vpop.f32.mrf.mxu0
    %v4008 = vadd.f32 %v3954, %v4007
    %v4009 = vpop.f32.mrf.mxu0
    %v4010 = vadd.f32 %v3956, %v4009
    %4011 = vdwg.mxu0
    %4012 = vmatpush.bf16.msra.mxu0 %v3879
    %4013 = vmatpush.bf16.msra.mxu0 %v3878
    %4014 = vmatpush.bf16.msra.mxu0 %v3877
    %4015 = vmatpush.bf16.msra.mxu0 %v3876
    %4016 = vmatpush.bf16.msra.mxu0 %v3875
    %4017 = vmatpush.bf16.msra.mxu0 %v3874
    %4018 = vmatpush.bf16.msra.mxu0 %v3873
    %4019 = vmatpush.bf16.msra.mxu0 %v3872
    %4020 = vmatmul.bf16.gmra.mxu0 %v3708
    %v4021 = vpop.f32.mrf.mxu0
    %v4022 = vadd.f32 %v3968, %v4021
    %v4023 = vpop.f32.mrf.mxu0
    %v4024 = vadd.f32 %v3970, %v4023
    %4025 = vmatmul.bf16.gmra.mxu0 %v3711
    %v4026 = vpop.f32.mrf.mxu0
    %v4027 = vadd.f32 %v3973, %v4026
    %v4028 = vpop.f32.mrf.mxu0
    %v4029 = vadd.f32 %v3975, %v4028
    %4030 = vmatmul.bf16.gmra.mxu0 %v3714
    %v4031 = vpop.f32.mrf.mxu0
    %v4032 = vadd.f32 %v3978, %v4031
    %v4033 = vpop.f32.mrf.mxu0
    %v4034 = vadd.f32 %v3980, %v4033
    %4035 = vmatmul.bf16.gmra.mxu0 %v3717
    %v4036 = vpop.f32.mrf.mxu0
    %v4037 = vadd.f32 %v3983, %v4036
    %v4038 = vpop.f32.mrf.mxu0
    %v4039 = vadd.f32 %v3985, %v4038
    %4040 = vmatmul.bf16.gmra.mxu0 %v3720
    %v4041 = vpop.f32.mrf.mxu0
    %v4042 = vadd.f32 %v3988, %v4041
    %v4043 = vpop.f32.mrf.mxu0
    %v4044 = vadd.f32 %v3990, %v4043
    %4045 = vmatmul.bf16.gmra.mxu0 %v3723
    %v4046 = vpop.f32.mrf.mxu0
    %v4047 = vadd.f32 %v3993, %v4046
    %v4048 = vpop.f32.mrf.mxu0
    %v4049 = vadd.f32 %v3995, %v4048
    %4050 = vmatmul.bf16.gmra.mxu0 %v3726
    %v4051 = vpop.f32.mrf.mxu0
    %v4052 = vadd.f32 %v3998, %v4051
    %v4053 = vpop.f32.mrf.mxu0
    %v4054 = vadd.f32 %v4000, %v4053
    %4055 = vmatmul.bf16.gmra.mxu0 %v3729
    %v4056 = vpop.f32.mrf.mxu0
    %v4057 = vadd.f32 %v4003, %v4056
    %v4058 = vpop.f32.mrf.mxu0
    %v4059 = vadd.f32 %v4005, %v4058
    %4060 = vmatmul.bf16.gmra.mxu0 %v3732
    %v4061 = vpop.f32.mrf.mxu0
    %v4062 = vadd.f32 %v4008, %v4061
    %v4063 = vpop.f32.mrf.mxu0
    %v4064 = vadd.f32 %v4010, %v4063
    %4065 = vdwg.mxu0
    %v4066 = vld [vmem:[#allocation4] sm:$0xff]
    %v4067 = vld [vmem:[#allocation4 + $0x8] sm:$0xff]
    %v4068 = vld [vmem:[#allocation4 + $0x10] sm:$0xff]
    %v4069 = vld [vmem:[#allocation4 + $0x18] sm:$0xff]
    %v4070 = vld [vmem:[#allocation4 + $0x20] sm:$0xff]
    %v4071 = vld [vmem:[#allocation4 + $0x28] sm:$0xff]
    %v4072 = vld [vmem:[#allocation4 + $0x30] sm:$0xff]
    %v4073 = vld [vmem:[#allocation4 + $0x38] sm:$0xff]
    %v4074 = vld [vmem:[#allocation4 + $0x40] sm:$0xff]
    %v4075 = vld [vmem:[#allocation4 + $0x48] sm:$0xff]
    %v4076 = vld [vmem:[#allocation4 + $0x50] sm:$0xff]
    %v4077 = vld [vmem:[#allocation4 + $0x58] sm:$0xff]
    %v4078 = vld [vmem:[#allocation4 + $0x60] sm:$0xff]
    %v4079 = vld [vmem:[#allocation4 + $0x68] sm:$0xff]
    %v4080 = vld [vmem:[#allocation4 + $0x70] sm:$0xff]
    %v4081 = vld [vmem:[#allocation4 + $0x78] sm:$0xff]
    %v4082 = vld [vmem:[#allocation4 + $0x80] sm:$0xff]
    %v4083 = vld [vmem:[#allocation4 + $0x88] sm:$0xff]
    %v4084 = vadd.f32 %v4066, %v4022
    %v4085 = vadd.f32 %v4067, %v4024
    %v4086 = vadd.f32 %v4068, %v4027
    %v4087 = vadd.f32 %v4069, %v4029
    %v4088 = vadd.f32 %v4070, %v4032
    %v4089 = vadd.f32 %v4071, %v4034
    %v4090 = vadd.f32 %v4072, %v4037
    %v4091 = vadd.f32 %v4073, %v4039
    %v4092 = vadd.f32 %v4074, %v4042
    %v4093 = vadd.f32 %v4075, %v4044
    %v4094 = vadd.f32 %v4076, %v4047
    %v4095 = vadd.f32 %v4077, %v4049
    %v4096 = vadd.f32 %v4078, %v4052
    %v4097 = vadd.f32 %v4079, %v4054
    %v4098 = vadd.f32 %v4080, %v4057
    %v4099 = vadd.f32 %v4081, %v4059
    %v4100 = vadd.f32 %v4082, %v4062
    %v4101 = vadd.f32 %v4083, %v4064
    %4102 = vst [vmem:[#allocation4] sm:$0xff] %v4084
    %4103 = vst [vmem:[#allocation4 + $0x8] sm:$0xff] %v4085
    %4104 = vst [vmem:[#allocation4 + $0x10] sm:$0xff] %v4086
    %4105 = vst [vmem:[#allocation4 + $0x18] sm:$0xff] %v4087
    %4106 = vst [vmem:[#allocation4 + $0x20] sm:$0xff] %v4088
    %4107 = vst [vmem:[#allocation4 + $0x28] sm:$0xff] %v4089
    %4108 = vst [vmem:[#allocation4 + $0x30] sm:$0xff] %v4090
    %4109 = vst [vmem:[#allocation4 + $0x38] sm:$0xff] %v4091
    %4110 = vst [vmem:[#allocation4 + $0x40] sm:$0xff] %v4092
    %4111 = vst [vmem:[#allocation4 + $0x48] sm:$0xff] %v4093
    %4112 = vst [vmem:[#allocation4 + $0x50] sm:$0xff] %v4094
    %4113 = vst [vmem:[#allocation4 + $0x58] sm:$0xff] %v4095
    %4114 = vst [vmem:[#allocation4 + $0x60] sm:$0xff] %v4096
    %4115 = vst [vmem:[#allocation4 + $0x68] sm:$0xff] %v4097
    %4116 = vst [vmem:[#allocation4 + $0x70] sm:$0xff] %v4098
    %4117 = vst [vmem:[#allocation4 + $0x78] sm:$0xff] %v4099
    %4118 = vst [vmem:[#allocation4 + $0x80] sm:$0xff] %v4100
    %4119 = vst [vmem:[#allocation4 + $0x88] sm:$0xff] %v4101
    %s4120 = scalar_lea.vmem [#allocation3], 24
    %v4121 = vld [vmem:[%s4120] sm:$0xff]
    %v4122 = vld [vmem:[%s4120 + $0x8] sm:$0xf]
    %v4123 = vld [vmem:[%s4120 + $0xc] sm:$0xff]
    %v4124 = vld [vmem:[%s4120 + $0x14] sm:$0xf]
    %v4125 = vld [vmem:[%s4120 + $0x18] sm:$0xff]
    %v4126 = vld [vmem:[%s4120 + $0x20] sm:$0xf]
    %v4127 = vld [vmem:[%s4120 + $0x24] sm:$0xff]
    %v4128 = vld [vmem:[%s4120 + $0x2c] sm:$0xf]
    %v4129 = vld [vmem:[%s4120 + $0x30] sm:$0xff]
    %v4130 = vld [vmem:[%s4120 + $0x38] sm:$0xf]
    %v4131 = vld [vmem:[%s4120 + $0x3c] sm:$0xff]
    %v4132 = vld [vmem:[%s4120 + $0x44] sm:$0xf]
    %v4133 = vld [vmem:[%s4120 + $0x48] sm:$0xff]
    %v4134 = vld [vmem:[%s4120 + $0x50] sm:$0xf]
    %v4135 = vld [vmem:[%s4120 + $0x54] sm:$0xff]
    %v4136 = vld [vmem:[%s4120 + $0x5c] sm:$0xf]
    %v4137 = vld [vmem:[%s4120 + $0x60] sm:$0xff]
    %v4138 = vld [vmem:[%s4120 + $0x68] sm:$0xf]
    %v4139 = vld [vmem:[%s4120 + $0x6c] sm:$0xff]
    %v4140 = vld [vmem:[%s4120 + $0x74] sm:$0xf]
    %v4141 = vld [vmem:[%s4120 + $0x78] sm:$0xff]
    %v4142 = vld [vmem:[%s4120 + $0x80] sm:$0xf]
    %v4143 = vld [vmem:[%s4120 + $0x84] sm:$0xff]
    %v4144 = vld [vmem:[%s4120 + $0x8c] sm:$0xf]
    %v4145 = vld [vmem:[%s4120 + $0x90] sm:$0xff]
    %v4146 = vld [vmem:[%s4120 + $0x98] sm:$0xf]
    %v4147 = vld [vmem:[%s4120 + $0x9c] sm:$0xff]
    %v4148 = vld [vmem:[%s4120 + $0xa4] sm:$0xf]
    %v4149 = vld [vmem:[%s4120 + $0xa8] sm:$0xff]
    %v4150 = vld [vmem:[%s4120 + $0xb0] sm:$0xf]
    %v4151 = vld [vmem:[%s4120 + $0xb4] sm:$0xff]
    %v4152 = vld [vmem:[%s4120 + $0xbc] sm:$0xf]
    %v4153 = vld [vmem:[%s4120 + $0xc0] sm:$0xff]
    %v4154 = vld [vmem:[%s4120 + $0xc8] sm:$0xf]
    %v4155 = vld [vmem:[%s4120 + $0xcc] sm:$0xff]
    %v4156 = vld [vmem:[%s4120 + $0xd4] sm:$0xf]
    %s4157 = scalar_lea.vmem [#allocation11], 384
    %v4158 = vld [vmem:[%s4157] sm:$0xf]
    %v4159 = vld [vmem:[%s4157 + $0x4] sm:$0xf]
    %v4160 = vld [vmem:[%s4157 + $0x8] sm:$0xf]
    %v4161 = vld [vmem:[%s4157 + $0xc] sm:$0xf]
    %v4162 = vld [vmem:[%s4157 + $0x10] sm:$0xf]
    %v4163 = vld [vmem:[%s4157 + $0x14] sm:$0xf]
    %v4164 = vld [vmem:[%s4157 + $0x18] sm:$0xf]
    %v4165 = vld [vmem:[%s4157 + $0x1c] sm:$0xf]
    %v4166 = vld [vmem:[%s4157 + $0x20] sm:$0xf]
    %v4167 = vld [vmem:[%s4157 + $0x24] sm:$0xf]
    %v4168 = vld [vmem:[%s4157 + $0x28] sm:$0xf]
    %v4169 = vld [vmem:[%s4157 + $0x2c] sm:$0xf]
    %v4170 = vld [vmem:[%s4157 + $0x30] sm:$0xf]
    %v4171 = vld [vmem:[%s4157 + $0x34] sm:$0xf]
    %v4172 = vld [vmem:[%s4157 + $0x38] sm:$0xf]
    %v4173 = vld [vmem:[%s4157 + $0x3c] sm:$0xf]
    %v4174 = vld [vmem:[%s4157 + $0x40] sm:$0xf]
    %v4175 = vld [vmem:[%s4157 + $0x44] sm:$0xf]
    %v4176 = vld [vmem:[%s4157 + $0x48] sm:$0xf]
    %v4177 = vld [vmem:[%s4157 + $0x4c] sm:$0xf]
    %v4178 = vld [vmem:[%s4157 + $0x50] sm:$0xf]
    %v4179 = vld [vmem:[%s4157 + $0x54] sm:$0xf]
    %v4180 = vld [vmem:[%s4157 + $0x58] sm:$0xf]
    %v4181 = vld [vmem:[%s4157 + $0x5c] sm:$0xf]
    %v4182 = vld [vmem:[%s4157 + $0x60] sm:$0xf]
    %v4183 = vld [vmem:[%s4157 + $0x64] sm:$0xf]
    %v4184 = vld [vmem:[%s4157 + $0x68] sm:$0xf]
    %v4185 = vld [vmem:[%s4157 + $0x6c] sm:$0xf]
    %v4186 = vld [vmem:[%s4157 + $0x70] sm:$0xf]
    %v4187 = vld [vmem:[%s4157 + $0x74] sm:$0xf]
    %v4188 = vld [vmem:[%s4157 + $0x78] sm:$0xf]
    %v4189 = vld [vmem:[%s4157 + $0x7c] sm:$0xf]
    %v4190 = vld [vmem:[%s4157 + $0x80] sm:$0xf]
    %v4191 = vld [vmem:[%s4157 + $0x84] sm:$0xf]
    %v4192 = vld [vmem:[%s4157 + $0x88] sm:$0xf]
    %v4193 = vld [vmem:[%s4157 + $0x8c] sm:$0xf]
    %v4194 = vld [vmem:[%s4157 + $0x90] sm:$0xf]
    %v4195 = vld [vmem:[%s4157 + $0x94] sm:$0xf]
    %v4196 = vld [vmem:[%s4157 + $0x98] sm:$0xf]
    %v4197 = vld [vmem:[%s4157 + $0x9c] sm:$0xf]
    %v4198 = vld [vmem:[%s4157 + $0xa0] sm:$0xf]
    %v4199 = vld [vmem:[%s4157 + $0xa4] sm:$0xf]
    %v4200 = vld [vmem:[%s4157 + $0xa8] sm:$0xf]
    %v4201 = vld [vmem:[%s4157 + $0xac] sm:$0xf]
    %v4202 = vld [vmem:[%s4157 + $0xb0] sm:$0xf]
    %v4203 = vld [vmem:[%s4157 + $0xb4] sm:$0xf]
    %v4204 = vld [vmem:[%s4157 + $0xb8] sm:$0xf]
    %v4205 = vld [vmem:[%s4157 + $0xbc] sm:$0xf]
    %v4242 = vunpack.c.l.b16 %v4121
    %v4243 = vunpack.c.h.b16 %v4121
    %v4244 = vunpack.c.l.b16 %v4122
    %v4245 = vunpack.c.l.b16 %v4123
    %v4246 = vunpack.c.h.b16 %v4123
    %v4247 = vunpack.c.l.b16 %v4124
    %v4248 = vunpack.c.l.b16 %v4125
    %v4249 = vunpack.c.h.b16 %v4125
    %v4250 = vunpack.c.l.b16 %v4126
    %v4251 = vunpack.c.l.b16 %v4127
    %v4252 = vunpack.c.h.b16 %v4127
    %v4253 = vunpack.c.l.b16 %v4128
    %v4254 = vunpack.c.l.b16 %v4129
    %v4255 = vunpack.c.h.b16 %v4129
    %v4256 = vunpack.c.l.b16 %v4130
    %v4257 = vunpack.c.l.b16 %v4131
    %v4258 = vunpack.c.h.b16 %v4131
    %v4259 = vunpack.c.l.b16 %v4132
    %v4260 = vunpack.c.l.b16 %v4133
    %v4261 = vunpack.c.h.b16 %v4133
    %v4262 = vunpack.c.l.b16 %v4134
    %v4263 = vunpack.c.l.b16 %v4135
    %v4264 = vunpack.c.h.b16 %v4135
    %v4265 = vunpack.c.l.b16 %v4136
    %v4266 = vunpack.c.l.b16 %v4137
    %v4267 = vunpack.c.h.b16 %v4137
    %v4268 = vunpack.c.l.b16 %v4138
    %v4269 = vunpack.c.l.b16 %v4139
    %v4270 = vunpack.c.h.b16 %v4139
    %v4271 = vunpack.c.l.b16 %v4140
    %v4272 = vunpack.c.l.b16 %v4141
    %v4273 = vunpack.c.h.b16 %v4141
    %v4274 = vunpack.c.l.b16 %v4142
    %v4275 = vunpack.c.l.b16 %v4143
    %v4276 = vunpack.c.h.b16 %v4143
    %v4277 = vunpack.c.l.b16 %v4144
    %v4278 = vunpack.c.l.b16 %v4145
    %v4279 = vunpack.c.h.b16 %v4145
    %v4280 = vunpack.c.l.b16 %v4146
    %v4281 = vunpack.c.l.b16 %v4147
    %v4282 = vunpack.c.h.b16 %v4147
    %v4283 = vunpack.c.l.b16 %v4148
    %v4284 = vunpack.c.l.b16 %v4149
    %v4285 = vunpack.c.h.b16 %v4149
    %v4286 = vunpack.c.l.b16 %v4150
    %v4287 = vunpack.c.l.b16 %v4151
    %v4288 = vunpack.c.h.b16 %v4151
    %v4289 = vunpack.c.l.b16 %v4152
    %v4290 = vunpack.c.l.b16 %v4153
    %v4291 = vunpack.c.h.b16 %v4153
    %v4292 = vunpack.c.l.b16 %v4154
    %v4293 = vunpack.c.l.b16 %v4155
    %v4294 = vunpack.c.h.b16 %v4155
    %v4295 = vunpack.c.l.b16 %v4156
    %v4296 = vpack.c.b16 %v4245, %v4242
    %v4297 = vpack.c.b16 %v4246, %v4243
    %v4298 = vpack.c.b16 %v4247, %v4244
    %v4299 = vpack.c.b16 %v4251, %v4248
    %v4300 = vpack.c.b16 %v4252, %v4249
    %v4301 = vpack.c.b16 %v4253, %v4250
    %v4302 = vpack.c.b16 %v4257, %v4254
    %v4303 = vpack.c.b16 %v4258, %v4255
    %v4304 = vpack.c.b16 %v4259, %v4256
    %v4305 = vpack.c.b16 %v4263, %v4260
    %v4306 = vpack.c.b16 %v4264, %v4261
    %v4307 = vpack.c.b16 %v4265, %v4262
    %v4308 = vpack.c.b16 %v4269, %v4266
    %v4309 = vpack.c.b16 %v4270, %v4267
    %v4310 = vpack.c.b16 %v4271, %v4268
    %v4311 = vpack.c.b16 %v4275, %v4272
    %v4312 = vpack.c.b16 %v4276, %v4273
    %v4313 = vpack.c.b16 %v4277, %v4274
    %v4314 = vpack.c.b16 %v4281, %v4278
    %v4315 = vpack.c.b16 %v4282, %v4279
    %v4316 = vpack.c.b16 %v4283, %v4280
    %v4317 = vpack.c.b16 %v4287, %v4284
    %v4318 = vpack.c.b16 %v4288, %v4285
    %v4319 = vpack.c.b16 %v4289, %v4286
    %v4320 = vpack.c.b16 %v4293, %v4290
    %v4321 = vpack.c.b16 %v4294, %v4291
    %v4322 = vpack.c.b16 %v4295, %v4292
    %v4398 = vunpack.c.l.b16 %v4158
    %v4399 = vunpack.c.l.b16 %v4159
    %v4400 = vunpack.c.l.b16 %v4160
    %v4401 = vunpack.c.l.b16 %v4161
    %v4402 = vunpack.c.l.b16 %v4162
    %v4403 = vunpack.c.l.b16 %v4163
    %v4404 = vunpack.c.l.b16 %v4164
    %v4405 = vunpack.c.l.b16 %v4165
    %v4406 = vunpack.c.l.b16 %v4166
    %v4407 = vunpack.c.l.b16 %v4167
    %v4408 = vunpack.c.l.b16 %v4168
    %v4409 = vunpack.c.l.b16 %v4169
    %v4410 = vunpack.c.l.b16 %v4170
    %v4411 = vunpack.c.l.b16 %v4171
    %v4412 = vunpack.c.l.b16 %v4172
    %v4413 = vunpack.c.l.b16 %v4173
    %v4414 = vunpack.c.l.b16 %v4174
    %v4415 = vunpack.c.l.b16 %v4175
    %v4416 = vunpack.c.l.b16 %v4176
    %v4417 = vunpack.c.l.b16 %v4177
    %v4418 = vunpack.c.l.b16 %v4178
    %v4419 = vunpack.c.l.b16 %v4179
    %v4420 = vunpack.c.l.b16 %v4180
    %v4421 = vunpack.c.l.b16 %v4181
    %v4422 = vunpack.c.l.b16 %v4182
    %v4423 = vunpack.c.l.b16 %v4183
    %v4424 = vunpack.c.l.b16 %v4184
    %v4425 = vunpack.c.l.b16 %v4185
    %v4426 = vunpack.c.l.b16 %v4186
    %v4427 = vunpack.c.l.b16 %v4187
    %v4428 = vunpack.c.l.b16 %v4188
    %v4429 = vunpack.c.l.b16 %v4189
    %v4430 = vunpack.c.l.b16 %v4190
    %v4431 = vunpack.c.l.b16 %v4191
    %v4432 = vunpack.c.l.b16 %v4192
    %v4433 = vunpack.c.l.b16 %v4193
    %v4434 = vunpack.c.l.b16 %v4194
    %v4435 = vunpack.c.l.b16 %v4195
    %v4436 = vunpack.c.l.b16 %v4196
    %v4437 = vunpack.c.l.b16 %v4197
    %v4438 = vunpack.c.l.b16 %v4198
    %v4439 = vunpack.c.l.b16 %v4199
    %v4440 = vunpack.c.l.b16 %v4200
    %v4441 = vunpack.c.l.b16 %v4201
    %v4442 = vunpack.c.l.b16 %v4202
    %v4443 = vunpack.c.l.b16 %v4203
    %v4444 = vunpack.c.l.b16 %v4204
    %v4445 = vunpack.c.l.b16 %v4205
    %v4446 = vpack.c.b16 %v4399, %v4398
    %v4447 = vpack.c.b16 %v4401, %v4400
    %v4448 = vpack.c.b16 %v4403, %v4402
    %v4449 = vpack.c.b16 %v4405, %v4404
    %v4450 = vpack.c.b16 %v4407, %v4406
    %v4451 = vpack.c.b16 %v4409, %v4408
    %v4452 = vpack.c.b16 %v4411, %v4410
    %v4453 = vpack.c.b16 %v4413, %v4412
    %v4454 = vpack.c.b16 %v4415, %v4414
    %v4455 = vpack.c.b16 %v4417, %v4416
    %v4456 = vpack.c.b16 %v4419, %v4418
    %v4457 = vpack.c.b16 %v4421, %v4420
    %v4458 = vpack.c.b16 %v4423, %v4422
    %v4459 = vpack.c.b16 %v4425, %v4424
    %v4460 = vpack.c.b16 %v4427, %v4426
    %v4461 = vpack.c.b16 %v4429, %v4428
    %v4462 = vpack.c.b16 %v4431, %v4430
    %v4463 = vpack.c.b16 %v4433, %v4432
    %v4464 = vpack.c.b16 %v4435, %v4434
    %v4465 = vpack.c.b16 %v4437, %v4436
    %v4466 = vpack.c.b16 %v4439, %v4438
    %v4467 = vpack.c.b16 %v4441, %v4440
    %v4468 = vpack.c.b16 %v4443, %v4442
    %v4469 = vpack.c.b16 %v4445, %v4444
    %4494 = vmatpush.bf16.msra.mxu0 %v4453
    %4495 = vmatpush.bf16.msra.mxu0 %v4452
    %4496 = vmatpush.bf16.msra.mxu0 %v4451
    %4497 = vmatpush.bf16.msra.mxu0 %v4450
    %4498 = vmatpush.bf16.msra.mxu0 %v4449
    %4499 = vmatpush.bf16.msra.mxu0 %v4448
    %4500 = vmatpush.bf16.msra.mxu0 %v4447
    %4501 = vmatpush.bf16.msra.mxu0 %v4446
    %4502 = vmatmul.bf16.gmra.mxu0 %v4296
    %v4503 = vpop.f32.mrf.mxu0
    %v4504 = vadd.f32 0.0, %v4503
    %v4505 = vpop.f32.mrf.mxu0
    %v4506 = vadd.f32 0.0, %v4505
    %4507 = vmatmul.bf16.gmra.mxu0 %v4299
    %v4508 = vpop.f32.mrf.mxu0
    %v4509 = vadd.f32 0.0, %v4508
    %v4510 = vpop.f32.mrf.mxu0
    %v4511 = vadd.f32 0.0, %v4510
    %4512 = vmatmul.bf16.gmra.mxu0 %v4302
    %v4513 = vpop.f32.mrf.mxu0
    %v4514 = vadd.f32 0.0, %v4513
    %v4515 = vpop.f32.mrf.mxu0
    %v4516 = vadd.f32 0.0, %v4515
    %4517 = vmatmul.bf16.gmra.mxu0 %v4305
    %v4518 = vpop.f32.mrf.mxu0
    %v4519 = vadd.f32 0.0, %v4518
    %v4520 = vpop.f32.mrf.mxu0
    %v4521 = vadd.f32 0.0, %v4520
    %4522 = vmatmul.bf16.gmra.mxu0 %v4308
    %v4523 = vpop.f32.mrf.mxu0
    %v4524 = vadd.f32 0.0, %v4523
    %v4525 = vpop.f32.mrf.mxu0
    %v4526 = vadd.f32 0.0, %v4525
    %4527 = vmatmul.bf16.gmra.mxu0 %v4311
    %v4528 = vpop.f32.mrf.mxu0
    %v4529 = vadd.f32 0.0, %v4528
    %v4530 = vpop.f32.mrf.mxu0
    %v4531 = vadd.f32 0.0, %v4530
    %4532 = vmatmul.bf16.gmra.mxu0 %v4314
    %v4533 = vpop.f32.mrf.mxu0
    %v4534 = vadd.f32 0.0, %v4533
    %v4535 = vpop.f32.mrf.mxu0
    %v4536 = vadd.f32 0.0, %v4535
    %4537 = vmatmul.bf16.gmra.mxu0 %v4317
    %v4538 = vpop.f32.mrf.mxu0
    %v4539 = vadd.f32 0.0, %v4538
    %v4540 = vpop.f32.mrf.mxu0
    %v4541 = vadd.f32 0.0, %v4540
    %4542 = vmatmul.bf16.gmra.mxu0 %v4320
    %v4543 = vpop.f32.mrf.mxu0
    %v4544 = vadd.f32 0.0, %v4543
    %v4545 = vpop.f32.mrf.mxu0
    %v4546 = vadd.f32 0.0, %v4545
    %4547 = vdwg.mxu0
    %4548 = vmatpush.bf16.msra.mxu0 %v4461
    %4549 = vmatpush.bf16.msra.mxu0 %v4460
    %4550 = vmatpush.bf16.msra.mxu0 %v4459
    %4551 = vmatpush.bf16.msra.mxu0 %v4458
    %4552 = vmatpush.bf16.msra.mxu0 %v4457
    %4553 = vmatpush.bf16.msra.mxu0 %v4456
    %4554 = vmatpush.bf16.msra.mxu0 %v4455
    %4555 = vmatpush.bf16.msra.mxu0 %v4454
    %4556 = vmatmul.bf16.gmra.mxu0 %v4297
    %v4557 = vpop.f32.mrf.mxu0
    %v4558 = vadd.f32 %v4504, %v4557
    %v4559 = vpop.f32.mrf.mxu0
    %v4560 = vadd.f32 %v4506, %v4559
    %4561 = vmatmul.bf16.gmra.mxu0 %v4300
    %v4562 = vpop.f32.mrf.mxu0
    %v4563 = vadd.f32 %v4509, %v4562
    %v4564 = vpop.f32.mrf.mxu0
    %v4565 = vadd.f32 %v4511, %v4564
    %4566 = vmatmul.bf16.gmra.mxu0 %v4303
    %v4567 = vpop.f32.mrf.mxu0
    %v4568 = vadd.f32 %v4514, %v4567
    %v4569 = vpop.f32.mrf.mxu0
    %v4570 = vadd.f32 %v4516, %v4569
    %4571 = vmatmul.bf16.gmra.mxu0 %v4306
    %v4572 = vpop.f32.mrf.mxu0
    %v4573 = vadd.f32 %v4519, %v4572
    %v4574 = vpop.f32.mrf.mxu0
    %v4575 = vadd.f32 %v4521, %v4574
    %4576 = vmatmul.bf16.gmra.mxu0 %v4309
    %v4577 = vpop.f32.mrf.mxu0
    %v4578 = vadd.f32 %v4524, %v4577
    %v4579 = vpop.f32.mrf.mxu0
    %v4580 = vadd.f32 %v4526, %v4579
    %4581 = vmatmul.bf16.gmra.mxu0 %v4312
    %v4582 = vpop.f32.mrf.mxu0
    %v4583 = vadd.f32 %v4529, %v4582
    %v4584 = vpop.f32.mrf.mxu0
    %v4585 = vadd.f32 %v4531, %v4584
    %4586 = vmatmul.bf16.gmra.mxu0 %v4315
    %v4587 = vpop.f32.mrf.mxu0
    %v4588 = vadd.f32 %v4534, %v4587
    %v4589 = vpop.f32.mrf.mxu0
    %v4590 = vadd.f32 %v4536, %v4589
    %4591 = vmatmul.bf16.gmra.mxu0 %v4318
    %v4592 = vpop.f32.mrf.mxu0
    %v4593 = vadd.f32 %v4539, %v4592
    %v4594 = vpop.f32.mrf.mxu0
    %v4595 = vadd.f32 %v4541, %v4594
    %4596 = vmatmul.bf16.gmra.mxu0 %v4321
    %v4597 = vpop.f32.mrf.mxu0
    %v4598 = vadd.f32 %v4544, %v4597
    %v4599 = vpop.f32.mrf.mxu0
    %v4600 = vadd.f32 %v4546, %v4599
    %4601 = vdwg.mxu0
    %4602 = vmatpush.bf16.msra.mxu0 %v4469
    %4603 = vmatpush.bf16.msra.mxu0 %v4468
    %4604 = vmatpush.bf16.msra.mxu0 %v4467
    %4605 = vmatpush.bf16.msra.mxu0 %v4466
    %4606 = vmatpush.bf16.msra.mxu0 %v4465
    %4607 = vmatpush.bf16.msra.mxu0 %v4464
    %4608 = vmatpush.bf16.msra.mxu0 %v4463
    %4609 = vmatpush.bf16.msra.mxu0 %v4462
    %4610 = vmatmul.bf16.gmra.mxu0 %v4298
    %v4611 = vpop.f32.mrf.mxu0
    %v4612 = vadd.f32 %v4558, %v4611
    %v4613 = vpop.f32.mrf.mxu0
    %v4614 = vadd.f32 %v4560, %v4613
    %4615 = vmatmul.bf16.gmra.mxu0 %v4301
    %v4616 = vpop.f32.mrf.mxu0
    %v4617 = vadd.f32 %v4563, %v4616
    %v4618 = vpop.f32.mrf.mxu0
    %v4619 = vadd.f32 %v4565, %v4618
    %4620 = vmatmul.bf16.gmra.mxu0 %v4304
    %v4621 = vpop.f32.mrf.mxu0
    %v4622 = vadd.f32 %v4568, %v4621
    %v4623 = vpop.f32.mrf.mxu0
    %v4624 = vadd.f32 %v4570, %v4623
    %4625 = vmatmul.bf16.gmra.mxu0 %v4307
    %v4626 = vpop.f32.mrf.mxu0
    %v4627 = vadd.f32 %v4573, %v4626
    %v4628 = vpop.f32.mrf.mxu0
    %v4629 = vadd.f32 %v4575, %v4628
    %4630 = vmatmul.bf16.gmra.mxu0 %v4310
    %v4631 = vpop.f32.mrf.mxu0
    %v4632 = vadd.f32 %v4578, %v4631
    %v4633 = vpop.f32.mrf.mxu0
    %v4634 = vadd.f32 %v4580, %v4633
    %4635 = vmatmul.bf16.gmra.mxu0 %v4313
    %v4636 = vpop.f32.mrf.mxu0
    %v4637 = vadd.f32 %v4583, %v4636
    %v4638 = vpop.f32.mrf.mxu0
    %v4639 = vadd.f32 %v4585, %v4638
    %4640 = vmatmul.bf16.gmra.mxu0 %v4316
    %v4641 = vpop.f32.mrf.mxu0
    %v4642 = vadd.f32 %v4588, %v4641
    %v4643 = vpop.f32.mrf.mxu0
    %v4644 = vadd.f32 %v4590, %v4643
    %4645 = vmatmul.bf16.gmra.mxu0 %v4319
    %v4646 = vpop.f32.mrf.mxu0
    %v4647 = vadd.f32 %v4593, %v4646
    %v4648 = vpop.f32.mrf.mxu0
    %v4649 = vadd.f32 %v4595, %v4648
    %4650 = vmatmul.bf16.gmra.mxu0 %v4322
    %v4651 = vpop.f32.mrf.mxu0
    %v4652 = vadd.f32 %v4598, %v4651
    %v4653 = vpop.f32.mrf.mxu0
    %v4654 = vadd.f32 %v4600, %v4653
    %4655 = vdwg.mxu0
    %v4656 = vld [vmem:[#allocation4] sm:$0xff]
    %v4657 = vld [vmem:[#allocation4 + $0x8] sm:$0xff]
    %v4658 = vld [vmem:[#allocation4 + $0x10] sm:$0xff]
    %v4659 = vld [vmem:[#allocation4 + $0x18] sm:$0xff]
    %v4660 = vld [vmem:[#allocation4 + $0x20] sm:$0xff]
    %v4661 = vld [vmem:[#allocation4 + $0x28] sm:$0xff]
    %v4662 = vld [vmem:[#allocation4 + $0x30] sm:$0xff]
    %v4663 = vld [vmem:[#allocation4 + $0x38] sm:$0xff]
    %v4664 = vld [vmem:[#allocation4 + $0x40] sm:$0xff]
    %v4665 = vld [vmem:[#allocation4 + $0x48] sm:$0xff]
    %v4666 = vld [vmem:[#allocation4 + $0x50] sm:$0xff]
    %v4667 = vld [vmem:[#allocation4 + $0x58] sm:$0xff]
    %v4668 = vld [vmem:[#allocation4 + $0x60] sm:$0xff]
    %v4669 = vld [vmem:[#allocation4 + $0x68] sm:$0xff]
    %v4670 = vld [vmem:[#allocation4 + $0x70] sm:$0xff]
    %v4671 = vld [vmem:[#allocation4 + $0x78] sm:$0xff]
    %v4672 = vld [vmem:[#allocation4 + $0x80] sm:$0xff]
    %v4673 = vld [vmem:[#allocation4 + $0x88] sm:$0xff]
    %v4674 = vadd.f32 %v4656, %v4612
    %v4675 = vadd.f32 %v4657, %v4614
    %v4676 = vadd.f32 %v4658, %v4617
    %v4677 = vadd.f32 %v4659, %v4619
    %v4678 = vadd.f32 %v4660, %v4622
    %v4679 = vadd.f32 %v4661, %v4624
    %v4680 = vadd.f32 %v4662, %v4627
    %v4681 = vadd.f32 %v4663, %v4629
    %v4682 = vadd.f32 %v4664, %v4632
    %v4683 = vadd.f32 %v4665, %v4634
    %v4684 = vadd.f32 %v4666, %v4637
    %v4685 = vadd.f32 %v4667, %v4639
    %v4686 = vadd.f32 %v4668, %v4642
    %v4687 = vadd.f32 %v4669, %v4644
    %v4688 = vadd.f32 %v4670, %v4647
    %v4689 = vadd.f32 %v4671, %v4649
    %v4690 = vadd.f32 %v4672, %v4652
    %v4691 = vadd.f32 %v4673, %v4654
    %4692 = vst [vmem:[#allocation4] sm:$0xff] %v4674
    %4693 = vst [vmem:[#allocation4 + $0x8] sm:$0xff] %v4675
    %4694 = vst [vmem:[#allocation4 + $0x10] sm:$0xff] %v4676
    %4695 = vst [vmem:[#allocation4 + $0x18] sm:$0xff] %v4677
    %4696 = vst [vmem:[#allocation4 + $0x20] sm:$0xff] %v4678
    %4697 = vst [vmem:[#allocation4 + $0x28] sm:$0xff] %v4679
    %4698 = vst [vmem:[#allocation4 + $0x30] sm:$0xff] %v4680
    %4699 = vst [vmem:[#allocation4 + $0x38] sm:$0xff] %v4681
    %4700 = vst [vmem:[#allocation4 + $0x40] sm:$0xff] %v4682
    %4701 = vst [vmem:[#allocation4 + $0x48] sm:$0xff] %v4683
    %4702 = vst [vmem:[#allocation4 + $0x50] sm:$0xff] %v4684
    %4703 = vst [vmem:[#allocation4 + $0x58] sm:$0xff] %v4685
    %4704 = vst [vmem:[#allocation4 + $0x60] sm:$0xff] %v4686
    %4705 = vst [vmem:[#allocation4 + $0x68] sm:$0xff] %v4687
    %4706 = vst [vmem:[#allocation4 + $0x70] sm:$0xff] %v4688
    %4707 = vst [vmem:[#allocation4 + $0x78] sm:$0xff] %v4689
    %4708 = vst [vmem:[#allocation4 + $0x80] sm:$0xff] %v4690
    %4709 = vst [vmem:[#allocation4 + $0x88] sm:$0xff] %v4691
    %v4710 = vld [vmem:[#allocation4] sm:$0xff]
    %v4711 = vld [vmem:[#allocation4 + $0x8] sm:$0xff]
    %v4712 = vld [vmem:[#allocation4 + $0x10] sm:$0xff]
    %v4713 = vld [vmem:[#allocation4 + $0x18] sm:$0xff]
    %v4714 = vld [vmem:[#allocation4 + $0x20] sm:$0xff]
    %v4715 = vld [vmem:[#allocation4 + $0x28] sm:$0xff]
    %v4716 = vld [vmem:[#allocation4 + $0x30] sm:$0xff]
    %v4717 = vld [vmem:[#allocation4 + $0x38] sm:$0xff]
    %v4718 = vpack.c.bf16 %v4710, %v4710
    %v4719 = vpack.c.bf16 %v4711, %v4711
    %v4720 = vpack.c.bf16 %v4712, %v4712
    %v4721 = vpack.c.bf16 %v4713, %v4713
    %v4722 = vpack.c.bf16 %v4714, %v4714
    %v4723 = vpack.c.bf16 %v4715, %v4715
    %v4724 = vpack.c.bf16 %v4716, %v4716
    %v4725 = vpack.c.bf16 %v4717, %v4717
    %4726 = vst [vmem:[#allocation14] sm:$0xf] %v4718
    %4727 = vst [vmem:[#allocation14 + $0x4] sm:$0xf] %v4719
    %4728 = vst [vmem:[#allocation14 + $0x8] sm:$0xf] %v4720
    %4729 = vst [vmem:[#allocation14 + $0xc] sm:$0xf] %v4721
    %4730 = vst [vmem:[#allocation14 + $0x10] sm:$0xf] %v4722
    %4731 = vst [vmem:[#allocation14 + $0x14] sm:$0xf] %v4723
    %4732 = vst [vmem:[#allocation14 + $0x18] sm:$0xf] %v4724
    %4733 = vst [vmem:[#allocation14 + $0x1c] sm:$0xf] %v4725
    %v4734 = vld [vmem:[#allocation4 + $0x50] sm:$0xff]
    %v4735 = vld [vmem:[#allocation4 + $0x58] sm:$0xff]
    %v4736 = vld [vmem:[#allocation4 + $0x60] sm:$0xff]
    %v4737 = vld [vmem:[#allocation4 + $0x68] sm:$0xff]
    %v4738 = vld [vmem:[#allocation4 + $0x70] sm:$0xff]
    %v4739 = vld [vmem:[#allocation4 + $0x78] sm:$0xff]
    %v4740 = vld [vmem:[#allocation4 + $0x80] sm:$0xff]
    %v4741 = vld [vmem:[#allocation4 + $0x88] sm:$0xff]
    %v4742 = vpack.c.bf16 %v4734, %v4734
    %v4743 = vpack.c.bf16 %v4735, %v4735
    %v4744 = vpack.c.bf16 %v4736, %v4736
    %v4745 = vpack.c.bf16 %v4737, %v4737
    %v4746 = vpack.c.bf16 %v4738, %v4738
    %v4747 = vpack.c.bf16 %v4739, %v4739
    %v4748 = vpack.c.bf16 %v4740, %v4740
    %v4749 = vpack.c.bf16 %v4741, %v4741
    %s4750 = scalar_lea.vmem [#allocation14], 32
    %4751 = vst [vmem:[%s4750] sm:$0xf] %v4742
    %4752 = vst [vmem:[%s4750 + $0x4] sm:$0xf] %v4743
    %4753 = vst [vmem:[%s4750 + $0x8] sm:$0xf] %v4744
    %4754 = vst [vmem:[%s4750 + $0xc] sm:$0xf] %v4745
    %4755 = vst [vmem:[%s4750 + $0x10] sm:$0xf] %v4746
    %4756 = vst [vmem:[%s4750 + $0x14] sm:$0xf] %v4747
    %4757 = vst [vmem:[%s4750 + $0x18] sm:$0xf] %v4748
    %4758 = vst [vmem:[%s4750 + $0x1c] sm:$0xf] %v4749
    // Predicated region
    $region54: #{tpu_custom_call.1} parent=1 // pred_check
      _
    $region55: #{tpu_custom_call.1} parent=1 // pred_check_branch
      %4760 = sbr.rel (0) target = $region57
    $region56: #{tpu_custom_call.1} parent=1 // pred_region
      %4762 = vsyncadd [#allocation7], 0
      %s4763 = sshll.u32 [#allocation14], 4
      %s4764 = int_to_ptr.vmem [resolvable:$true] %s4763
      %s4765 = sshll.u32 %s8, 4
      %s4766 = int_to_ptr.hbm [resolvable:$true] %s4765
      %4771 = dma.vmem_to_hbm [thread:$0]  %s4764, 1024, %s4766, [#allocation7], 64, 64, 4
    $region57: #{tpu_custom_call.1} parent=1 // pred_fallthru
      _
    // Predicated region
    $region58: #{tpu_custom_call.1} parent=1 // pred_check
      _
    $region59: #{tpu_custom_call.1} parent=1 // pred_check_branch
      %4773 = sbr.rel (0) target = $region61
    $region60: #{tpu_custom_call.1} parent=1 // pred_region
      %4775 = dma.done [#allocation7], 1024
    $region61: #{tpu_custom_call.1} parent=1 // pred_fallthru
      _
    %4776 = vsyncpa [#allocation6], 1
    %4777 = vsyncpa [#allocation9], 1
    %4778 = vsyncpa [#allocation12], 1
    %4779 = vsyncpa [#allocation7], 1

</llo_original>
